<compile_context>
chip_gen: v7x
topology: tpu7x:2x2x1
jax: 0.10.0
libtpu: 0.0.40
codegen_flags: <defaults>
</compile_context>

<pallas_src>
import math
from functools import partial

import jax
import jax.numpy as jnp
from jax.experimental import pallas as pl
from jax.experimental.pallas import tpu as pltpu

F32_MAX = float(jnp.finfo(jnp.float32).max)
NEG_LARGE = -1e30          # finite additive mask (equivalent post-softmax)
LN_EPS = 1e-3


# ----------------------------- Pallas kernel ------------------------------- #

def _model_kernel(x_ref, mask_ref, wqkv_ref, wo_ref, ln1s_ref, ln1b_ref,
                  w1_ref, b1_ref, w2_ref, b2_ref, lnos_ref, lnob_ref, out_ref,
                  *, num_layers, num_heads, head_dim):
    """Whole Transformer forward for one batch element (grid iterates over B)."""
    T = x_ref.shape[1]
    D = x_ref.shape[2]
    AD = num_heads * head_dim
    scale = 1.0 / math.sqrt(head_dim)

    x = x_ref[0]                                            # (T, D) residual stream
    # additive mask, computed ONCE (reused by every head of every layer)
    addmask = mask_ref[0] * jnp.float32(NEG_LARGE)          # (T, T)

    def layernorm(v, g, b):
        mean = jnp.mean(v, axis=-1, keepdims=True)
        var = jnp.sum((v - mean) ** 2, axis=-1, keepdims=True) * (1.0 / (D - 1))
        return (v - mean) * jax.lax.rsqrt(var + LN_EPS) * g + b

    for l in range(num_layers):                             # static layer loop
        wqkv = wqkv_ref[l]                                  # (D, 3*AD)
        wo = wo_ref[l]                                      # (AD, D)

        # fused Q|K|V projection: one MXU pass instead of three
        qkv = jnp.dot(x, wqkv, preferred_element_type=jnp.float32)   # (T, 3*AD)

        attn = jnp.zeros((T, D), jnp.float32)
        for h in range(num_heads):                          # static head loop
            lo = h * head_dim
            qh = qkv[:, lo:lo + head_dim]                   # (T, A)
            kh = qkv[:, AD + lo:AD + lo + head_dim]         # (T, A)
            vh = qkv[:, 2 * AD + lo:2 * AD + lo + head_dim]  # (T, A)

            s = jnp.dot(qh, kh.T, preferred_element_type=jnp.float32) * scale
            s = s + addmask
            m = jnp.max(s, axis=-1, keepdims=True)
            e = jnp.exp(s - m)
            p = e * pl.reciprocal(jnp.sum(e, axis=-1, keepdims=True), approx=True)

            ctx = jnp.dot(p, vh, preferred_element_type=jnp.float32)          # (T, A)
            # accumulate this head's output projection (no concatenate needed)
            attn = attn + jnp.dot(ctx, wo[lo:lo + head_dim, :],
                                  preferred_element_type=jnp.float32)         # (T, D)

        # residual 1 (reference attends over the *un-normalized* states)
        x = x + attn

        # LayerNormalization (torch.var unbiased, eps=1e-3) + feed-forward
        xn = layernorm(x, ln1s_ref[l], ln1b_ref[l])
        h1 = jnp.dot(xn, w1_ref[l], preferred_element_type=jnp.float32) + b1_ref[l]
        h1 = jnp.maximum(h1, 0.0)
        ff = jnp.dot(h1, w2_ref[l], preferred_element_type=jnp.float32) + b2_ref[l]

        # residual 2
        x = x + ff

    # final LayerNormalization
    out_ref[0] = layernorm(x, lnos_ref[...], lnob_ref[...])


# ------------------------------- wrapper ----------------------------------- #

def transformer_forward(states, masks, attention_bias, params, *, num_heads, head_dim):
    """Pallas equivalent of Transformer.forward(states, masks, attention_bias)."""
    del attention_bias          # bias_dim is None -> unused (NOOP_BIAS path)
    B, T, D = states.shape
    layers = params["layers"]
    L = len(layers)
    AD = num_heads * head_dim
    FF = layers[0]["w1"].shape[1]

    # stack per-layer weights along a leading L axis; fuse Q|K|V into one weight
    wqkv = jnp.stack([jnp.concatenate([p["wq"], p["wk"], p["wv"]], axis=1)
                      for p in layers])                     # (L, D, 3*AD)
    wo = jnp.stack([p["wo"] for p in layers])               # (L, AD, D)
    ln1s = jnp.stack([p["ln1_scale"] for p in layers])      # (L, 1, D)
    ln1b = jnp.stack([p["ln1_bias"] for p in layers])       # (L, 1, D)
    w1 = jnp.stack([p["w1"] for p in layers])               # (L, D, FF)
    b1 = jnp.stack([p["b1"] for p in layers])               # (L, 1, FF)
    w2 = jnp.stack([p["w2"] for p in layers])               # (L, FF, D)
    b2 = jnp.stack([p["b2"] for p in layers])               # (L, 1, D)

    bmap3 = lambda b: (b, 0, 0)
    full3 = lambda b: (0, 0, 0)
    full2 = lambda b: (0, 0)

    kernel = partial(_model_kernel, num_layers=L, num_heads=num_heads,
                     head_dim=head_dim)

    return pl.pallas_call(
        kernel,
        out_shape=jax.ShapeDtypeStruct((B, T, D), jnp.float32),
        grid_spec=pltpu.PrefetchScalarGridSpec(
            num_scalar_prefetch=0,
            grid=(B,),
            in_specs=[
                pl.BlockSpec((1, T, D), bmap3),        # states
                pl.BlockSpec((1, T, T), bmap3),        # masks
                pl.BlockSpec((L, D, 3 * AD), full3),   # fused Wq|Wk|Wv
                pl.BlockSpec((L, AD, D), full3),       # Wo
                pl.BlockSpec((L, 1, D), full3),        # ln1 scale
                pl.BlockSpec((L, 1, D), full3),        # ln1 bias
                pl.BlockSpec((L, D, FF), full3),       # ff1 W
                pl.BlockSpec((L, 1, FF), full3),       # ff1 b
                pl.BlockSpec((L, FF, D), full3),       # ff2 W
                pl.BlockSpec((L, 1, D), full3),        # ff2 b
                pl.BlockSpec((1, D), full2),           # ln_out scale
                pl.BlockSpec((1, D), full2),           # ln_out bias
            ],
            out_specs=pl.BlockSpec((1, T, D), bmap3),
        ),
        compiler_params=pltpu.CompilerParams(
            dimension_semantics=("parallel",),
        ),
    )(states, masks, wqkv, wo, ln1s, ln1b, w1, b1, w2, b2,
      params["ln_out_scale"], params["ln_out_bias"])


# -------------------------- pure-JAX reference ----------------------------- #

def _ref_layernorm(x, scale, bias):
    d = x.shape[-1]
    mean = jnp.mean(x, axis=-1, keepdims=True)
    var = jnp.sum((x - mean) ** 2, axis=-1, keepdims=True) / float(d - 1)
    return (x - mean) * jax.lax.rsqrt(var + LN_EPS) * scale + bias


def reference_forward(states, masks, params, *, num_heads, head_dim):
    hp = jax.lax.Precision.HIGHEST
    B, T, D = states.shape
    x = states
    for p in params["layers"]:
        q = jnp.einsum("btd,da->bta", x, p["wq"], precision=hp).reshape(B, T, num_heads, head_dim)
        k = jnp.einsum("btd,da->bta", x, p["wk"], precision=hp).reshape(B, T, num_heads, head_dim)
        v = jnp.einsum("btd,da->bta", x, p["wv"], precision=hp).reshape(B, T, num_heads, head_dim)
        alpha = jnp.einsum("bkha,bqha->bhqk", k, q, precision=hp) / math.sqrt(head_dim)
        alpha = alpha - masks[:, None] * F32_MAX
        alpha = jax.nn.softmax(alpha, axis=-1)
        ctx = jnp.einsum("bhqk,bkha->bqha", alpha, v, precision=hp)
        attn = jnp.einsum("btha,had->btd", ctx,
                          p["wo"].reshape(num_heads, head_dim, D), precision=hp)
        x = x + attn
        xn = _ref_layernorm(x, p["ln1_scale"][0], p["ln1_bias"][0])
        h1 = jax.nn.relu(jnp.einsum("btd,df->btf", xn, p["w1"], precision=hp) + p["b1"][0])
        ff = jnp.einsum("btf,fd->btd", h1, p["w2"], precision=hp) + p["b2"][0]
        x = x + ff
    return _ref_layernorm(x, params["ln_out_scale"][0], params["ln_out_bias"][0])


# ------------------------------ param init --------------------------------- #

def _xavier_uniform(key, shape):
    fan_in, fan_out = shape[0], shape[1]
    bound = math.sqrt(6.0 / (fan_in + fan_out))
    return jax.random.uniform(key, shape, jnp.float32, -bound, bound)


def init_params(key, num_layers, d_model, num_heads, head_dim, ff_dim):
    ad = num_heads * head_dim
    layers = []
    for _ in range(num_layers):
        keys = jax.random.split(key, 8)
        key = keys[-1]
        layers.append({
            "wq": _xavier_uniform(keys[0], (d_model, ad)),
            "wk": _xavier_uniform(keys[1], (d_model, ad)),
            "wv": _xavier_uniform(keys[2], (d_model, ad)),
            "wo": _xavier_uniform(keys[3], (ad, d_model)),
            "ln1_scale": jnp.ones((1, d_model), jnp.float32),
            "ln1_bias": jnp.zeros((1, d_model), jnp.float32),
            "w1": _xavier_uniform(keys[4], (d_model, ff_dim)),
            "b1": 0.01 * jnp.ones((1, ff_dim), jnp.float32),
            "w2": _xavier_uniform(keys[5], (ff_dim, d_model)),
            "b2": 0.01 * jnp.ones((1, d_model), jnp.float32),
        })
    return {
        "layers": layers,
        "ln_out_scale": jnp.ones((1, d_model), jnp.float32),
        "ln_out_bias": jnp.zeros((1, d_model), jnp.float32),
    }


# ---------------------------------- main ------------------------------------ #

if __name__ == "__main__":
    # model_config: embed_dim = hidden_dim = attention_dim = 32, num_heads = 4,
    # ff_dim = 64, num_layers = 2, dropout_rate = 0.0, bias_dim = None.
    B, T, D, H, FF, L = 2, 8, 32, 4, 64, 2
    A = D // H

    key = jax.random.PRNGKey(0)
    k_states, k_params = jax.random.split(key)

    states = jax.random.normal(k_states, (B, T, D), jnp.float32)

    # padding-style masks: 1.0 => masked (key position invalid)
    valid_len = jnp.array([T, 5], dtype=jnp.int32)
    key_idx = jnp.arange(T)[None, None, :]                     # (1, 1, T)
    masks = (key_idx >= valid_len[:, None, None]).astype(jnp.float32)
    masks = jnp.broadcast_to(masks, (B, T, T))

    attention_bias = jnp.zeros((0, 4), jnp.int32)              # NOOP_BIAS

    params = init_params(k_params, L, D, H, A, FF)

    out = transformer_forward(states, masks, attention_bias, params,
                              num_heads=H, head_dim=A)
    out = jax.block_until_ready(out)

    ref = jax.block_until_ready(
        reference_forward(states, masks, params, num_heads=H, head_dim=A))

    assert out.shape == (B, T, D)
    assert bool(jnp.all(jnp.isfinite(out)))
    assert bool(jnp.allclose(out, ref, atol=5e-2, rtol=5e-2)), (
        float(jnp.max(jnp.abs(out - ref))))

    print("KERNEL_OK")
</pallas_src>

<mosaic_0001>
module attributes {stable_mosaic.version = 11 : i64} {
  func.func @_model_kernel(%arg0: i32, %arg1: memref<1x8x32xf32, #tpu.memory_space<vmem>>, %arg2: memref<1x8x8xf32, #tpu.memory_space<vmem>>, %arg3: memref<2x32x96xf32, #tpu.memory_space<vmem>>, %arg4: memref<2x32x32xf32, #tpu.memory_space<vmem>>, %arg5: memref<2x1x32xf32, #tpu.memory_space<vmem>>, %arg6: memref<2x1x32xf32, #tpu.memory_space<vmem>>, %arg7: memref<2x32x64xf32, #tpu.memory_space<vmem>>, %arg8: memref<2x1x64xf32, #tpu.memory_space<vmem>>, %arg9: memref<2x64x32xf32, #tpu.memory_space<vmem>>, %arg10: memref<2x1x32xf32, #tpu.memory_space<vmem>>, %arg11: memref<1x32xf32, #tpu.memory_space<vmem>>, %arg12: memref<1x32xf32, #tpu.memory_space<vmem>>, %arg13: memref<1x8x32xf32, #tpu.memory_space<vmem>>) attributes {dimension_semantics = [#tpu.dimension_semantics<parallel>], iteration_bounds = array<i64: 2>, scalar_prefetch = 0 : i64, scratch_operands = 0 : i64, tpu.core_type = #tpu.core_type<tc>, window_params = [{transform_indices = @transform_0, window_bounds = array<i64: 1, 8, 32>}, {transform_indices = @transform_1, window_bounds = array<i64: 1, 8, 8>}, {pipeline_mode = #tpu.pipeline_mode<synchronous>, transform_indices = @transform_2, window_bounds = array<i64: 2, 32, 96>}, {pipeline_mode = #tpu.pipeline_mode<synchronous>, transform_indices = @transform_3, window_bounds = array<i64: 2, 32, 32>}, {pipeline_mode = #tpu.pipeline_mode<synchronous>, transform_indices = @transform_4, window_bounds = array<i64: 2, 1, 32>}, {pipeline_mode = #tpu.pipeline_mode<synchronous>, transform_indices = @transform_5, window_bounds = array<i64: 2, 1, 32>}, {pipeline_mode = #tpu.pipeline_mode<synchronous>, transform_indices = @transform_6, window_bounds = array<i64: 2, 32, 64>}, {pipeline_mode = #tpu.pipeline_mode<synchronous>, transform_indices = @transform_7, window_bounds = array<i64: 2, 1, 64>}, {pipeline_mode = #tpu.pipeline_mode<synchronous>, transform_indices = @transform_8, window_bounds = array<i64: 2, 64, 32>}, {pipeline_mode = #tpu.pipeline_mode<synchronous>, transform_indices = @transform_9, window_bounds = array<i64: 2, 1, 32>}, {pipeline_mode = #tpu.pipeline_mode<synchronous>, transform_indices = @transform_10, window_bounds = array<i64: 1, 32>}, {pipeline_mode = #tpu.pipeline_mode<synchronous>, transform_indices = @transform_11, window_bounds = array<i64: 1, 32>}, {transform_indices = @transform_12, window_bounds = array<i64: 1, 8, 32>}]} {
    %c0 = arith.constant 0 : index
    %c0_0 = arith.constant 0 : index
    %c0_1 = arith.constant 0 : index
    %0 = vector.load %arg1[%c0, %c0_0, %c0_1] : memref<1x8x32xf32, #tpu.memory_space<vmem>>, vector<1x8x32xf32>
    %1 = vector.shape_cast %0 : vector<1x8x32xf32> to vector<8x32xf32>
    %c0_2 = arith.constant 0 : index
    %c0_3 = arith.constant 0 : index
    %c0_4 = arith.constant 0 : index
    %2 = vector.load %arg2[%c0_2, %c0_3, %c0_4] : memref<1x8x8xf32, #tpu.memory_space<vmem>>, vector<1x8x8xf32>
    %3 = vector.shape_cast %2 : vector<1x8x8xf32> to vector<8x8xf32>
    %cst = arith.constant -1.000000e+30 : f32
    %4 = vector.broadcast %cst : f32 to vector<8x8xf32>
    %5 = arith.mulf %3, %4 : vector<8x8xf32>
    %c0_5 = arith.constant 0 : index
    %c0_6 = arith.constant 0 : index
    %c0_7 = arith.constant 0 : index
    %6 = vector.load %arg3[%c0_5, %c0_6, %c0_7] : memref<2x32x96xf32, #tpu.memory_space<vmem>>, vector<1x32x96xf32>
    %7 = vector.shape_cast %6 : vector<1x32x96xf32> to vector<32x96xf32>
    %c0_8 = arith.constant 0 : index
    %c0_9 = arith.constant 0 : index
    %c0_10 = arith.constant 0 : index
    %8 = vector.load %arg4[%c0_8, %c0_9, %c0_10] : memref<2x32x32xf32, #tpu.memory_space<vmem>>, vector<1x32x32xf32>
    %9 = vector.shape_cast %8 : vector<1x32x32xf32> to vector<32x32xf32>
    %cst_11 = arith.constant dense<0.000000e+00> : vector<8x96xf32>
    %10 = tpu.matmul %1, %7, %cst_11 {dimension_numbers = #tpu.dot_dimension_numbers<[1], [0], [0], [1], [0, 0, 1, 1], [], []>} : vector<8x32xf32>, vector<32x96xf32>, vector<8x96xf32> -> vector<8x96xf32>
    %cst_12 = arith.constant 0.000000e+00 : f32
    %11 = vector.broadcast %cst_12 : f32 to vector<8x32xf32>
    %12 = vector.extract_strided_slice %10 {offsets = [0, 0], sizes = [8, 8], strides = [1, 1]} : vector<8x96xf32> to vector<8x8xf32>
    %13 = vector.extract_strided_slice %10 {offsets = [0, 32], sizes = [8, 8], strides = [1, 1]} : vector<8x96xf32> to vector<8x8xf32>
    %14 = vector.extract_strided_slice %10 {offsets = [0, 64], sizes = [8, 8], strides = [1, 1]} : vector<8x96xf32> to vector<8x8xf32>
    %15 = tpu.transpose %13, [1, 0] : vector<8x8xf32> -> vector<8x8xf32>
    %cst_13 = arith.constant dense<0.000000e+00> : vector<8x8xf32>
    %16 = tpu.matmul %12, %15, %cst_13 {dimension_numbers = #tpu.dot_dimension_numbers<[1], [0], [0], [1], [0, 0, 1, 1], [], []>} : vector<8x8xf32>, vector<8x8xf32>, vector<8x8xf32> -> vector<8x8xf32>
    %cst_14 = arith.constant 0.353553385 : f32
    %17 = vector.broadcast %cst_14 : f32 to vector<8x8xf32>
    %18 = arith.mulf %16, %17 : vector<8x8xf32>
    %19 = arith.addf %18, %5 : vector<8x8xf32>
    %cst_15 = arith.constant dense<0xFF800000> : vector<8xf32>
    %20 = vector.multi_reduction <maximumf>, %19, %cst_15 [1] : vector<8x8xf32> to vector<8xf32>
    %21 = vector.shape_cast %20 : vector<8xf32> to vector<8x1xf32>
    %22 = vector.broadcast %21 : vector<8x1xf32> to vector<8x8xf32>
    %23 = arith.subf %19, %22 : vector<8x8xf32>
    %24 = math.exp %23 : vector<8x8xf32>
    %cst_16 = arith.constant dense<0.000000e+00> : vector<8xf32>
    %25 = vector.multi_reduction <add>, %24, %cst_16 [1] : vector<8x8xf32> to vector<8xf32>
    %26 = vector.shape_cast %25 : vector<8xf32> to vector<8x1xf32>
    %27 = tpu.reciprocal %26 {approx = true} : vector<8x1xf32> -> vector<8x1xf32>
    %28 = vector.broadcast %27 : vector<8x1xf32> to vector<8x8xf32>
    %29 = arith.mulf %24, %28 : vector<8x8xf32>
    %cst_17 = arith.constant dense<0.000000e+00> : vector<8x8xf32>
    %30 = tpu.matmul %29, %14, %cst_17 {dimension_numbers = #tpu.dot_dimension_numbers<[1], [0], [0], [1], [0, 0, 1, 1], [], []>} : vector<8x8xf32>, vector<8x8xf32>, vector<8x8xf32> -> vector<8x8xf32>
    %31 = vector.extract_strided_slice %9 {offsets = [0, 0], sizes = [8, 32], strides = [1, 1]} : vector<32x32xf32> to vector<8x32xf32>
    %cst_18 = arith.constant dense<0.000000e+00> : vector<8x32xf32>
    %32 = tpu.matmul %30, %31, %cst_18 {dimension_numbers = #tpu.dot_dimension_numbers<[1], [0], [0], [1], [0, 0, 1, 1], [], []>} : vector<8x8xf32>, vector<8x32xf32>, vector<8x32xf32> -> vector<8x32xf32>
    %33 = arith.addf %11, %32 : vector<8x32xf32>
    %34 = vector.extract_strided_slice %10 {offsets = [0, 8], sizes = [8, 8], strides = [1, 1]} : vector<8x96xf32> to vector<8x8xf32>
    %35 = vector.extract_strided_slice %10 {offsets = [0, 40], sizes = [8, 8], strides = [1, 1]} : vector<8x96xf32> to vector<8x8xf32>
    %36 = vector.extract_strided_slice %10 {offsets = [0, 72], sizes = [8, 8], strides = [1, 1]} : vector<8x96xf32> to vector<8x8xf32>
    %37 = tpu.transpose %35, [1, 0] : vector<8x8xf32> -> vector<8x8xf32>
    %cst_19 = arith.constant dense<0.000000e+00> : vector<8x8xf32>
    %38 = tpu.matmul %34, %37, %cst_19 {dimension_numbers = #tpu.dot_dimension_numbers<[1], [0], [0], [1], [0, 0, 1, 1], [], []>} : vector<8x8xf32>, vector<8x8xf32>, vector<8x8xf32> -> vector<8x8xf32>
    %cst_20 = arith.constant 0.353553385 : f32
    %39 = vector.broadcast %cst_20 : f32 to vector<8x8xf32>
    %40 = arith.mulf %38, %39 : vector<8x8xf32>
    %41 = arith.addf %40, %5 : vector<8x8xf32>
    %cst_21 = arith.constant dense<0xFF800000> : vector<8xf32>
    %42 = vector.multi_reduction <maximumf>, %41, %cst_21 [1] : vector<8x8xf32> to vector<8xf32>
    %43 = vector.shape_cast %42 : vector<8xf32> to vector<8x1xf32>
    %44 = vector.broadcast %43 : vector<8x1xf32> to vector<8x8xf32>
    %45 = arith.subf %41, %44 : vector<8x8xf32>
    %46 = math.exp %45 : vector<8x8xf32>
    %cst_22 = arith.constant dense<0.000000e+00> : vector<8xf32>
    %47 = vector.multi_reduction <add>, %46, %cst_22 [1] : vector<8x8xf32> to vector<8xf32>
    %48 = vector.shape_cast %47 : vector<8xf32> to vector<8x1xf32>
    %49 = tpu.reciprocal %48 {approx = true} : vector<8x1xf32> -> vector<8x1xf32>
    %50 = vector.broadcast %49 : vector<8x1xf32> to vector<8x8xf32>
    %51 = arith.mulf %46, %50 : vector<8x8xf32>
    %cst_23 = arith.constant dense<0.000000e+00> : vector<8x8xf32>
    %52 = tpu.matmul %51, %36, %cst_23 {dimension_numbers = #tpu.dot_dimension_numbers<[1], [0], [0], [1], [0, 0, 1, 1], [], []>} : vector<8x8xf32>, vector<8x8xf32>, vector<8x8xf32> -> vector<8x8xf32>
    %53 = vector.extract_strided_slice %9 {offsets = [8, 0], sizes = [8, 32], strides = [1, 1]} : vector<32x32xf32> to vector<8x32xf32>
    %cst_24 = arith.constant dense<0.000000e+00> : vector<8x32xf32>
    %54 = tpu.matmul %52, %53, %cst_24 {dimension_numbers = #tpu.dot_dimension_numbers<[1], [0], [0], [1], [0, 0, 1, 1], [], []>} : vector<8x8xf32>, vector<8x32xf32>, vector<8x32xf32> -> vector<8x32xf32>
    %55 = arith.addf %33, %54 : vector<8x32xf32>
    %56 = vector.extract_strided_slice %10 {offsets = [0, 16], sizes = [8, 8], strides = [1, 1]} : vector<8x96xf32> to vector<8x8xf32>
    %57 = vector.extract_strided_slice %10 {offsets = [0, 48], sizes = [8, 8], strides = [1, 1]} : vector<8x96xf32> to vector<8x8xf32>
    %58 = vector.extract_strided_slice %10 {offsets = [0, 80], sizes = [8, 8], strides = [1, 1]} : vector<8x96xf32> to vector<8x8xf32>
    %59 = tpu.transpose %57, [1, 0] : vector<8x8xf32> -> vector<8x8xf32>
    %cst_25 = arith.constant dense<0.000000e+00> : vector<8x8xf32>
    %60 = tpu.matmul %56, %59, %cst_25 {dimension_numbers = #tpu.dot_dimension_numbers<[1], [0], [0], [1], [0, 0, 1, 1], [], []>} : vector<8x8xf32>, vector<8x8xf32>, vector<8x8xf32> -> vector<8x8xf32>
    %cst_26 = arith.constant 0.353553385 : f32
    %61 = vector.broadcast %cst_26 : f32 to vector<8x8xf32>
    %62 = arith.mulf %60, %61 : vector<8x8xf32>
    %63 = arith.addf %62, %5 : vector<8x8xf32>
    %cst_27 = arith.constant dense<0xFF800000> : vector<8xf32>
    %64 = vector.multi_reduction <maximumf>, %63, %cst_27 [1] : vector<8x8xf32> to vector<8xf32>
    %65 = vector.shape_cast %64 : vector<8xf32> to vector<8x1xf32>
    %66 = vector.broadcast %65 : vector<8x1xf32> to vector<8x8xf32>
    %67 = arith.subf %63, %66 : vector<8x8xf32>
    %68 = math.exp %67 : vector<8x8xf32>
    %cst_28 = arith.constant dense<0.000000e+00> : vector<8xf32>
    %69 = vector.multi_reduction <add>, %68, %cst_28 [1] : vector<8x8xf32> to vector<8xf32>
    %70 = vector.shape_cast %69 : vector<8xf32> to vector<8x1xf32>
    %71 = tpu.reciprocal %70 {approx = true} : vector<8x1xf32> -> vector<8x1xf32>
    %72 = vector.broadcast %71 : vector<8x1xf32> to vector<8x8xf32>
    %73 = arith.mulf %68, %72 : vector<8x8xf32>
    %cst_29 = arith.constant dense<0.000000e+00> : vector<8x8xf32>
    %74 = tpu.matmul %73, %58, %cst_29 {dimension_numbers = #tpu.dot_dimension_numbers<[1], [0], [0], [1], [0, 0, 1, 1], [], []>} : vector<8x8xf32>, vector<8x8xf32>, vector<8x8xf32> -> vector<8x8xf32>
    %75 = vector.extract_strided_slice %9 {offsets = [16, 0], sizes = [8, 32], strides = [1, 1]} : vector<32x32xf32> to vector<8x32xf32>
    %cst_30 = arith.constant dense<0.000000e+00> : vector<8x32xf32>
    %76 = tpu.matmul %74, %75, %cst_30 {dimension_numbers = #tpu.dot_dimension_numbers<[1], [0], [0], [1], [0, 0, 1, 1], [], []>} : vector<8x8xf32>, vector<8x32xf32>, vector<8x32xf32> -> vector<8x32xf32>
    %77 = arith.addf %55, %76 : vector<8x32xf32>
    %78 = vector.extract_strided_slice %10 {offsets = [0, 24], sizes = [8, 8], strides = [1, 1]} : vector<8x96xf32> to vector<8x8xf32>
    %79 = vector.extract_strided_slice %10 {offsets = [0, 56], sizes = [8, 8], strides = [1, 1]} : vector<8x96xf32> to vector<8x8xf32>
    %80 = vector.extract_strided_slice %10 {offsets = [0, 88], sizes = [8, 8], strides = [1, 1]} : vector<8x96xf32> to vector<8x8xf32>
    %81 = tpu.transpose %79, [1, 0] : vector<8x8xf32> -> vector<8x8xf32>
    %cst_31 = arith.constant dense<0.000000e+00> : vector<8x8xf32>
    %82 = tpu.matmul %78, %81, %cst_31 {dimension_numbers = #tpu.dot_dimension_numbers<[1], [0], [0], [1], [0, 0, 1, 1], [], []>} : vector<8x8xf32>, vector<8x8xf32>, vector<8x8xf32> -> vector<8x8xf32>
    %cst_32 = arith.constant 0.353553385 : f32
    %83 = vector.broadcast %cst_32 : f32 to vector<8x8xf32>
    %84 = arith.mulf %82, %83 : vector<8x8xf32>
    %85 = arith.addf %84, %5 : vector<8x8xf32>
    %cst_33 = arith.constant dense<0xFF800000> : vector<8xf32>
    %86 = vector.multi_reduction <maximumf>, %85, %cst_33 [1] : vector<8x8xf32> to vector<8xf32>
    %87 = vector.shape_cast %86 : vector<8xf32> to vector<8x1xf32>
    %88 = vector.broadcast %87 : vector<8x1xf32> to vector<8x8xf32>
    %89 = arith.subf %85, %88 : vector<8x8xf32>
    %90 = math.exp %89 : vector<8x8xf32>
    %cst_34 = arith.constant dense<0.000000e+00> : vector<8xf32>
    %91 = vector.multi_reduction <add>, %90, %cst_34 [1] : vector<8x8xf32> to vector<8xf32>
    %92 = vector.shape_cast %91 : vector<8xf32> to vector<8x1xf32>
    %93 = tpu.reciprocal %92 {approx = true} : vector<8x1xf32> -> vector<8x1xf32>
    %94 = vector.broadcast %93 : vector<8x1xf32> to vector<8x8xf32>
    %95 = arith.mulf %90, %94 : vector<8x8xf32>
    %cst_35 = arith.constant dense<0.000000e+00> : vector<8x8xf32>
    %96 = tpu.matmul %95, %80, %cst_35 {dimension_numbers = #tpu.dot_dimension_numbers<[1], [0], [0], [1], [0, 0, 1, 1], [], []>} : vector<8x8xf32>, vector<8x8xf32>, vector<8x8xf32> -> vector<8x8xf32>
    %97 = vector.extract_strided_slice %9 {offsets = [24, 0], sizes = [8, 32], strides = [1, 1]} : vector<32x32xf32> to vector<8x32xf32>
    %cst_36 = arith.constant dense<0.000000e+00> : vector<8x32xf32>
    %98 = tpu.matmul %96, %97, %cst_36 {dimension_numbers = #tpu.dot_dimension_numbers<[1], [0], [0], [1], [0, 0, 1, 1], [], []>} : vector<8x8xf32>, vector<8x32xf32>, vector<8x32xf32> -> vector<8x32xf32>
    %99 = arith.addf %77, %98 : vector<8x32xf32>
    %100 = arith.addf %1, %99 : vector<8x32xf32>
    %c0_37 = arith.constant 0 : index
    %c0_38 = arith.constant 0 : index
    %c0_39 = arith.constant 0 : index
    %101 = vector.load %arg5[%c0_37, %c0_38, %c0_39] : memref<2x1x32xf32, #tpu.memory_space<vmem>>, vector<1x1x32xf32>
    %102 = vector.shape_cast %101 : vector<1x1x32xf32> to vector<1x32xf32>
    %c0_40 = arith.constant 0 : index
    %c0_41 = arith.constant 0 : index
    %c0_42 = arith.constant 0 : index
    %103 = vector.load %arg6[%c0_40, %c0_41, %c0_42] : memref<2x1x32xf32, #tpu.memory_space<vmem>>, vector<1x1x32xf32>
    %104 = vector.shape_cast %103 : vector<1x1x32xf32> to vector<1x32xf32>
    %cst_43 = arith.constant dense<0.000000e+00> : vector<8xf32>
    %105 = vector.multi_reduction <add>, %100, %cst_43 [1] : vector<8x32xf32> to vector<8xf32>
    %106 = vector.shape_cast %105 : vector<8xf32> to vector<8x1xf32>
    %cst_44 = arith.constant 3.200000e+01 : f32
    %107 = vector.broadcast %cst_44 : f32 to vector<8x1xf32>
    %108 = arith.divf %106, %107 : vector<8x1xf32>
    %109 = vector.broadcast %108 : vector<8x1xf32> to vector<8x32xf32>
    %110 = arith.subf %100, %109 : vector<8x32xf32>
    %111 = arith.mulf %110, %110 : vector<8x32xf32>
    %cst_45 = arith.constant dense<0.000000e+00> : vector<8xf32>
    %112 = vector.multi_reduction <add>, %111, %cst_45 [1] : vector<8x32xf32> to vector<8xf32>
    %113 = vector.shape_cast %112 : vector<8xf32> to vector<8x1xf32>
    %cst_46 = arith.constant 0.0322580636 : f32
    %114 = vector.broadcast %cst_46 : f32 to vector<8x1xf32>
    %115 = arith.mulf %113, %114 : vector<8x1xf32>
    %116 = vector.broadcast %108 : vector<8x1xf32> to vector<8x32xf32>
    %117 = arith.subf %100, %116 : vector<8x32xf32>
    %cst_47 = arith.constant 1.000000e-03 : f32
    %118 = vector.broadcast %cst_47 : f32 to vector<8x1xf32>
    %119 = arith.addf %115, %118 : vector<8x1xf32>
    %120 = math.rsqrt %119 : vector<8x1xf32>
    %121 = vector.broadcast %120 : vector<8x1xf32> to vector<8x32xf32>
    %122 = arith.mulf %117, %121 : vector<8x32xf32>
    %123 = vector.broadcast %102 : vector<1x32xf32> to vector<8x32xf32>
    %124 = arith.mulf %122, %123 : vector<8x32xf32>
    %125 = vector.broadcast %104 : vector<1x32xf32> to vector<8x32xf32>
    %126 = arith.addf %124, %125 : vector<8x32xf32>
    %c0_48 = arith.constant 0 : index
    %c0_49 = arith.constant 0 : index
    %c0_50 = arith.constant 0 : index
    %127 = vector.load %arg7[%c0_48, %c0_49, %c0_50] : memref<2x32x64xf32, #tpu.memory_space<vmem>>, vector<1x32x64xf32>
    %128 = vector.shape_cast %127 : vector<1x32x64xf32> to vector<32x64xf32>
    %cst_51 = arith.constant dense<0.000000e+00> : vector<8x64xf32>
    %129 = tpu.matmul %126, %128, %cst_51 {dimension_numbers = #tpu.dot_dimension_numbers<[1], [0], [0], [1], [0, 0, 1, 1], [], []>} : vector<8x32xf32>, vector<32x64xf32>, vector<8x64xf32> -> vector<8x64xf32>
    %c0_52 = arith.constant 0 : index
    %c0_53 = arith.constant 0 : index
    %c0_54 = arith.constant 0 : index
    %130 = vector.load %arg8[%c0_52, %c0_53, %c0_54] : memref<2x1x64xf32, #tpu.memory_space<vmem>>, vector<1x1x64xf32>
    %131 = vector.shape_cast %130 : vector<1x1x64xf32> to vector<1x64xf32>
    %132 = vector.broadcast %131 : vector<1x64xf32> to vector<8x64xf32>
    %133 = arith.addf %129, %132 : vector<8x64xf32>
    %cst_55 = arith.constant 0.000000e+00 : f32
    %134 = vector.broadcast %cst_55 : f32 to vector<8x64xf32>
    %135 = arith.maximumf %133, %134 : vector<8x64xf32>
    %c0_56 = arith.constant 0 : index
    %c0_57 = arith.constant 0 : index
    %c0_58 = arith.constant 0 : index
    %136 = vector.load %arg9[%c0_56, %c0_57, %c0_58] : memref<2x64x32xf32, #tpu.memory_space<vmem>>, vector<1x64x32xf32>
    %137 = vector.shape_cast %136 : vector<1x64x32xf32> to vector<64x32xf32>
    %cst_59 = arith.constant dense<0.000000e+00> : vector<8x32xf32>
    %138 = tpu.matmul %135, %137, %cst_59 {dimension_numbers = #tpu.dot_dimension_numbers<[1], [0], [0], [1], [0, 0, 1, 1], [], []>} : vector<8x64xf32>, vector<64x32xf32>, vector<8x32xf32> -> vector<8x32xf32>
    %c0_60 = arith.constant 0 : index
    %c0_61 = arith.constant 0 : index
    %c0_62 = arith.constant 0 : index
    %139 = vector.load %arg10[%c0_60, %c0_61, %c0_62] : memref<2x1x32xf32, #tpu.memory_space<vmem>>, vector<1x1x32xf32>
    %140 = vector.shape_cast %139 : vector<1x1x32xf32> to vector<1x32xf32>
    %141 = vector.broadcast %140 : vector<1x32xf32> to vector<8x32xf32>
    %142 = arith.addf %138, %141 : vector<8x32xf32>
    %143 = arith.addf %100, %142 : vector<8x32xf32>
    %c1 = arith.constant 1 : index
    %c0_63 = arith.constant 0 : index
    %c0_64 = arith.constant 0 : index
    %144 = vector.load %arg3[%c1, %c0_63, %c0_64] : memref<2x32x96xf32, #tpu.memory_space<vmem>>, vector<1x32x96xf32>
    %145 = vector.shape_cast %144 : vector<1x32x96xf32> to vector<32x96xf32>
    %c1_65 = arith.constant 1 : index
    %c0_66 = arith.constant 0 : index
    %c0_67 = arith.constant 0 : index
    %146 = vector.load %arg4[%c1_65, %c0_66, %c0_67] : memref<2x32x32xf32, #tpu.memory_space<vmem>>, vector<1x32x32xf32>
    %147 = vector.shape_cast %146 : vector<1x32x32xf32> to vector<32x32xf32>
    %cst_68 = arith.constant dense<0.000000e+00> : vector<8x96xf32>
    %148 = tpu.matmul %143, %145, %cst_68 {dimension_numbers = #tpu.dot_dimension_numbers<[1], [0], [0], [1], [0, 0, 1, 1], [], []>} : vector<8x32xf32>, vector<32x96xf32>, vector<8x96xf32> -> vector<8x96xf32>
    %cst_69 = arith.constant 0.000000e+00 : f32
    %149 = vector.broadcast %cst_69 : f32 to vector<8x32xf32>
    %150 = vector.extract_strided_slice %148 {offsets = [0, 0], sizes = [8, 8], strides = [1, 1]} : vector<8x96xf32> to vector<8x8xf32>
    %151 = vector.extract_strided_slice %148 {offsets = [0, 32], sizes = [8, 8], strides = [1, 1]} : vector<8x96xf32> to vector<8x8xf32>
    %152 = vector.extract_strided_slice %148 {offsets = [0, 64], sizes = [8, 8], strides = [1, 1]} : vector<8x96xf32> to vector<8x8xf32>
    %153 = tpu.transpose %151, [1, 0] : vector<8x8xf32> -> vector<8x8xf32>
    %cst_70 = arith.constant dense<0.000000e+00> : vector<8x8xf32>
    %154 = tpu.matmul %150, %153, %cst_70 {dimension_numbers = #tpu.dot_dimension_numbers<[1], [0], [0], [1], [0, 0, 1, 1], [], []>} : vector<8x8xf32>, vector<8x8xf32>, vector<8x8xf32> -> vector<8x8xf32>
    %cst_71 = arith.constant 0.353553385 : f32
    %155 = vector.broadcast %cst_71 : f32 to vector<8x8xf32>
    %156 = arith.mulf %154, %155 : vector<8x8xf32>
    %157 = arith.addf %156, %5 : vector<8x8xf32>
    %cst_72 = arith.constant dense<0xFF800000> : vector<8xf32>
    %158 = vector.multi_reduction <maximumf>, %157, %cst_72 [1] : vector<8x8xf32> to vector<8xf32>
    %159 = vector.shape_cast %158 : vector<8xf32> to vector<8x1xf32>
    %160 = vector.broadcast %159 : vector<8x1xf32> to vector<8x8xf32>
    %161 = arith.subf %157, %160 : vector<8x8xf32>
    %162 = math.exp %161 : vector<8x8xf32>
    %cst_73 = arith.constant dense<0.000000e+00> : vector<8xf32>
    %163 = vector.multi_reduction <add>, %162, %cst_73 [1] : vector<8x8xf32> to vector<8xf32>
    %164 = vector.shape_cast %163 : vector<8xf32> to vector<8x1xf32>
    %165 = tpu.reciprocal %164 {approx = true} : vector<8x1xf32> -> vector<8x1xf32>
    %166 = vector.broadcast %165 : vector<8x1xf32> to vector<8x8xf32>
    %167 = arith.mulf %162, %166 : vector<8x8xf32>
    %cst_74 = arith.constant dense<0.000000e+00> : vector<8x8xf32>
    %168 = tpu.matmul %167, %152, %cst_74 {dimension_numbers = #tpu.dot_dimension_numbers<[1], [0], [0], [1], [0, 0, 1, 1], [], []>} : vector<8x8xf32>, vector<8x8xf32>, vector<8x8xf32> -> vector<8x8xf32>
    %169 = vector.extract_strided_slice %147 {offsets = [0, 0], sizes = [8, 32], strides = [1, 1]} : vector<32x32xf32> to vector<8x32xf32>
    %cst_75 = arith.constant dense<0.000000e+00> : vector<8x32xf32>
    %170 = tpu.matmul %168, %169, %cst_75 {dimension_numbers = #tpu.dot_dimension_numbers<[1], [0], [0], [1], [0, 0, 1, 1], [], []>} : vector<8x8xf32>, vector<8x32xf32>, vector<8x32xf32> -> vector<8x32xf32>
    %171 = arith.addf %149, %170 : vector<8x32xf32>
    %172 = vector.extract_strided_slice %148 {offsets = [0, 8], sizes = [8, 8], strides = [1, 1]} : vector<8x96xf32> to vector<8x8xf32>
    %173 = vector.extract_strided_slice %148 {offsets = [0, 40], sizes = [8, 8], strides = [1, 1]} : vector<8x96xf32> to vector<8x8xf32>
    %174 = vector.extract_strided_slice %148 {offsets = [0, 72], sizes = [8, 8], strides = [1, 1]} : vector<8x96xf32> to vector<8x8xf32>
    %175 = tpu.transpose %173, [1, 0] : vector<8x8xf32> -> vector<8x8xf32>
    %cst_76 = arith.constant dense<0.000000e+00> : vector<8x8xf32>
    %176 = tpu.matmul %172, %175, %cst_76 {dimension_numbers = #tpu.dot_dimension_numbers<[1], [0], [0], [1], [0, 0, 1, 1], [], []>} : vector<8x8xf32>, vector<8x8xf32>, vector<8x8xf32> -> vector<8x8xf32>
    %cst_77 = arith.constant 0.353553385 : f32
    %177 = vector.broadcast %cst_77 : f32 to vector<8x8xf32>
    %178 = arith.mulf %176, %177 : vector<8x8xf32>
    %179 = arith.addf %178, %5 : vector<8x8xf32>
    %cst_78 = arith.constant dense<0xFF800000> : vector<8xf32>
    %180 = vector.multi_reduction <maximumf>, %179, %cst_78 [1] : vector<8x8xf32> to vector<8xf32>
    %181 = vector.shape_cast %180 : vector<8xf32> to vector<8x1xf32>
    %182 = vector.broadcast %181 : vector<8x1xf32> to vector<8x8xf32>
    %183 = arith.subf %179, %182 : vector<8x8xf32>
    %184 = math.exp %183 : vector<8x8xf32>
    %cst_79 = arith.constant dense<0.000000e+00> : vector<8xf32>
    %185 = vector.multi_reduction <add>, %184, %cst_79 [1] : vector<8x8xf32> to vector<8xf32>
    %186 = vector.shape_cast %185 : vector<8xf32> to vector<8x1xf32>
    %187 = tpu.reciprocal %186 {approx = true} : vector<8x1xf32> -> vector<8x1xf32>
    %188 = vector.broadcast %187 : vector<8x1xf32> to vector<8x8xf32>
    %189 = arith.mulf %184, %188 : vector<8x8xf32>
    %cst_80 = arith.constant dense<0.000000e+00> : vector<8x8xf32>
    %190 = tpu.matmul %189, %174, %cst_80 {dimension_numbers = #tpu.dot_dimension_numbers<[1], [0], [0], [1], [0, 0, 1, 1], [], []>} : vector<8x8xf32>, vector<8x8xf32>, vector<8x8xf32> -> vector<8x8xf32>
    %191 = vector.extract_strided_slice %147 {offsets = [8, 0], sizes = [8, 32], strides = [1, 1]} : vector<32x32xf32> to vector<8x32xf32>
    %cst_81 = arith.constant dense<0.000000e+00> : vector<8x32xf32>
    %192 = tpu.matmul %190, %191, %cst_81 {dimension_numbers = #tpu.dot_dimension_numbers<[1], [0], [0], [1], [0, 0, 1, 1], [], []>} : vector<8x8xf32>, vector<8x32xf32>, vector<8x32xf32> -> vector<8x32xf32>
    %193 = arith.addf %171, %192 : vector<8x32xf32>
    %194 = vector.extract_strided_slice %148 {offsets = [0, 16], sizes = [8, 8], strides = [1, 1]} : vector<8x96xf32> to vector<8x8xf32>
    %195 = vector.extract_strided_slice %148 {offsets = [0, 48], sizes = [8, 8], strides = [1, 1]} : vector<8x96xf32> to vector<8x8xf32>
    %196 = vector.extract_strided_slice %148 {offsets = [0, 80], sizes = [8, 8], strides = [1, 1]} : vector<8x96xf32> to vector<8x8xf32>
    %197 = tpu.transpose %195, [1, 0] : vector<8x8xf32> -> vector<8x8xf32>
    %cst_82 = arith.constant dense<0.000000e+00> : vector<8x8xf32>
    %198 = tpu.matmul %194, %197, %cst_82 {dimension_numbers = #tpu.dot_dimension_numbers<[1], [0], [0], [1], [0, 0, 1, 1], [], []>} : vector<8x8xf32>, vector<8x8xf32>, vector<8x8xf32> -> vector<8x8xf32>
    %cst_83 = arith.constant 0.353553385 : f32
    %199 = vector.broadcast %cst_83 : f32 to vector<8x8xf32>
    %200 = arith.mulf %198, %199 : vector<8x8xf32>
    %201 = arith.addf %200, %5 : vector<8x8xf32>
    %cst_84 = arith.constant dense<0xFF800000> : vector<8xf32>
    %202 = vector.multi_reduction <maximumf>, %201, %cst_84 [1] : vector<8x8xf32> to vector<8xf32>
    %203 = vector.shape_cast %202 : vector<8xf32> to vector<8x1xf32>
    %204 = vector.broadcast %203 : vector<8x1xf32> to vector<8x8xf32>
    %205 = arith.subf %201, %204 : vector<8x8xf32>
    %206 = math.exp %205 : vector<8x8xf32>
    %cst_85 = arith.constant dense<0.000000e+00> : vector<8xf32>
    %207 = vector.multi_reduction <add>, %206, %cst_85 [1] : vector<8x8xf32> to vector<8xf32>
    %208 = vector.shape_cast %207 : vector<8xf32> to vector<8x1xf32>
    %209 = tpu.reciprocal %208 {approx = true} : vector<8x1xf32> -> vector<8x1xf32>
    %210 = vector.broadcast %209 : vector<8x1xf32> to vector<8x8xf32>
    %211 = arith.mulf %206, %210 : vector<8x8xf32>
    %cst_86 = arith.constant dense<0.000000e+00> : vector<8x8xf32>
    %212 = tpu.matmul %211, %196, %cst_86 {dimension_numbers = #tpu.dot_dimension_numbers<[1], [0], [0], [1], [0, 0, 1, 1], [], []>} : vector<8x8xf32>, vector<8x8xf32>, vector<8x8xf32> -> vector<8x8xf32>
    %213 = vector.extract_strided_slice %147 {offsets = [16, 0], sizes = [8, 32], strides = [1, 1]} : vector<32x32xf32> to vector<8x32xf32>
    %cst_87 = arith.constant dense<0.000000e+00> : vector<8x32xf32>
    %214 = tpu.matmul %212, %213, %cst_87 {dimension_numbers = #tpu.dot_dimension_numbers<[1], [0], [0], [1], [0, 0, 1, 1], [], []>} : vector<8x8xf32>, vector<8x32xf32>, vector<8x32xf32> -> vector<8x32xf32>
    %215 = arith.addf %193, %214 : vector<8x32xf32>
    %216 = vector.extract_strided_slice %148 {offsets = [0, 24], sizes = [8, 8], strides = [1, 1]} : vector<8x96xf32> to vector<8x8xf32>
    %217 = vector.extract_strided_slice %148 {offsets = [0, 56], sizes = [8, 8], strides = [1, 1]} : vector<8x96xf32> to vector<8x8xf32>
    %218 = vector.extract_strided_slice %148 {offsets = [0, 88], sizes = [8, 8], strides = [1, 1]} : vector<8x96xf32> to vector<8x8xf32>
    %219 = tpu.transpose %217, [1, 0] : vector<8x8xf32> -> vector<8x8xf32>
    %cst_88 = arith.constant dense<0.000000e+00> : vector<8x8xf32>
    %220 = tpu.matmul %216, %219, %cst_88 {dimension_numbers = #tpu.dot_dimension_numbers<[1], [0], [0], [1], [0, 0, 1, 1], [], []>} : vector<8x8xf32>, vector<8x8xf32>, vector<8x8xf32> -> vector<8x8xf32>
    %cst_89 = arith.constant 0.353553385 : f32
    %221 = vector.broadcast %cst_89 : f32 to vector<8x8xf32>
    %222 = arith.mulf %220, %221 : vector<8x8xf32>
    %223 = arith.addf %222, %5 : vector<8x8xf32>
    %cst_90 = arith.constant dense<0xFF800000> : vector<8xf32>
    %224 = vector.multi_reduction <maximumf>, %223, %cst_90 [1] : vector<8x8xf32> to vector<8xf32>
    %225 = vector.shape_cast %224 : vector<8xf32> to vector<8x1xf32>
    %226 = vector.broadcast %225 : vector<8x1xf32> to vector<8x8xf32>
    %227 = arith.subf %223, %226 : vector<8x8xf32>
    %228 = math.exp %227 : vector<8x8xf32>
    %cst_91 = arith.constant dense<0.000000e+00> : vector<8xf32>
    %229 = vector.multi_reduction <add>, %228, %cst_91 [1] : vector<8x8xf32> to vector<8xf32>
    %230 = vector.shape_cast %229 : vector<8xf32> to vector<8x1xf32>
    %231 = tpu.reciprocal %230 {approx = true} : vector<8x1xf32> -> vector<8x1xf32>
    %232 = vector.broadcast %231 : vector<8x1xf32> to vector<8x8xf32>
    %233 = arith.mulf %228, %232 : vector<8x8xf32>
    %cst_92 = arith.constant dense<0.000000e+00> : vector<8x8xf32>
    %234 = tpu.matmul %233, %218, %cst_92 {dimension_numbers = #tpu.dot_dimension_numbers<[1], [0], [0], [1], [0, 0, 1, 1], [], []>} : vector<8x8xf32>, vector<8x8xf32>, vector<8x8xf32> -> vector<8x8xf32>
    %235 = vector.extract_strided_slice %147 {offsets = [24, 0], sizes = [8, 32], strides = [1, 1]} : vector<32x32xf32> to vector<8x32xf32>
    %cst_93 = arith.constant dense<0.000000e+00> : vector<8x32xf32>
    %236 = tpu.matmul %234, %235, %cst_93 {dimension_numbers = #tpu.dot_dimension_numbers<[1], [0], [0], [1], [0, 0, 1, 1], [], []>} : vector<8x8xf32>, vector<8x32xf32>, vector<8x32xf32> -> vector<8x32xf32>
    %237 = arith.addf %215, %236 : vector<8x32xf32>
    %238 = arith.addf %143, %237 : vector<8x32xf32>
    %c1_94 = arith.constant 1 : index
    %c0_95 = arith.constant 0 : index
    %c0_96 = arith.constant 0 : index
    %239 = vector.load %arg5[%c1_94, %c0_95, %c0_96] : memref<2x1x32xf32, #tpu.memory_space<vmem>>, vector<1x1x32xf32>
    %240 = vector.shape_cast %239 : vector<1x1x32xf32> to vector<1x32xf32>
    %c1_97 = arith.constant 1 : index
    %c0_98 = arith.constant 0 : index
    %c0_99 = arith.constant 0 : index
    %241 = vector.load %arg6[%c1_97, %c0_98, %c0_99] : memref<2x1x32xf32, #tpu.memory_space<vmem>>, vector<1x1x32xf32>
    %242 = vector.shape_cast %241 : vector<1x1x32xf32> to vector<1x32xf32>
    %cst_100 = arith.constant dense<0.000000e+00> : vector<8xf32>
    %243 = vector.multi_reduction <add>, %238, %cst_100 [1] : vector<8x32xf32> to vector<8xf32>
    %244 = vector.shape_cast %243 : vector<8xf32> to vector<8x1xf32>
    %cst_101 = arith.constant 3.200000e+01 : f32
    %245 = vector.broadcast %cst_101 : f32 to vector<8x1xf32>
    %246 = arith.divf %244, %245 : vector<8x1xf32>
    %247 = vector.broadcast %246 : vector<8x1xf32> to vector<8x32xf32>
    %248 = arith.subf %238, %247 : vector<8x32xf32>
    %249 = arith.mulf %248, %248 : vector<8x32xf32>
    %cst_102 = arith.constant dense<0.000000e+00> : vector<8xf32>
    %250 = vector.multi_reduction <add>, %249, %cst_102 [1] : vector<8x32xf32> to vector<8xf32>
    %251 = vector.shape_cast %250 : vector<8xf32> to vector<8x1xf32>
    %cst_103 = arith.constant 0.0322580636 : f32
    %252 = vector.broadcast %cst_103 : f32 to vector<8x1xf32>
    %253 = arith.mulf %251, %252 : vector<8x1xf32>
    %254 = vector.broadcast %246 : vector<8x1xf32> to vector<8x32xf32>
    %255 = arith.subf %238, %254 : vector<8x32xf32>
    %cst_104 = arith.constant 1.000000e-03 : f32
    %256 = vector.broadcast %cst_104 : f32 to vector<8x1xf32>
    %257 = arith.addf %253, %256 : vector<8x1xf32>
    %258 = math.rsqrt %257 : vector<8x1xf32>
    %259 = vector.broadcast %258 : vector<8x1xf32> to vector<8x32xf32>
    %260 = arith.mulf %255, %259 : vector<8x32xf32>
    %261 = vector.broadcast %240 : vector<1x32xf32> to vector<8x32xf32>
    %262 = arith.mulf %260, %261 : vector<8x32xf32>
    %263 = vector.broadcast %242 : vector<1x32xf32> to vector<8x32xf32>
    %264 = arith.addf %262, %263 : vector<8x32xf32>
    %c1_105 = arith.constant 1 : index
    %c0_106 = arith.constant 0 : index
    %c0_107 = arith.constant 0 : index
    %265 = vector.load %arg7[%c1_105, %c0_106, %c0_107] : memref<2x32x64xf32, #tpu.memory_space<vmem>>, vector<1x32x64xf32>
    %266 = vector.shape_cast %265 : vector<1x32x64xf32> to vector<32x64xf32>
    %cst_108 = arith.constant dense<0.000000e+00> : vector<8x64xf32>
    %267 = tpu.matmul %264, %266, %cst_108 {dimension_numbers = #tpu.dot_dimension_numbers<[1], [0], [0], [1], [0, 0, 1, 1], [], []>} : vector<8x32xf32>, vector<32x64xf32>, vector<8x64xf32> -> vector<8x64xf32>
    %c1_109 = arith.constant 1 : index
    %c0_110 = arith.constant 0 : index
    %c0_111 = arith.constant 0 : index
    %268 = vector.load %arg8[%c1_109, %c0_110, %c0_111] : memref<2x1x64xf32, #tpu.memory_space<vmem>>, vector<1x1x64xf32>
    %269 = vector.shape_cast %268 : vector<1x1x64xf32> to vector<1x64xf32>
    %270 = vector.broadcast %269 : vector<1x64xf32> to vector<8x64xf32>
    %271 = arith.addf %267, %270 : vector<8x64xf32>
    %cst_112 = arith.constant 0.000000e+00 : f32
    %272 = vector.broadcast %cst_112 : f32 to vector<8x64xf32>
    %273 = arith.maximumf %271, %272 : vector<8x64xf32>
    %c1_113 = arith.constant 1 : index
    %c0_114 = arith.constant 0 : index
    %c0_115 = arith.constant 0 : index
    %274 = vector.load %arg9[%c1_113, %c0_114, %c0_115] : memref<2x64x32xf32, #tpu.memory_space<vmem>>, vector<1x64x32xf32>
    %275 = vector.shape_cast %274 : vector<1x64x32xf32> to vector<64x32xf32>
    %cst_116 = arith.constant dense<0.000000e+00> : vector<8x32xf32>
    %276 = tpu.matmul %273, %275, %cst_116 {dimension_numbers = #tpu.dot_dimension_numbers<[1], [0], [0], [1], [0, 0, 1, 1], [], []>} : vector<8x64xf32>, vector<64x32xf32>, vector<8x32xf32> -> vector<8x32xf32>
    %c1_117 = arith.constant 1 : index
    %c0_118 = arith.constant 0 : index
    %c0_119 = arith.constant 0 : index
    %277 = vector.load %arg10[%c1_117, %c0_118, %c0_119] : memref<2x1x32xf32, #tpu.memory_space<vmem>>, vector<1x1x32xf32>
    %278 = vector.shape_cast %277 : vector<1x1x32xf32> to vector<1x32xf32>
    %279 = vector.broadcast %278 : vector<1x32xf32> to vector<8x32xf32>
    %280 = arith.addf %276, %279 : vector<8x32xf32>
    %281 = arith.addf %238, %280 : vector<8x32xf32>
    %c0_120 = arith.constant 0 : index
    %c0_121 = arith.constant 0 : index
    %282 = vector.load %arg11[%c0_120, %c0_121] : memref<1x32xf32, #tpu.memory_space<vmem>>, vector<1x32xf32>
    %c0_122 = arith.constant 0 : index
    %c0_123 = arith.constant 0 : index
    %283 = vector.load %arg12[%c0_122, %c0_123] : memref<1x32xf32, #tpu.memory_space<vmem>>, vector<1x32xf32>
    %cst_124 = arith.constant dense<0.000000e+00> : vector<8xf32>
    %284 = vector.multi_reduction <add>, %281, %cst_124 [1] : vector<8x32xf32> to vector<8xf32>
    %285 = vector.shape_cast %284 : vector<8xf32> to vector<8x1xf32>
    %cst_125 = arith.constant 3.200000e+01 : f32
    %286 = vector.broadcast %cst_125 : f32 to vector<8x1xf32>
    %287 = arith.divf %285, %286 : vector<8x1xf32>
    %288 = vector.broadcast %287 : vector<8x1xf32> to vector<8x32xf32>
    %289 = arith.subf %281, %288 : vector<8x32xf32>
    %290 = arith.mulf %289, %289 : vector<8x32xf32>
    %cst_126 = arith.constant dense<0.000000e+00> : vector<8xf32>
    %291 = vector.multi_reduction <add>, %290, %cst_126 [1] : vector<8x32xf32> to vector<8xf32>
    %292 = vector.shape_cast %291 : vector<8xf32> to vector<8x1xf32>
    %cst_127 = arith.constant 0.0322580636 : f32
    %293 = vector.broadcast %cst_127 : f32 to vector<8x1xf32>
    %294 = arith.mulf %292, %293 : vector<8x1xf32>
    %295 = vector.broadcast %287 : vector<8x1xf32> to vector<8x32xf32>
    %296 = arith.subf %281, %295 : vector<8x32xf32>
    %cst_128 = arith.constant 1.000000e-03 : f32
    %297 = vector.broadcast %cst_128 : f32 to vector<8x1xf32>
    %298 = arith.addf %294, %297 : vector<8x1xf32>
    %299 = math.rsqrt %298 : vector<8x1xf32>
    %300 = vector.broadcast %299 : vector<8x1xf32> to vector<8x32xf32>
    %301 = arith.mulf %296, %300 : vector<8x32xf32>
    %302 = vector.broadcast %282 : vector<1x32xf32> to vector<8x32xf32>
    %303 = arith.mulf %301, %302 : vector<8x32xf32>
    %304 = vector.broadcast %283 : vector<1x32xf32> to vector<8x32xf32>
    %305 = arith.addf %303, %304 : vector<8x32xf32>
    %c0_129 = arith.constant 0 : index
    %c0_130 = arith.constant 0 : index
    %c0_131 = arith.constant 0 : index
    %306 = vector.load %arg13[%c0_129, %c0_130, %c0_131] : memref<1x8x32xf32, #tpu.memory_space<vmem>>, vector<1x8x32xf32>
    %307 = vector.shape_cast %306 : vector<1x8x32xf32> to vector<8x32xf32>
    %308 = vector.shape_cast %305 : vector<8x32xf32> to vector<1x8x32xf32>
    tpu.vector_store %arg13[%c0_129, %c0_130, %c0_131], %308 {strides = array<i32>} : memref<1x8x32xf32, #tpu.memory_space<vmem>>, vector<1x8x32xf32>,
    return
  }
  func.func @transform_0(%arg0: i32) -> (i32, i32, i32) {
    %c0_i32 = arith.constant 0 : i32
    %c0_i32_0 = arith.constant 0 : i32
    %c0_i32_1 = arith.constant 0 : i32
    return %arg0, %c0_i32, %c0_i32_0 : i32, i32, i32
  }
  func.func @transform_1(%arg0: i32) -> (i32, i32, i32) {
    %c0_i32 = arith.constant 0 : i32
    %c0_i32_0 = arith.constant 0 : i32
    %c0_i32_1 = arith.constant 0 : i32
    return %arg0, %c0_i32, %c0_i32_0 : i32, i32, i32
  }
  func.func @transform_2(%arg0: i32) -> (i32, i32, i32) {
    %c0_i32 = arith.constant 0 : i32
    %c0_i32_0 = arith.constant 0 : i32
    %c0_i32_1 = arith.constant 0 : i32
    %c0_i32_2 = arith.constant 0 : i32
    return %c0_i32, %c0_i32_0, %c0_i32_1 : i32, i32, i32
  }
  func.func @transform_3(%arg0: i32) -> (i32, i32, i32) {
    %c0_i32 = arith.constant 0 : i32
    %c0_i32_0 = arith.constant 0 : i32
    %c0_i32_1 = arith.constant 0 : i32
    %c0_i32_2 = arith.constant 0 : i32
    return %c0_i32, %c0_i32_0, %c0_i32_1 : i32, i32, i32
  }
  func.func @transform_4(%arg0: i32) -> (i32, i32, i32) {
    %c0_i32 = arith.constant 0 : i32
    %c0_i32_0 = arith.constant 0 : i32
    %c0_i32_1 = arith.constant 0 : i32
    %c0_i32_2 = arith.constant 0 : i32
    return %c0_i32, %c0_i32_0, %c0_i32_1 : i32, i32, i32
  }
  func.func @transform_5(%arg0: i32) -> (i32, i32, i32) {
    %c0_i32 = arith.constant 0 : i32
    %c0_i32_0 = arith.constant 0 : i32
    %c0_i32_1 = arith.constant 0 : i32
    %c0_i32_2 = arith.constant 0 : i32
    return %c0_i32, %c0_i32_0, %c0_i32_1 : i32, i32, i32
  }
  func.func @transform_6(%arg0: i32) -> (i32, i32, i32) {
    %c0_i32 = arith.constant 0 : i32
    %c0_i32_0 = arith.constant 0 : i32
    %c0_i32_1 = arith.constant 0 : i32
    %c0_i32_2 = arith.constant 0 : i32
    return %c0_i32, %c0_i32_0, %c0_i32_1 : i32, i32, i32
  }
  func.func @transform_7(%arg0: i32) -> (i32, i32, i32) {
    %c0_i32 = arith.constant 0 : i32
    %c0_i32_0 = arith.constant 0 : i32
    %c0_i32_1 = arith.constant 0 : i32
    %c0_i32_2 = arith.constant 0 : i32
    return %c0_i32, %c0_i32_0, %c0_i32_1 : i32, i32, i32
  }
  func.func @transform_8(%arg0: i32) -> (i32, i32, i32) {
    %c0_i32 = arith.constant 0 : i32
    %c0_i32_0 = arith.constant 0 : i32
    %c0_i32_1 = arith.constant 0 : i32
    %c0_i32_2 = arith.constant 0 : i32
    return %c0_i32, %c0_i32_0, %c0_i32_1 : i32, i32, i32
  }
  func.func @transform_9(%arg0: i32) -> (i32, i32, i32) {
    %c0_i32 = arith.constant 0 : i32
    %c0_i32_0 = arith.constant 0 : i32
    %c0_i32_1 = arith.constant 0 : i32
    %c0_i32_2 = arith.constant 0 : i32
    return %c0_i32, %c0_i32_0, %c0_i32_1 : i32, i32, i32
  }
  func.func @transform_10(%arg0: i32) -> (i32, i32) {
    %c0_i32 = arith.constant 0 : i32
    %c0_i32_0 = arith.constant 0 : i32
    %c0_i32_1 = arith.constant 0 : i32
    return %c0_i32, %c0_i32_0 : i32, i32
  }
  func.func @transform_11(%arg0: i32) -> (i32, i32) {
    %c0_i32 = arith.constant 0 : i32
    %c0_i32_0 = arith.constant 0 : i32
    %c0_i32_1 = arith.constant 0 : i32
    return %c0_i32, %c0_i32_0 : i32, i32
  }
  func.func @transform_12(%arg0: i32) -> (i32, i32, i32) {
    %c0_i32 = arith.constant 0 : i32
    %c0_i32_0 = arith.constant 0 : i32
    %c0_i32_1 = arith.constant 0 : i32
    return %arg0, %c0_i32, %c0_i32_0 : i32, i32, i32
  }
}

</mosaic_0001>

<llo_original>
// kernel: tpu_custom_call.1
$region0: #{tpu_custom_call.1}
  #allocation0 [shape = 'u32[]', space=smem, size = 0x4, offset = 0x4, fixed_abs, tag = 'smem constant byte address 0x4 - core index']
  #allocation1 [shape = 'u32[144,128]{1,0:T(1,128)}', space=vmem, size = 0x12000, scoped, tag = 'internal scratch']
  %s0 = inlined_call_operand.hbm [shape: f32[2,8,32], index: 0, kind: input, shape index: {}]
  %s1 = inlined_call_operand.hbm [shape: f32[2,8,8], index: 1, kind: input, shape index: {}]
  %s2 = inlined_call_operand.vmem [shape: f32[2,32,96], index: 2, kind: input, shape index: {}]
  %s3 = inlined_call_operand.vmem [shape: f32[2,32,32], index: 3, kind: input, shape index: {}]
  %s4 = inlined_call_operand.vmem [shape: f32[2,1,32], index: 4, kind: input, shape index: {}]
  %s5 = inlined_call_operand.vmem [shape: f32[2,1,32], index: 5, kind: input, shape index: {}]
  %s6 = inlined_call_operand.vmem [shape: f32[2,32,64], index: 6, kind: input, shape index: {}]
  %s7 = inlined_call_operand.vmem [shape: f32[2,1,64], index: 7, kind: input, shape index: {}]
  %s8 = inlined_call_operand.vmem [shape: f32[2,64,32], index: 8, kind: input, shape index: {}]
  %s9 = inlined_call_operand.vmem [shape: f32[2,1,32], index: 9, kind: input, shape index: {}]
  %s10 = inlined_call_operand.vmem [shape: f32[1,32], index: 10, kind: input, shape index: {}]
  %s11 = inlined_call_operand.vmem [shape: f32[1,32], index: 11, kind: input, shape index: {}]
  %s12 = inlined_call_operand.hbm [shape: f32[2,8,32], index: 12, kind: output, shape index: {}]
  %s13 = sld [smem:[#allocation0]]
  $region89: #{tpu_custom_call.1} parent=0
    _
  %s15 = ssub.s32 1, %s13
  %s16 = scalar_select 0, %s15, %s13
  $region1: #{tpu_custom_call.1} parent=0
    #allocation2 [shape = 'u8[8192]{0}', space=vmem, size = 0x2000, scoped, tag = 'input window, operand 0']
    #allocation3 [shape = 's32[2]{0}', space=sflag, size = 0x8, scoped, tag = 'scoped memory for tpu_custom_call.1']
    #allocation4 [shape = 's32[2]{0}', space=sflag, size = 0x8, scoped, tag = 'scoped memory for tpu_custom_call.1']
    #allocation5 [shape = 'u8[8192]{0}', space=vmem, size = 0x2000, scoped, tag = 'input window, operand 1']
    #allocation6 [shape = 's32[2]{0}', space=sflag, size = 0x8, scoped, tag = 'scoped memory for tpu_custom_call.1']
    #allocation7 [shape = 'u8[8192]{0}', space=vmem, size = 0x2000, scoped, tag = 'output window, operand 0']
    %17 = vsyncpa [#allocation3], 0
    %s18 = scalar_lea.sflag [#allocation3], 1
    %19 = vsyncpa %s18, 0
    %20 = vsyncpa [#allocation6], 0
    %s21 = scalar_lea.sflag [#allocation6], 1
    %22 = vsyncpa %s21, 0
    %23 = vsyncpa [#allocation4], 0
    %s24 = scalar_lea.sflag [#allocation4], 1
    %25 = vsyncpa %s24, 0
    loop: start=0, step=1, limit=4
    $region2: #{tpu_custom_call.1} parent=1 // loop_pre_header
      _
    $region3: #{tpu_custom_call.1} parent=1 // loop_header
      %s27 = sphi 0, %s31
      %p28 = scmp.ge.s32.totalorder %s27, 4
      %s37 = sphi 0, %s39
      %s40 = sphi 0, %s37
      %s41 = sphi 0, %s40
      %s57 = sphi 0, %s41
      %s63 = sphi 0, %s65
      %s66 = sphi 0, %s63
      %s67 = sphi 0, %s66
      %s83 = sphi 0, %s67
      %s87 = sphi 0, %s87
      %s89 = sphi 0, %s87
      %s90 = sphi 0, %s89
      %s104 = sphi 0, %s90
      %s108 = sphi 0, %s108
      %s110 = sphi 0, %s108
      %s111 = sphi 0, %s110
      %s125 = sphi 0, %s111
      %s129 = sphi 0, %s129
      %s131 = sphi 0, %s129
      %s132 = sphi 0, %s131
      %s146 = sphi 0, %s132
      %s150 = sphi 0, %s150
      %s152 = sphi 0, %s150
      %s153 = sphi 0, %s152
      %s167 = sphi 0, %s153
      %s171 = sphi 0, %s171
      %s173 = sphi 0, %s171
      %s174 = sphi 0, %s173
      %s188 = sphi 0, %s174
      %s192 = sphi 0, %s192
      %s194 = sphi 0, %s192
      %s195 = sphi 0, %s194
      %s209 = sphi 0, %s195
      %s213 = sphi 0, %s213
      %s215 = sphi 0, %s213
      %s216 = sphi 0, %s215
      %s230 = sphi 0, %s216
      %s234 = sphi 0, %s234
      %s236 = sphi 0, %s234
      %s237 = sphi 0, %s236
      %s251 = sphi 0, %s237
      %s255 = sphi 0, %s255
      %s257 = sphi 0, %s255
      %s258 = sphi 0, %s257
      %s272 = sphi 0, %s258
      %s276 = sphi 0, %s276
      %s278 = sphi 0, %s276
      %s279 = sphi 0, %s278
      %s293 = sphi 0, %s279
      %s299 = sphi 0, %s301
      %s302 = sphi 0, %s299
      %s303 = sphi 0, %s302
      %s319 = sphi 0, %s303
    $region4: #{tpu_custom_call.1} parent=1 // loop_header_branch
      %30 = sbr.rel (%p28) target = $region8
    $region5: #{tpu_custom_call.1} parent=1 // loop_body
      %s32 = ssub.s32 %s27, 1
      %s33 = ssub.s32 %s27, 2
      %s34 = sadd.s32 %s27, 1
      %s35 = ssub.s32 %s27, %s34
      %p36 = scmp.eq.s32.totalorder %s35, 0
      %s38 = sadd.s32 %s37, 1
      %s39 = scalar_select %p36, %s37, %s38
      %p42 = pneg %p36
      %p43 = scmp.eq.s32.totalorder %s27, 1
      %p44 = por %p42, %p43
      %p45 = scmp.ne.s32.totalorder %s37, %s40
      %p46 = scmp.eq.s32.totalorder %s27, 0
      %p47 = por %p45, %p46
      %p48 = scmp.ne.s32.totalorder %s37, %s40
      %p49 = scmp.eq.s32.totalorder %s32, 1
      %p50 = por %p48, %p49
      %p51 = scmp.ne.s32.totalorder %s40, %s41
      %p52 = scmp.eq.s32.totalorder %s32, 0
      %p53 = por %p51, %p52
      %p54 = scmp.ne.s32.totalorder %s40, %s41
      %p55 = scmp.eq.s32.totalorder %s33, 1
      %p56 = por %p54, %p55
      %p58 = scmp.ne.s32.totalorder %s41, %s57
      %p59 = scmp.eq.s32.totalorder %s33, 0
      %p60 = por %p58, %p59
      %s61 = ssub.s32 %s27, %s34
      %p62 = scmp.eq.s32.totalorder %s61, 0
      %s64 = sadd.s32 %s63, 1
      %s65 = scalar_select %p62, %s63, %s64
      %p68 = pneg %p62
      %p69 = scmp.eq.s32.totalorder %s27, 1
      %p70 = por %p68, %p69
      %p71 = scmp.ne.s32.totalorder %s63, %s66
      %p72 = scmp.eq.s32.totalorder %s27, 0
      %p73 = por %p71, %p72
      %p74 = scmp.ne.s32.totalorder %s63, %s66
      %p75 = scmp.eq.s32.totalorder %s32, 1
      %p76 = por %p74, %p75
      %p77 = scmp.ne.s32.totalorder %s66, %s67
      %p78 = scmp.eq.s32.totalorder %s32, 0
      %p79 = por %p77, %p78
      %p80 = scmp.ne.s32.totalorder %s66, %s67
      %p81 = scmp.eq.s32.totalorder %s33, 1
      %p82 = por %p80, %p81
      %p84 = scmp.ne.s32.totalorder %s67, %s83
      %p85 = scmp.eq.s32.totalorder %s33, 0
      %p86 = por %p84, %p85
      %s88 = sadd.s32 %s87, 1
      %p91 = scmp.eq.s32.totalorder %s27, 1
      %p92 = scmp.ne.s32.totalorder %s87, %s89
      %p93 = scmp.eq.s32.totalorder %s27, 0
      %p94 = por %p92, %p93
      %p95 = scmp.ne.s32.totalorder %s87, %s89
      %p96 = scmp.eq.s32.totalorder %s32, 1
      %p97 = por %p95, %p96
      %p98 = scmp.ne.s32.totalorder %s89, %s90
      %p99 = scmp.eq.s32.totalorder %s32, 0
      %p100 = por %p98, %p99
      %p101 = scmp.ne.s32.totalorder %s89, %s90
      %p102 = scmp.eq.s32.totalorder %s33, 1
      %p103 = por %p101, %p102
      %p105 = scmp.ne.s32.totalorder %s90, %s104
      %p106 = scmp.eq.s32.totalorder %s33, 0
      %p107 = por %p105, %p106
      %s109 = sadd.s32 %s108, 1
      %p112 = scmp.eq.s32.totalorder %s27, 1
      %p113 = scmp.ne.s32.totalorder %s108, %s110
      %p114 = scmp.eq.s32.totalorder %s27, 0
      %p115 = por %p113, %p114
      %p116 = scmp.ne.s32.totalorder %s108, %s110
      %p117 = scmp.eq.s32.totalorder %s32, 1
      %p118 = por %p116, %p117
      %p119 = scmp.ne.s32.totalorder %s110, %s111
      %p120 = scmp.eq.s32.totalorder %s32, 0
      %p121 = por %p119, %p120
      %p122 = scmp.ne.s32.totalorder %s110, %s111
      %p123 = scmp.eq.s32.totalorder %s33, 1
      %p124 = por %p122, %p123
      %p126 = scmp.ne.s32.totalorder %s111, %s125
      %p127 = scmp.eq.s32.totalorder %s33, 0
      %p128 = por %p126, %p127
      %s130 = sadd.s32 %s129, 1
      %p133 = scmp.eq.s32.totalorder %s27, 1
      %p134 = scmp.ne.s32.totalorder %s129, %s131
      %p135 = scmp.eq.s32.totalorder %s27, 0
      %p136 = por %p134, %p135
      %p137 = scmp.ne.s32.totalorder %s129, %s131
      %p138 = scmp.eq.s32.totalorder %s32, 1
      %p139 = por %p137, %p138
      %p140 = scmp.ne.s32.totalorder %s131, %s132
      %p141 = scmp.eq.s32.totalorder %s32, 0
      %p142 = por %p140, %p141
      %p143 = scmp.ne.s32.totalorder %s131, %s132
      %p144 = scmp.eq.s32.totalorder %s33, 1
      %p145 = por %p143, %p144
      %p147 = scmp.ne.s32.totalorder %s132, %s146
      %p148 = scmp.eq.s32.totalorder %s33, 0
      %p149 = por %p147, %p148
      %s151 = sadd.s32 %s150, 1
      %p154 = scmp.eq.s32.totalorder %s27, 1
      %p155 = scmp.ne.s32.totalorder %s150, %s152
      %p156 = scmp.eq.s32.totalorder %s27, 0
      %p157 = por %p155, %p156
      %p158 = scmp.ne.s32.totalorder %s150, %s152
      %p159 = scmp.eq.s32.totalorder %s32, 1
      %p160 = por %p158, %p159
      %p161 = scmp.ne.s32.totalorder %s152, %s153
      %p162 = scmp.eq.s32.totalorder %s32, 0
      %p163 = por %p161, %p162
      %p164 = scmp.ne.s32.totalorder %s152, %s153
      %p165 = scmp.eq.s32.totalorder %s33, 1
      %p166 = por %p164, %p165
      %p168 = scmp.ne.s32.totalorder %s153, %s167
      %p169 = scmp.eq.s32.totalorder %s33, 0
      %p170 = por %p168, %p169
      %s172 = sadd.s32 %s171, 1
      %p175 = scmp.eq.s32.totalorder %s27, 1
      %p176 = scmp.ne.s32.totalorder %s171, %s173
      %p177 = scmp.eq.s32.totalorder %s27, 0
      %p178 = por %p176, %p177
      %p179 = scmp.ne.s32.totalorder %s171, %s173
      %p180 = scmp.eq.s32.totalorder %s32, 1
      %p181 = por %p179, %p180
      %p182 = scmp.ne.s32.totalorder %s173, %s174
      %p183 = scmp.eq.s32.totalorder %s32, 0
      %p184 = por %p182, %p183
      %p185 = scmp.ne.s32.totalorder %s173, %s174
      %p186 = scmp.eq.s32.totalorder %s33, 1
      %p187 = por %p185, %p186
      %p189 = scmp.ne.s32.totalorder %s174, %s188
      %p190 = scmp.eq.s32.totalorder %s33, 0
      %p191 = por %p189, %p190
      %s193 = sadd.s32 %s192, 1
      %p196 = scmp.eq.s32.totalorder %s27, 1
      %p197 = scmp.ne.s32.totalorder %s192, %s194
      %p198 = scmp.eq.s32.totalorder %s27, 0
      %p199 = por %p197, %p198
      %p200 = scmp.ne.s32.totalorder %s192, %s194
      %p201 = scmp.eq.s32.totalorder %s32, 1
      %p202 = por %p200, %p201
      %p203 = scmp.ne.s32.totalorder %s194, %s195
      %p204 = scmp.eq.s32.totalorder %s32, 0
      %p205 = por %p203, %p204
      %p206 = scmp.ne.s32.totalorder %s194, %s195
      %p207 = scmp.eq.s32.totalorder %s33, 1
      %p208 = por %p206, %p207
      %p210 = scmp.ne.s32.totalorder %s195, %s209
      %p211 = scmp.eq.s32.totalorder %s33, 0
      %p212 = por %p210, %p211
      %s214 = sadd.s32 %s213, 1
      %p217 = scmp.eq.s32.totalorder %s27, 1
      %p218 = scmp.ne.s32.totalorder %s213, %s215
      %p219 = scmp.eq.s32.totalorder %s27, 0
      %p220 = por %p218, %p219
      %p221 = scmp.ne.s32.totalorder %s213, %s215
      %p222 = scmp.eq.s32.totalorder %s32, 1
      %p223 = por %p221, %p222
      %p224 = scmp.ne.s32.totalorder %s215, %s216
      %p225 = scmp.eq.s32.totalorder %s32, 0
      %p226 = por %p224, %p225
      %p227 = scmp.ne.s32.totalorder %s215, %s216
      %p228 = scmp.eq.s32.totalorder %s33, 1
      %p229 = por %p227, %p228
      %p231 = scmp.ne.s32.totalorder %s216, %s230
      %p232 = scmp.eq.s32.totalorder %s33, 0
      %p233 = por %p231, %p232
      %s235 = sadd.s32 %s234, 1
      %p238 = scmp.eq.s32.totalorder %s27, 1
      %p239 = scmp.ne.s32.totalorder %s234, %s236
      %p240 = scmp.eq.s32.totalorder %s27, 0
      %p241 = por %p239, %p240
      %p242 = scmp.ne.s32.totalorder %s234, %s236
      %p243 = scmp.eq.s32.totalorder %s32, 1
      %p244 = por %p242, %p243
      %p245 = scmp.ne.s32.totalorder %s236, %s237
      %p246 = scmp.eq.s32.totalorder %s32, 0
      %p247 = por %p245, %p246
      %p248 = scmp.ne.s32.totalorder %s236, %s237
      %p249 = scmp.eq.s32.totalorder %s33, 1
      %p250 = por %p248, %p249
      %p252 = scmp.ne.s32.totalorder %s237, %s251
      %p253 = scmp.eq.s32.totalorder %s33, 0
      %p254 = por %p252, %p253
      %s256 = sadd.s32 %s255, 1
      %p259 = scmp.eq.s32.totalorder %s27, 1
      %p260 = scmp.ne.s32.totalorder %s255, %s257
      %p261 = scmp.eq.s32.totalorder %s27, 0
      %p262 = por %p260, %p261
      %p263 = scmp.ne.s32.totalorder %s255, %s257
      %p264 = scmp.eq.s32.totalorder %s32, 1
      %p265 = por %p263, %p264
      %p266 = scmp.ne.s32.totalorder %s257, %s258
      %p267 = scmp.eq.s32.totalorder %s32, 0
      %p268 = por %p266, %p267
      %p269 = scmp.ne.s32.totalorder %s257, %s258
      %p270 = scmp.eq.s32.totalorder %s33, 1
      %p271 = por %p269, %p270
      %p273 = scmp.ne.s32.totalorder %s258, %s272
      %p274 = scmp.eq.s32.totalorder %s33, 0
      %p275 = por %p273, %p274
      %s277 = sadd.s32 %s276, 1
      %p280 = scmp.eq.s32.totalorder %s27, 1
      %p281 = scmp.ne.s32.totalorder %s276, %s278
      %p282 = scmp.eq.s32.totalorder %s27, 0
      %p283 = por %p281, %p282
      %p284 = scmp.ne.s32.totalorder %s276, %s278
      %p285 = scmp.eq.s32.totalorder %s32, 1
      %p286 = por %p284, %p285
      %p287 = scmp.ne.s32.totalorder %s278, %s279
      %p288 = scmp.eq.s32.totalorder %s32, 0
      %p289 = por %p287, %p288
      %p290 = scmp.ne.s32.totalorder %s278, %s279
      %p291 = scmp.eq.s32.totalorder %s33, 1
      %p292 = por %p290, %p291
      %p294 = scmp.ne.s32.totalorder %s279, %s293
      %p295 = scmp.eq.s32.totalorder %s33, 0
      %p296 = por %p294, %p295
      %s297 = ssub.s32 %s27, %s34
      %p298 = scmp.eq.s32.totalorder %s297, 0
      %s300 = sadd.s32 %s299, 1
      %s301 = scalar_select %p298, %s299, %s300
      %p304 = pneg %p298
      %p305 = scmp.eq.s32.totalorder %s27, 1
      %p306 = por %p304, %p305
      %p307 = scmp.ne.s32.totalorder %s299, %s302
      %p308 = scmp.eq.s32.totalorder %s27, 0
      %p309 = por %p307, %p308
      %p310 = scmp.ne.s32.totalorder %s299, %s302
      %p311 = scmp.eq.s32.totalorder %s32, 1
      %p312 = por %p310, %p311
      %p313 = scmp.ne.s32.totalorder %s302, %s303
      %p314 = scmp.eq.s32.totalorder %s32, 0
      %p315 = por %p313, %p314
      %p316 = scmp.ne.s32.totalorder %s302, %s303
      %p317 = scmp.eq.s32.totalorder %s33, 1
      %p318 = por %p316, %p317
      %p320 = scmp.ne.s32.totalorder %s303, %s319
      %p321 = scmp.eq.s32.totalorder %s33, 0
      %p322 = por %p320, %p321
      %p323 = scmp.le.s32.totalorder 1, %s27
      %p324 = scmp.lt.s32.totalorder %s27, 3
      %p325 = pnand %p323, %p324
      %p326 = pneg %p325
      // Predicated region
      $region9: #{tpu_custom_call.1} parent=5 // pred_check
        _
      $region10: #{tpu_custom_call.1} parent=5 // pred_check_branch
        %328 = sbr.rel (%p325) target = $region12
      $region11: #{tpu_custom_call.1} parent=5 // pred_region
        %s329 = ssub.s32 %s27, 1
        // Predicated region
        $region13: #{tpu_custom_call.1} parent=11 // pred_check
          %p330 = pneg %p100
        $region14: #{tpu_custom_call.1} parent=11 // pred_check_branch
          %332 = sbr.rel (%p330) target = $region16
        $region15: #{tpu_custom_call.1} parent=11 // pred_region
          _
        $region16: #{tpu_custom_call.1} parent=11 // pred_fallthru
          _
        // Predicated region
        $region17: #{tpu_custom_call.1} parent=11 // pred_check
          %p333 = pneg %p121
        $region18: #{tpu_custom_call.1} parent=11 // pred_check_branch
          %335 = sbr.rel (%p333) target = $region20
        $region19: #{tpu_custom_call.1} parent=11 // pred_region
          _
        $region20: #{tpu_custom_call.1} parent=11 // pred_fallthru
          _
        // Predicated region
        $region21: #{tpu_custom_call.1} parent=11 // pred_check
          %p336 = pneg %p142
        $region22: #{tpu_custom_call.1} parent=11 // pred_check_branch
          %338 = sbr.rel (%p336) target = $region24
        $region23: #{tpu_custom_call.1} parent=11 // pred_region
          _
        $region24: #{tpu_custom_call.1} parent=11 // pred_fallthru
          _
        // Predicated region
        $region25: #{tpu_custom_call.1} parent=11 // pred_check
          %p339 = pneg %p163
        $region26: #{tpu_custom_call.1} parent=11 // pred_check_branch
          %341 = sbr.rel (%p339) target = $region28
        $region27: #{tpu_custom_call.1} parent=11 // pred_region
          _
        $region28: #{tpu_custom_call.1} parent=11 // pred_fallthru
          _
        // Predicated region
        $region29: #{tpu_custom_call.1} parent=11 // pred_check
          %p342 = pneg %p184
        $region30: #{tpu_custom_call.1} parent=11 // pred_check_branch
          %344 = sbr.rel (%p342) target = $region32
        $region31: #{tpu_custom_call.1} parent=11 // pred_region
          _
        $region32: #{tpu_custom_call.1} parent=11 // pred_fallthru
          _
        // Predicated region
        $region33: #{tpu_custom_call.1} parent=11 // pred_check
          %p345 = pneg %p205
        $region34: #{tpu_custom_call.1} parent=11 // pred_check_branch
          %347 = sbr.rel (%p345) target = $region36
        $region35: #{tpu_custom_call.1} parent=11 // pred_region
          _
        $region36: #{tpu_custom_call.1} parent=11 // pred_fallthru
          _
        // Predicated region
        $region37: #{tpu_custom_call.1} parent=11 // pred_check
          %p348 = pneg %p226
        $region38: #{tpu_custom_call.1} parent=11 // pred_check_branch
          %350 = sbr.rel (%p348) target = $region40
        $region39: #{tpu_custom_call.1} parent=11 // pred_region
          _
        $region40: #{tpu_custom_call.1} parent=11 // pred_fallthru
          _
        // Predicated region
        $region41: #{tpu_custom_call.1} parent=11 // pred_check
          %p351 = pneg %p247
        $region42: #{tpu_custom_call.1} parent=11 // pred_check_branch
          %353 = sbr.rel (%p351) target = $region44
        $region43: #{tpu_custom_call.1} parent=11 // pred_region
          _
        $region44: #{tpu_custom_call.1} parent=11 // pred_fallthru
          _
        // Predicated region
        $region45: #{tpu_custom_call.1} parent=11 // pred_check
          %p354 = pneg %p268
        $region46: #{tpu_custom_call.1} parent=11 // pred_check_branch
          %356 = sbr.rel (%p354) target = $region48
        $region47: #{tpu_custom_call.1} parent=11 // pred_region
          _
        $region48: #{tpu_custom_call.1} parent=11 // pred_fallthru
          _
        // Predicated region
        $region49: #{tpu_custom_call.1} parent=11 // pred_check
          %p357 = pneg %p289
        $region50: #{tpu_custom_call.1} parent=11 // pred_check_branch
          %359 = sbr.rel (%p357) target = $region52
        $region51: #{tpu_custom_call.1} parent=11 // pred_region
          _
        $region52: #{tpu_custom_call.1} parent=11 // pred_fallthru
          _
      $region12: #{tpu_custom_call.1} parent=5 // pred_fallthru
        _
      %p360 = scmp.lt.s32.totalorder %s27, 2
      // Predicated region
      $region53: #{tpu_custom_call.1} parent=5 // pred_check
        %p361 = pneg %p360
      $region54: #{tpu_custom_call.1} parent=5 // pred_check_branch
        %363 = sbr.rel (%p361) target = $region56
      $region55: #{tpu_custom_call.1} parent=5 // pred_region
        // Predicated region
        $region57: #{tpu_custom_call.1} parent=55 // pred_check
          %p364 = pneg %p47
        $region58: #{tpu_custom_call.1} parent=55 // pred_check_branch
          %366 = sbr.rel (%p364) target = $region60
        $region59: #{tpu_custom_call.1} parent=55 // pred_region
          %s367 = sand.u32 %s37, 1
          %s368 = scalar_lea.sflag [#allocation3], %s367
          %s369 = sand.u32 %s37, 1
          %s370 = smul.addr %s369, 8
          %s371 = scalar_lea.vmem [#allocation2], %s370
          %s373 = ssub.s32 128, 128
          %374 = vsyncadd %s368, %s373
          %s375 = smul.addr %s27, 128
          %s376 = scalar_lea.hbm %s0, %s375
          %s378 = sshll.u32 %s371, 4
          %s379 = int_to_ptr.vmem [resolvable:$true] %s378
          %381 = dma.hbm_to_vmem [thread:$0]  %s376, 128, %s379, %s368
        $region60: #{tpu_custom_call.1} parent=55 // pred_fallthru
          _
        // Predicated region
        $region61: #{tpu_custom_call.1} parent=55 // pred_check
          %p382 = pneg %p73
        $region62: #{tpu_custom_call.1} parent=55 // pred_check_branch
          %384 = sbr.rel (%p382) target = $region64
        $region63: #{tpu_custom_call.1} parent=55 // pred_region
          %s385 = sand.u32 %s63, 1
          %s386 = scalar_lea.sflag [#allocation6], %s385
          %s387 = sand.u32 %s63, 1
          %s388 = smul.addr %s387, 8
          %s389 = scalar_lea.vmem [#allocation5], %s388
          %s391 = ssub.s32 128, 128
          %392 = vsyncadd %s386, %s391
          %s393 = smul.addr %s27, 128
          %s394 = scalar_lea.hbm %s1, %s393
          %s396 = sshll.u32 %s389, 4
          %s397 = int_to_ptr.vmem [resolvable:$true] %s396
          %399 = dma.hbm_to_vmem [thread:$0]  %s394, 128, %s397, %s386
        $region64: #{tpu_custom_call.1} parent=55 // pred_fallthru
          _
      $region56: #{tpu_custom_call.1} parent=5 // pred_fallthru
        _
      %p400 = scmp.le.s32.totalorder 1, %s27
      %p401 = scmp.lt.s32.totalorder %s27, 3
      %p402 = pnand %p400, %p401
      %p403 = pneg %p402
      // Predicated region
      $region65: #{tpu_custom_call.1} parent=5 // pred_check
        _
      $region66: #{tpu_custom_call.1} parent=5 // pred_check_branch
        %405 = sbr.rel (%p402) target = $region68
      $region67: #{tpu_custom_call.1} parent=5 // pred_region
        %s406 = ssub.s32 %s27, 1
        %s407 = sand.u32 %s40, 1
        %s408 = scalar_lea.sflag [#allocation3], %s407
        %s409 = sand.u32 %s40, 1
        %s410 = smul.addr %s409, 8
        %s411 = scalar_lea.vmem [#allocation2], %s410
        // Predicated region
        $region69: #{tpu_custom_call.1} parent=67 // pred_check
          %p412 = pneg %p53
        $region70: #{tpu_custom_call.1} parent=67 // pred_check_branch
          %414 = sbr.rel (%p412) target = $region72
        $region71: #{tpu_custom_call.1} parent=67 // pred_region
          %415 = dma.done %s408, 128
        $region72: #{tpu_custom_call.1} parent=67 // pred_fallthru
          _
        %s416 = sand.u32 %s66, 1
        %s417 = scalar_lea.sflag [#allocation6], %s416
        %s418 = sand.u32 %s66, 1
        %s419 = smul.addr %s418, 8
        %s420 = scalar_lea.vmem [#allocation5], %s419
        // Predicated region
        $region73: #{tpu_custom_call.1} parent=67 // pred_check
          %p421 = pneg %p79
        $region74: #{tpu_custom_call.1} parent=67 // pred_check_branch
          %423 = sbr.rel (%p421) target = $region76
        $region75: #{tpu_custom_call.1} parent=67 // pred_region
          %424 = dma.done %s417, 128
        $region76: #{tpu_custom_call.1} parent=67 // pred_fallthru
          _
        %s425 = sand.u32 %s40, 1
        %s426 = scalar_lea.sflag [#allocation3], %s425
        %s427 = sand.u32 %s40, 1
        %s428 = smul.addr %s427, 8
        %s429 = scalar_lea.vmem [#allocation2], %s428
        %p430 = pneg %p53
        %p431 = pneg %p50
        %s432 = sand.u32 %s66, 1
        %s433 = scalar_lea.sflag [#allocation6], %s432
        %s434 = sand.u32 %s66, 1
        %s435 = smul.addr %s434, 8
        %s436 = scalar_lea.vmem [#allocation5], %s435
        %p437 = pneg %p79
        %p438 = pneg %p76
        %p439 = pneg %p100
        %p440 = pneg %p97
        %p441 = pneg %p121
        %p442 = pneg %p118
        %p443 = pneg %p142
        %p444 = pneg %p139
        %p445 = pneg %p163
        %p446 = pneg %p160
        %p447 = pneg %p184
        %p448 = pneg %p181
        %p449 = pneg %p205
        %p450 = pneg %p202
        %p451 = pneg %p226
        %p452 = pneg %p223
        %p453 = pneg %p247
        %p454 = pneg %p244
        %p455 = pneg %p268
        %p456 = pneg %p265
        %p457 = pneg %p289
        %p458 = pneg %p286
        %p459 = pneg %p315
        %p460 = pneg %p312
        %s461 = sand.u32 %s302, 1
        %s462 = scalar_lea.sflag [#allocation4], %s461
        %s463 = sand.u32 %s302, 1
        %s464 = smul.addr %s463, 8
        %s465 = scalar_lea.vmem [#allocation7], %s464
        %v466 = vld [vmem:[%s411] sm:$0xff]
        %v467 = vld [vmem:[%s420] sm:$0xff]
        %v468 = vmul.f32 %v467, -1e+30
        %v469 = vld [vmem:[%s2] sm:$0xff]
        %v470 = vld [vmem:[%s2 + $0x8] sm:$0xff]
        %v471 = vld [vmem:[%s2 + $0x10] sm:$0xff]
        %v472 = vld [vmem:[%s2 + $0x18] sm:$0xff]
        %v473 = vld [vmem:[%s3] sm:$0xff]
        %v474 = vld [vmem:[%s3 + $0x8] sm:$0xff]
        %v475 = vld [vmem:[%s3 + $0x10] sm:$0xff]
        %v476 = vld [vmem:[%s3 + $0x18] sm:$0xff]
        %vm477 = vcmask 261120
        %v479 = vsel %vm477, %v466, 0
        %481 = vmatprep.subr.mxu0 0.0
        %482 = vmatpush1.msra.mxu0 %v469
        %483 = vmatprep.subr.mxu0 0.0
        %484 = vmatpush1.msra.mxu0 %v470
        %485 = vmatprep.subr.mxu0 0.0
        %486 = vmatpush1.msra.mxu0 %v471
        %487 = vmatprep.subr.mxu0 0.0
        %488 = vmatpush1.msra.mxu0 %v472
        %489 = vmatprep.subr.mxu0 0.0
        %490 = vmatpush1.msra.mxu0 0.0
        %491 = vmatprep.subr.mxu0 0.0
        %492 = vmatpush1.msra.mxu0 0.0
        %493 = vmatprep.subr.mxu0 0.0
        %494 = vmatpush1.msra.mxu0 0.0
        %495 = vmatprep.subr.mxu0 0.0
        %496 = vmatpush1.msra.mxu0 0.0
        %497 = vmatprep.subr.mxu0 0.0
        %498 = vmatpush1.msra.mxu0 0.0
        %499 = vmatprep.subr.mxu0 0.0
        %500 = vmatpush1.msra.mxu0 0.0
        %501 = vmatprep.subr.mxu0 0.0
        %502 = vmatpush1.msra.mxu0 0.0
        %503 = vmatprep.subr.mxu0 0.0
        %504 = vmatpush1.msra.mxu0 0.0
        %505 = vmatprep.subr.mxu0 0.0
        %506 = vmatpush1.msra.mxu0 0.0
        %507 = vmatprep.subr.mxu0 0.0
        %508 = vmatpush1.msra.mxu0 0.0
        %509 = vmatprep.subr.mxu0 0.0
        %510 = vmatpush1.msra.mxu0 0.0
        %511 = vmatprep.subr.mxu0 0.0
        %512 = vmatpush1.msra.mxu0 0.0
        %513 = vmatprep.subr.mxu0 0.0
        %514 = vmatpush1.msra.mxu0 0.0
        %515 = vmatprep.subr.mxu0 0.0
        %516 = vmatpush1.msra.mxu0 0.0
        %517 = vmatprep.subr.mxu0 0.0
        %518 = vmatpush1.msra.mxu0 0.0
        %519 = vmatprep.subr.mxu0 0.0
        %520 = vmatpush1.msra.mxu0 0.0
        %521 = vmatprep.subr.mxu0 0.0
        %522 = vmatpush1.msra.mxu0 0.0
        %523 = vmatprep.subr.mxu0 0.0
        %524 = vmatpush1.msra.mxu0 0.0
        %525 = vmatprep.subr.mxu0 0.0
        %526 = vmatpush1.msra.mxu0 0.0
        %527 = vmatprep.subr.mxu0 0.0
        %528 = vmatpush1.msra.mxu0 0.0
        %529 = vmatprep.subr.mxu0 0.0
        %530 = vmatpush1.msra.mxu0 0.0
        %531 = vmatprep.subr.mxu0 0.0
        %532 = vmatpush1.msra.mxu0 0.0
        %533 = vmatprep.subr.mxu0 0.0
        %534 = vmatpush1.msra.mxu0 0.0
        %535 = vmatprep.subr.mxu0 0.0
        %536 = vmatpush1.msra.mxu0 0.0
        %537 = vmatprep.subr.mxu0 0.0
        %538 = vmatpush1.msra.mxu0 0.0
        %539 = vmatprep.subr.mxu0 0.0
        %540 = vmatpush1.msra.mxu0 0.0
        %541 = vmatprep.subr.mxu0 0.0
        %542 = vmatpush1.msra.mxu0 0.0
        %543 = vmatprep.subr.mxu0 0.0
        %544 = vmatpush1.msra.mxu0 0.0
        %545 = vmatprep.mubr.f32.mxu0 0.0
        %546 = vmatmul.mubr.f32.gmra.mrb[0].mxu0 %v479
        %v547 = vpop.f32.mrb[0].mxu0
        %v548 = vadd.f32 0.0, %v547
        %v549 = vpop.f32.mrb[0].mxu0
        %550 = vdwg.mxu0
        %552 = vrot.lane.b32.xlu0 %v548, 96
        %v553 = vpop.permute.xlu0 %552
        %vm554 = vcmask 64512
        %v555 = vsel %vm554, %v548, 0
        %v557 = vsel %vm554, %v553, 0
        %559 = vmatprep.subr.mxu0 0.0
        %560 = vmatpush1.xpose.msra.mxu0 %v557
        %561 = vmatprep.subr.mxu0 0.0
        %562 = vmatpush1.xpose.msra.mxu0 0.0
        %563 = vmatprep.subr.mxu0 0.0
        %564 = vmatpush1.xpose.msra.mxu0 0.0
        %565 = vmatprep.subr.mxu0 0.0
        %566 = vmatpush1.xpose.msra.mxu0 0.0
        %567 = vmatprep.subr.mxu0 0.0
        %568 = vmatpush1.xpose.msra.mxu0 0.0
        %569 = vmatprep.subr.mxu0 0.0
        %570 = vmatpush1.xpose.msra.mxu0 0.0
        %571 = vmatprep.subr.mxu0 0.0
        %572 = vmatpush1.xpose.msra.mxu0 0.0
        %573 = vmatprep.subr.mxu0 0.0
        %574 = vmatpush1.xpose.msra.mxu0 0.0
        %575 = vmatprep.subr.mxu0 0.0
        %576 = vmatpush1.xpose.msra.mxu0 0.0
        %577 = vmatprep.subr.mxu0 0.0
        %578 = vmatpush1.xpose.msra.mxu0 0.0
        %579 = vmatprep.subr.mxu0 0.0
        %580 = vmatpush1.xpose.msra.mxu0 0.0
        %581 = vmatprep.subr.mxu0 0.0
        %582 = vmatpush1.xpose.msra.mxu0 0.0
        %583 = vmatprep.subr.mxu0 0.0
        %584 = vmatpush1.xpose.msra.mxu0 0.0
        %585 = vmatprep.subr.mxu0 0.0
        %586 = vmatpush1.xpose.msra.mxu0 0.0
        %587 = vmatprep.subr.mxu0 0.0
        %588 = vmatpush1.xpose.msra.mxu0 0.0
        %589 = vmatprep.subr.mxu0 0.0
        %590 = vmatpush1.xpose.msra.mxu0 0.0
        %591 = vmatprep.subr.mxu0 0.0
        %592 = vmatpush1.xpose.msra.mxu0 0.0
        %593 = vmatprep.subr.mxu0 0.0
        %594 = vmatpush1.xpose.msra.mxu0 0.0
        %595 = vmatprep.subr.mxu0 0.0
        %596 = vmatpush1.xpose.msra.mxu0 0.0
        %597 = vmatprep.subr.mxu0 0.0
        %598 = vmatpush1.xpose.msra.mxu0 0.0
        %599 = vmatprep.subr.mxu0 0.0
        %600 = vmatpush1.xpose.msra.mxu0 0.0
        %601 = vmatprep.subr.mxu0 0.0
        %602 = vmatpush1.xpose.msra.mxu0 0.0
        %603 = vmatprep.subr.mxu0 0.0
        %604 = vmatpush1.xpose.msra.mxu0 0.0
        %605 = vmatprep.subr.mxu0 0.0
        %606 = vmatpush1.xpose.msra.mxu0 0.0
        %607 = vmatprep.subr.mxu0 0.0
        %608 = vmatpush1.xpose.msra.mxu0 0.0
        %609 = vmatprep.subr.mxu0 0.0
        %610 = vmatpush1.xpose.msra.mxu0 0.0
        %611 = vmatprep.subr.mxu0 0.0
        %612 = vmatpush1.xpose.msra.mxu0 0.0
        %613 = vmatprep.subr.mxu0 0.0
        %614 = vmatpush1.xpose.msra.mxu0 0.0
        %615 = vmatprep.subr.mxu0 0.0
        %616 = vmatpush1.xpose.msra.mxu0 0.0
        %617 = vmatprep.subr.mxu0 0.0
        %618 = vmatpush1.xpose.msra.mxu0 0.0
        %619 = vmatprep.subr.mxu0 0.0
        %620 = vmatpush1.xpose.msra.mxu0 0.0
        %621 = vmatprep.subr.mxu0 0.0
        %622 = vmatpush1.xpose.msra.mxu0 0.0
        %623 = vmatprep.mubr.f32.mxu0 0.0
        %624 = vmatmul.mubr.f32.gmra.mrb[0].mxu0 %v555
        %v625 = vpop.f32.mrb[0].mxu0
        %v626 = vadd.f32 0.0, %v625
        %v627 = vpop.f32.mrb[0].mxu0
        %628 = vdwg.mxu0
        %v629 = vmul.f32 %v626, 0.35355338
        %v630 = vadd.f32 %v629, %v468
        %v631 = vsel %vm554, %v630, -inf
        %632 = vmax.xlane.f32.xlu0 %v631
        %v633 = vpop.xlane.xlu0 %632
        %v634 = vsub.f32 %v630, %v633
        %v635 = vmul.f32 %v634, 1.442695
        %v636 = vpow.pop %v635
        %v637 = vsel %vm554, %v636, 0.0
        %638 = vadd.xlane.f32.xlu0 %v637
        %v639 = vpop.xlane.xlu0 %638
        %v640 = vrcp.pop %v639
        %v641 = vmul.f32 %v636, %v640
        %642 = vrot.lane.b32.xlu0 %v548, 64
        %v643 = vpop.permute.xlu0 %642
        %v646 = vsel %vm554, %v641, 0
        %648 = vmatprep.subr.mxu0 0.0
        %649 = vmatpush1.msra.mxu0 %v643
        %650 = vmatprep.subr.mxu0 0.0
        %651 = vmatpush1.msra.mxu0 0.0
        %652 = vmatprep.subr.mxu0 0.0
        %653 = vmatpush1.msra.mxu0 0.0
        %654 = vmatprep.subr.mxu0 0.0
        %655 = vmatpush1.msra.mxu0 0.0
        %656 = vmatprep.subr.mxu0 0.0
        %657 = vmatpush1.msra.mxu0 0.0
        %658 = vmatprep.subr.mxu0 0.0
        %659 = vmatpush1.msra.mxu0 0.0
        %660 = vmatprep.subr.mxu0 0.0
        %661 = vmatpush1.msra.mxu0 0.0
        %662 = vmatprep.subr.mxu0 0.0
        %663 = vmatpush1.msra.mxu0 0.0
        %664 = vmatprep.subr.mxu0 0.0
        %665 = vmatpush1.msra.mxu0 0.0
        %666 = vmatprep.subr.mxu0 0.0
        %667 = vmatpush1.msra.mxu0 0.0
        %668 = vmatprep.subr.mxu0 0.0
        %669 = vmatpush1.msra.mxu0 0.0
        %670 = vmatprep.subr.mxu0 0.0
        %671 = vmatpush1.msra.mxu0 0.0
        %672 = vmatprep.subr.mxu0 0.0
        %673 = vmatpush1.msra.mxu0 0.0
        %674 = vmatprep.subr.mxu0 0.0
        %675 = vmatpush1.msra.mxu0 0.0
        %676 = vmatprep.subr.mxu0 0.0
        %677 = vmatpush1.msra.mxu0 0.0
        %678 = vmatprep.subr.mxu0 0.0
        %679 = vmatpush1.msra.mxu0 0.0
        %680 = vmatprep.subr.mxu0 0.0
        %681 = vmatpush1.msra.mxu0 0.0
        %682 = vmatprep.subr.mxu0 0.0
        %683 = vmatpush1.msra.mxu0 0.0
        %684 = vmatprep.subr.mxu0 0.0
        %685 = vmatpush1.msra.mxu0 0.0
        %686 = vmatprep.subr.mxu0 0.0
        %687 = vmatpush1.msra.mxu0 0.0
        %688 = vmatprep.subr.mxu0 0.0
        %689 = vmatpush1.msra.mxu0 0.0
        %690 = vmatprep.subr.mxu0 0.0
        %691 = vmatpush1.msra.mxu0 0.0
        %692 = vmatprep.subr.mxu0 0.0
        %693 = vmatpush1.msra.mxu0 0.0
        %694 = vmatprep.subr.mxu0 0.0
        %695 = vmatpush1.msra.mxu0 0.0
        %696 = vmatprep.subr.mxu0 0.0
        %697 = vmatpush1.msra.mxu0 0.0
        %698 = vmatprep.subr.mxu0 0.0
        %699 = vmatpush1.msra.mxu0 0.0
        %700 = vmatprep.subr.mxu0 0.0
        %701 = vmatpush1.msra.mxu0 0.0
        %702 = vmatprep.subr.mxu0 0.0
        %703 = vmatpush1.msra.mxu0 0.0
        %704 = vmatprep.subr.mxu0 0.0
        %705 = vmatpush1.msra.mxu0 0.0
        %706 = vmatprep.subr.mxu0 0.0
        %707 = vmatpush1.msra.mxu0 0.0
        %708 = vmatprep.subr.mxu0 0.0
        %709 = vmatpush1.msra.mxu0 0.0
        %710 = vmatprep.subr.mxu0 0.0
        %711 = vmatpush1.msra.mxu0 0.0
        %712 = vmatprep.mubr.f32.mxu0 0.0
        %713 = vmatmul.mubr.f32.gmra.mrb[0].mxu0 %v646
        %v714 = vpop.f32.mrb[0].mxu0
        %v715 = vadd.f32 0.0, %v714
        %v716 = vpop.f32.mrb[0].mxu0
        %717 = vdwg.mxu0
        %718 = vrot.lane.b32.xlu0 %v548, 120
        %v719 = vpop.permute.xlu0 %718
        %720 = vrot.lane.b32.xlu0 %v548, 88
        %v721 = vpop.permute.xlu0 %720
        %v722 = vsel %vm554, %v719, 0
        %v724 = vsel %vm554, %v721, 0
        %726 = vmatprep.subr.mxu0 0.0
        %727 = vmatpush1.xpose.msra.mxu0 %v724
        %728 = vmatprep.subr.mxu0 0.0
        %729 = vmatpush1.xpose.msra.mxu0 0.0
        %730 = vmatprep.subr.mxu0 0.0
        %731 = vmatpush1.xpose.msra.mxu0 0.0
        %732 = vmatprep.subr.mxu0 0.0
        %733 = vmatpush1.xpose.msra.mxu0 0.0
        %734 = vmatprep.subr.mxu0 0.0
        %735 = vmatpush1.xpose.msra.mxu0 0.0
        %736 = vmatprep.subr.mxu0 0.0
        %737 = vmatpush1.xpose.msra.mxu0 0.0
        %738 = vmatprep.subr.mxu0 0.0
        %739 = vmatpush1.xpose.msra.mxu0 0.0
        %740 = vmatprep.subr.mxu0 0.0
        %741 = vmatpush1.xpose.msra.mxu0 0.0
        %742 = vmatprep.subr.mxu0 0.0
        %743 = vmatpush1.xpose.msra.mxu0 0.0
        %744 = vmatprep.subr.mxu0 0.0
        %745 = vmatpush1.xpose.msra.mxu0 0.0
        %746 = vmatprep.subr.mxu0 0.0
        %747 = vmatpush1.xpose.msra.mxu0 0.0
        %748 = vmatprep.subr.mxu0 0.0
        %749 = vmatpush1.xpose.msra.mxu0 0.0
        %750 = vmatprep.subr.mxu0 0.0
        %751 = vmatpush1.xpose.msra.mxu0 0.0
        %752 = vmatprep.subr.mxu0 0.0
        %753 = vmatpush1.xpose.msra.mxu0 0.0
        %754 = vmatprep.subr.mxu0 0.0
        %755 = vmatpush1.xpose.msra.mxu0 0.0
        %756 = vmatprep.subr.mxu0 0.0
        %757 = vmatpush1.xpose.msra.mxu0 0.0
        %758 = vmatprep.subr.mxu0 0.0
        %759 = vmatpush1.xpose.msra.mxu0 0.0
        %760 = vmatprep.subr.mxu0 0.0
        %761 = vmatpush1.xpose.msra.mxu0 0.0
        %762 = vmatprep.subr.mxu0 0.0
        %763 = vmatpush1.xpose.msra.mxu0 0.0
        %764 = vmatprep.subr.mxu0 0.0
        %765 = vmatpush1.xpose.msra.mxu0 0.0
        %766 = vmatprep.subr.mxu0 0.0
        %767 = vmatpush1.xpose.msra.mxu0 0.0
        %768 = vmatprep.subr.mxu0 0.0
        %769 = vmatpush1.xpose.msra.mxu0 0.0
        %770 = vmatprep.subr.mxu0 0.0
        %771 = vmatpush1.xpose.msra.mxu0 0.0
        %772 = vmatprep.subr.mxu0 0.0
        %773 = vmatpush1.xpose.msra.mxu0 0.0
        %774 = vmatprep.subr.mxu0 0.0
        %775 = vmatpush1.xpose.msra.mxu0 0.0
        %776 = vmatprep.subr.mxu0 0.0
        %777 = vmatpush1.xpose.msra.mxu0 0.0
        %778 = vmatprep.subr.mxu0 0.0
        %779 = vmatpush1.xpose.msra.mxu0 0.0
        %780 = vmatprep.subr.mxu0 0.0
        %781 = vmatpush1.xpose.msra.mxu0 0.0
        %782 = vmatprep.subr.mxu0 0.0
        %783 = vmatpush1.xpose.msra.mxu0 0.0
        %784 = vmatprep.subr.mxu0 0.0
        %785 = vmatpush1.xpose.msra.mxu0 0.0
        %786 = vmatprep.subr.mxu0 0.0
        %787 = vmatpush1.xpose.msra.mxu0 0.0
        %788 = vmatprep.subr.mxu0 0.0
        %789 = vmatpush1.xpose.msra.mxu0 0.0
        %790 = vmatprep.mubr.f32.mxu0 0.0
        %791 = vmatmul.mubr.f32.gmra.mrb[0].mxu0 %v722
        %v792 = vpop.f32.mrb[0].mxu0
        %v793 = vadd.f32 0.0, %v792
        %v794 = vpop.f32.mrb[0].mxu0
        %795 = vdwg.mxu0
        %v796 = vmul.f32 %v793, 0.35355338
        %v797 = vadd.f32 %v796, %v468
        %v798 = vsel %vm554, %v797, -inf
        %799 = vmax.xlane.f32.xlu0 %v798
        %v800 = vpop.xlane.xlu0 %799
        %v801 = vsub.f32 %v797, %v800
        %v802 = vmul.f32 %v801, 1.442695
        %v803 = vpow.pop %v802
        %v804 = vsel %vm554, %v803, 0.0
        %805 = vadd.xlane.f32.xlu0 %v804
        %v806 = vpop.xlane.xlu0 %805
        %v807 = vrcp.pop %v806
        %v808 = vmul.f32 %v803, %v807
        %809 = vrot.lane.b32.xlu0 %v548, 56
        %v810 = vpop.permute.xlu0 %809
        %v813 = vsel %vm554, %v808, 0
        %815 = vmatprep.subr.mxu0 0.0
        %816 = vmatpush1.msra.mxu0 %v810
        %817 = vmatprep.subr.mxu0 0.0
        %818 = vmatpush1.msra.mxu0 0.0
        %819 = vmatprep.subr.mxu0 0.0
        %820 = vmatpush1.msra.mxu0 0.0
        %821 = vmatprep.subr.mxu0 0.0
        %822 = vmatpush1.msra.mxu0 0.0
        %823 = vmatprep.subr.mxu0 0.0
        %824 = vmatpush1.msra.mxu0 0.0
        %825 = vmatprep.subr.mxu0 0.0
        %826 = vmatpush1.msra.mxu0 0.0
        %827 = vmatprep.subr.mxu0 0.0
        %828 = vmatpush1.msra.mxu0 0.0
        %829 = vmatprep.subr.mxu0 0.0
        %830 = vmatpush1.msra.mxu0 0.0
        %831 = vmatprep.subr.mxu0 0.0
        %832 = vmatpush1.msra.mxu0 0.0
        %833 = vmatprep.subr.mxu0 0.0
        %834 = vmatpush1.msra.mxu0 0.0
        %835 = vmatprep.subr.mxu0 0.0
        %836 = vmatpush1.msra.mxu0 0.0
        %837 = vmatprep.subr.mxu0 0.0
        %838 = vmatpush1.msra.mxu0 0.0
        %839 = vmatprep.subr.mxu0 0.0
        %840 = vmatpush1.msra.mxu0 0.0
        %841 = vmatprep.subr.mxu0 0.0
        %842 = vmatpush1.msra.mxu0 0.0
        %843 = vmatprep.subr.mxu0 0.0
        %844 = vmatpush1.msra.mxu0 0.0
        %845 = vmatprep.subr.mxu0 0.0
        %846 = vmatpush1.msra.mxu0 0.0
        %847 = vmatprep.subr.mxu0 0.0
        %848 = vmatpush1.msra.mxu0 0.0
        %849 = vmatprep.subr.mxu0 0.0
        %850 = vmatpush1.msra.mxu0 0.0
        %851 = vmatprep.subr.mxu0 0.0
        %852 = vmatpush1.msra.mxu0 0.0
        %853 = vmatprep.subr.mxu0 0.0
        %854 = vmatpush1.msra.mxu0 0.0
        %855 = vmatprep.subr.mxu0 0.0
        %856 = vmatpush1.msra.mxu0 0.0
        %857 = vmatprep.subr.mxu0 0.0
        %858 = vmatpush1.msra.mxu0 0.0
        %859 = vmatprep.subr.mxu0 0.0
        %860 = vmatpush1.msra.mxu0 0.0
        %861 = vmatprep.subr.mxu0 0.0
        %862 = vmatpush1.msra.mxu0 0.0
        %863 = vmatprep.subr.mxu0 0.0
        %864 = vmatpush1.msra.mxu0 0.0
        %865 = vmatprep.subr.mxu0 0.0
        %866 = vmatpush1.msra.mxu0 0.0
        %867 = vmatprep.subr.mxu0 0.0
        %868 = vmatpush1.msra.mxu0 0.0
        %869 = vmatprep.subr.mxu0 0.0
        %870 = vmatpush1.msra.mxu0 0.0
        %871 = vmatprep.subr.mxu0 0.0
        %872 = vmatpush1.msra.mxu0 0.0
        %873 = vmatprep.subr.mxu0 0.0
        %874 = vmatpush1.msra.mxu0 0.0
        %875 = vmatprep.subr.mxu0 0.0
        %876 = vmatpush1.msra.mxu0 0.0
        %877 = vmatprep.subr.mxu0 0.0
        %878 = vmatpush1.msra.mxu0 0.0
        %879 = vmatprep.mubr.f32.mxu0 0.0
        %880 = vmatmul.mubr.f32.gmra.mrb[0].mxu0 %v813
        %v881 = vpop.f32.mrb[0].mxu0
        %v882 = vadd.f32 0.0, %v881
        %v883 = vpop.f32.mrb[0].mxu0
        %884 = vdwg.mxu0
        %v886 = vsel %vm554, %v882, 0
        %888 = vmatprep.subr.mxu0 0.0
        %889 = vmatpush1.msra.mxu0 %v474
        %890 = vmatprep.subr.mxu0 0.0
        %891 = vmatpush1.msra.mxu0 0.0
        %892 = vmatprep.subr.mxu0 0.0
        %893 = vmatpush1.msra.mxu0 0.0
        %894 = vmatprep.subr.mxu0 0.0
        %895 = vmatpush1.msra.mxu0 0.0
        %896 = vmatprep.subr.mxu0 0.0
        %897 = vmatpush1.msra.mxu0 0.0
        %898 = vmatprep.subr.mxu0 0.0
        %899 = vmatpush1.msra.mxu0 0.0
        %900 = vmatprep.subr.mxu0 0.0
        %901 = vmatpush1.msra.mxu0 0.0
        %902 = vmatprep.subr.mxu0 0.0
        %903 = vmatpush1.msra.mxu0 0.0
        %904 = vmatprep.subr.mxu0 0.0
        %905 = vmatpush1.msra.mxu0 0.0
        %906 = vmatprep.subr.mxu0 0.0
        %907 = vmatpush1.msra.mxu0 0.0
        %908 = vmatprep.subr.mxu0 0.0
        %909 = vmatpush1.msra.mxu0 0.0
        %910 = vmatprep.subr.mxu0 0.0
        %911 = vmatpush1.msra.mxu0 0.0
        %912 = vmatprep.subr.mxu0 0.0
        %913 = vmatpush1.msra.mxu0 0.0
        %914 = vmatprep.subr.mxu0 0.0
        %915 = vmatpush1.msra.mxu0 0.0
        %916 = vmatprep.subr.mxu0 0.0
        %917 = vmatpush1.msra.mxu0 0.0
        %918 = vmatprep.subr.mxu0 0.0
        %919 = vmatpush1.msra.mxu0 0.0
        %920 = vmatprep.subr.mxu0 0.0
        %921 = vmatpush1.msra.mxu0 0.0
        %922 = vmatprep.subr.mxu0 0.0
        %923 = vmatpush1.msra.mxu0 0.0
        %924 = vmatprep.subr.mxu0 0.0
        %925 = vmatpush1.msra.mxu0 0.0
        %926 = vmatprep.subr.mxu0 0.0
        %927 = vmatpush1.msra.mxu0 0.0
        %928 = vmatprep.subr.mxu0 0.0
        %929 = vmatpush1.msra.mxu0 0.0
        %930 = vmatprep.subr.mxu0 0.0
        %931 = vmatpush1.msra.mxu0 0.0
        %932 = vmatprep.subr.mxu0 0.0
        %933 = vmatpush1.msra.mxu0 0.0
        %934 = vmatprep.subr.mxu0 0.0
        %935 = vmatpush1.msra.mxu0 0.0
        %936 = vmatprep.subr.mxu0 0.0
        %937 = vmatpush1.msra.mxu0 0.0
        %938 = vmatprep.subr.mxu0 0.0
        %939 = vmatpush1.msra.mxu0 0.0
        %940 = vmatprep.subr.mxu0 0.0
        %941 = vmatpush1.msra.mxu0 0.0
        %942 = vmatprep.subr.mxu0 0.0
        %943 = vmatpush1.msra.mxu0 0.0
        %944 = vmatprep.subr.mxu0 0.0
        %945 = vmatpush1.msra.mxu0 0.0
        %946 = vmatprep.subr.mxu0 0.0
        %947 = vmatpush1.msra.mxu0 0.0
        %948 = vmatprep.subr.mxu0 0.0
        %949 = vmatpush1.msra.mxu0 0.0
        %950 = vmatprep.subr.mxu0 0.0
        %951 = vmatpush1.msra.mxu0 0.0
        %952 = vmatprep.mubr.f32.mxu0 0.0
        %953 = vmatmul.mubr.f32.gmra.mrb[0].mxu0 %v886
        %v954 = vpop.f32.mrb[0].mxu0
        %v955 = vadd.f32 0.0, %v954
        %v956 = vpop.f32.mrb[0].mxu0
        %957 = vdwg.mxu0
        %v959 = vsel %vm554, %v715, 0
        %961 = vmatprep.subr.mxu0 0.0
        %962 = vmatpush1.msra.mxu0 %v473
        %963 = vmatprep.subr.mxu0 0.0
        %964 = vmatpush1.msra.mxu0 0.0
        %965 = vmatprep.subr.mxu0 0.0
        %966 = vmatpush1.msra.mxu0 0.0
        %967 = vmatprep.subr.mxu0 0.0
        %968 = vmatpush1.msra.mxu0 0.0
        %969 = vmatprep.subr.mxu0 0.0
        %970 = vmatpush1.msra.mxu0 0.0
        %971 = vmatprep.subr.mxu0 0.0
        %972 = vmatpush1.msra.mxu0 0.0
        %973 = vmatprep.subr.mxu0 0.0
        %974 = vmatpush1.msra.mxu0 0.0
        %975 = vmatprep.subr.mxu0 0.0
        %976 = vmatpush1.msra.mxu0 0.0
        %977 = vmatprep.subr.mxu0 0.0
        %978 = vmatpush1.msra.mxu0 0.0
        %979 = vmatprep.subr.mxu0 0.0
        %980 = vmatpush1.msra.mxu0 0.0
        %981 = vmatprep.subr.mxu0 0.0
        %982 = vmatpush1.msra.mxu0 0.0
        %983 = vmatprep.subr.mxu0 0.0
        %984 = vmatpush1.msra.mxu0 0.0
        %985 = vmatprep.subr.mxu0 0.0
        %986 = vmatpush1.msra.mxu0 0.0
        %987 = vmatprep.subr.mxu0 0.0
        %988 = vmatpush1.msra.mxu0 0.0
        %989 = vmatprep.subr.mxu0 0.0
        %990 = vmatpush1.msra.mxu0 0.0
        %991 = vmatprep.subr.mxu0 0.0
        %992 = vmatpush1.msra.mxu0 0.0
        %993 = vmatprep.subr.mxu0 0.0
        %994 = vmatpush1.msra.mxu0 0.0
        %995 = vmatprep.subr.mxu0 0.0
        %996 = vmatpush1.msra.mxu0 0.0
        %997 = vmatprep.subr.mxu0 0.0
        %998 = vmatpush1.msra.mxu0 0.0
        %999 = vmatprep.subr.mxu0 0.0
        %1000 = vmatpush1.msra.mxu0 0.0
        %1001 = vmatprep.subr.mxu0 0.0
        %1002 = vmatpush1.msra.mxu0 0.0
        %1003 = vmatprep.subr.mxu0 0.0
        %1004 = vmatpush1.msra.mxu0 0.0
        %1005 = vmatprep.subr.mxu0 0.0
        %1006 = vmatpush1.msra.mxu0 0.0
        %1007 = vmatprep.subr.mxu0 0.0
        %1008 = vmatpush1.msra.mxu0 0.0
        %1009 = vmatprep.subr.mxu0 0.0
        %1010 = vmatpush1.msra.mxu0 0.0
        %1011 = vmatprep.subr.mxu0 0.0
        %1012 = vmatpush1.msra.mxu0 0.0
        %1013 = vmatprep.subr.mxu0 0.0
        %1014 = vmatpush1.msra.mxu0 0.0
        %1015 = vmatprep.subr.mxu0 0.0
        %1016 = vmatpush1.msra.mxu0 0.0
        %1017 = vmatprep.subr.mxu0 0.0
        %1018 = vmatpush1.msra.mxu0 0.0
        %1019 = vmatprep.subr.mxu0 0.0
        %1020 = vmatpush1.msra.mxu0 0.0
        %1021 = vmatprep.subr.mxu0 0.0
        %1022 = vmatpush1.msra.mxu0 0.0
        %1023 = vmatprep.subr.mxu0 0.0
        %1024 = vmatpush1.msra.mxu0 0.0
        %1025 = vmatprep.mubr.f32.mxu0 0.0
        %1026 = vmatmul.mubr.f32.gmra.mrb[0].mxu0 %v959
        %v1027 = vpop.f32.mrb[0].mxu0
        %v1028 = vadd.f32 %v955, %v1027
        %v1029 = vpop.f32.mrb[0].mxu0
        %1030 = vdwg.mxu0
        %1031 = vrot.lane.b32.xlu0 %v548, 112
        %v1032 = vpop.permute.xlu0 %1031
        %1033 = vrot.lane.b32.xlu0 %v548, 80
        %v1034 = vpop.permute.xlu0 %1033
        %v1035 = vsel %vm554, %v1032, 0
        %v1037 = vsel %vm554, %v1034, 0
        %1039 = vmatprep.subr.mxu0 0.0
        %1040 = vmatpush1.xpose.msra.mxu0 %v1037
        %1041 = vmatprep.subr.mxu0 0.0
        %1042 = vmatpush1.xpose.msra.mxu0 0.0
        %1043 = vmatprep.subr.mxu0 0.0
        %1044 = vmatpush1.xpose.msra.mxu0 0.0
        %1045 = vmatprep.subr.mxu0 0.0
        %1046 = vmatpush1.xpose.msra.mxu0 0.0
        %1047 = vmatprep.subr.mxu0 0.0
        %1048 = vmatpush1.xpose.msra.mxu0 0.0
        %1049 = vmatprep.subr.mxu0 0.0
        %1050 = vmatpush1.xpose.msra.mxu0 0.0
        %1051 = vmatprep.subr.mxu0 0.0
        %1052 = vmatpush1.xpose.msra.mxu0 0.0
        %1053 = vmatprep.subr.mxu0 0.0
        %1054 = vmatpush1.xpose.msra.mxu0 0.0
        %1055 = vmatprep.subr.mxu0 0.0
        %1056 = vmatpush1.xpose.msra.mxu0 0.0
        %1057 = vmatprep.subr.mxu0 0.0
        %1058 = vmatpush1.xpose.msra.mxu0 0.0
        %1059 = vmatprep.subr.mxu0 0.0
        %1060 = vmatpush1.xpose.msra.mxu0 0.0
        %1061 = vmatprep.subr.mxu0 0.0
        %1062 = vmatpush1.xpose.msra.mxu0 0.0
        %1063 = vmatprep.subr.mxu0 0.0
        %1064 = vmatpush1.xpose.msra.mxu0 0.0
        %1065 = vmatprep.subr.mxu0 0.0
        %1066 = vmatpush1.xpose.msra.mxu0 0.0
        %1067 = vmatprep.subr.mxu0 0.0
        %1068 = vmatpush1.xpose.msra.mxu0 0.0
        %1069 = vmatprep.subr.mxu0 0.0
        %1070 = vmatpush1.xpose.msra.mxu0 0.0
        %1071 = vmatprep.subr.mxu0 0.0
        %1072 = vmatpush1.xpose.msra.mxu0 0.0
        %1073 = vmatprep.subr.mxu0 0.0
        %1074 = vmatpush1.xpose.msra.mxu0 0.0
        %1075 = vmatprep.subr.mxu0 0.0
        %1076 = vmatpush1.xpose.msra.mxu0 0.0
        %1077 = vmatprep.subr.mxu0 0.0
        %1078 = vmatpush1.xpose.msra.mxu0 0.0
        %1079 = vmatprep.subr.mxu0 0.0
        %1080 = vmatpush1.xpose.msra.mxu0 0.0
        %1081 = vmatprep.subr.mxu0 0.0
        %1082 = vmatpush1.xpose.msra.mxu0 0.0
        %1083 = vmatprep.subr.mxu0 0.0
        %1084 = vmatpush1.xpose.msra.mxu0 0.0
        %1085 = vmatprep.subr.mxu0 0.0
        %1086 = vmatpush1.xpose.msra.mxu0 0.0
        %1087 = vmatprep.subr.mxu0 0.0
        %1088 = vmatpush1.xpose.msra.mxu0 0.0
        %1089 = vmatprep.subr.mxu0 0.0
        %1090 = vmatpush1.xpose.msra.mxu0 0.0
        %1091 = vmatprep.subr.mxu0 0.0
        %1092 = vmatpush1.xpose.msra.mxu0 0.0
        %1093 = vmatprep.subr.mxu0 0.0
        %1094 = vmatpush1.xpose.msra.mxu0 0.0
        %1095 = vmatprep.subr.mxu0 0.0
        %1096 = vmatpush1.xpose.msra.mxu0 0.0
        %1097 = vmatprep.subr.mxu0 0.0
        %1098 = vmatpush1.xpose.msra.mxu0 0.0
        %1099 = vmatprep.subr.mxu0 0.0
        %1100 = vmatpush1.xpose.msra.mxu0 0.0
        %1101 = vmatprep.subr.mxu0 0.0
        %1102 = vmatpush1.xpose.msra.mxu0 0.0
        %1103 = vmatprep.mubr.f32.mxu0 0.0
        %1104 = vmatmul.mubr.f32.gmra.mrb[0].mxu0 %v1035
        %v1105 = vpop.f32.mrb[0].mxu0
        %v1106 = vadd.f32 0.0, %v1105
        %v1107 = vpop.f32.mrb[0].mxu0
        %1108 = vdwg.mxu0
        %v1109 = vmul.f32 %v1106, 0.35355338
        %v1110 = vadd.f32 %v1109, %v468
        %v1111 = vsel %vm554, %v1110, -inf
        %1112 = vmax.xlane.f32.xlu0 %v1111
        %v1113 = vpop.xlane.xlu0 %1112
        %v1114 = vsub.f32 %v1110, %v1113
        %v1115 = vmul.f32 %v1114, 1.442695
        %v1116 = vpow.pop %v1115
        %v1117 = vsel %vm554, %v1116, 0.0
        %1118 = vadd.xlane.f32.xlu0 %v1117
        %v1119 = vpop.xlane.xlu0 %1118
        %v1120 = vrcp.pop %v1119
        %v1121 = vmul.f32 %v1116, %v1120
        %1122 = vrot.lane.b32.xlu0 %v548, 48
        %v1123 = vpop.permute.xlu0 %1122
        %v1126 = vsel %vm554, %v1121, 0
        %1128 = vmatprep.subr.mxu0 0.0
        %1129 = vmatpush1.msra.mxu0 %v1123
        %1130 = vmatprep.subr.mxu0 0.0
        %1131 = vmatpush1.msra.mxu0 0.0
        %1132 = vmatprep.subr.mxu0 0.0
        %1133 = vmatpush1.msra.mxu0 0.0
        %1134 = vmatprep.subr.mxu0 0.0
        %1135 = vmatpush1.msra.mxu0 0.0
        %1136 = vmatprep.subr.mxu0 0.0
        %1137 = vmatpush1.msra.mxu0 0.0
        %1138 = vmatprep.subr.mxu0 0.0
        %1139 = vmatpush1.msra.mxu0 0.0
        %1140 = vmatprep.subr.mxu0 0.0
        %1141 = vmatpush1.msra.mxu0 0.0
        %1142 = vmatprep.subr.mxu0 0.0
        %1143 = vmatpush1.msra.mxu0 0.0
        %1144 = vmatprep.subr.mxu0 0.0
        %1145 = vmatpush1.msra.mxu0 0.0
        %1146 = vmatprep.subr.mxu0 0.0
        %1147 = vmatpush1.msra.mxu0 0.0
        %1148 = vmatprep.subr.mxu0 0.0
        %1149 = vmatpush1.msra.mxu0 0.0
        %1150 = vmatprep.subr.mxu0 0.0
        %1151 = vmatpush1.msra.mxu0 0.0
        %1152 = vmatprep.subr.mxu0 0.0
        %1153 = vmatpush1.msra.mxu0 0.0
        %1154 = vmatprep.subr.mxu0 0.0
        %1155 = vmatpush1.msra.mxu0 0.0
        %1156 = vmatprep.subr.mxu0 0.0
        %1157 = vmatpush1.msra.mxu0 0.0
        %1158 = vmatprep.subr.mxu0 0.0
        %1159 = vmatpush1.msra.mxu0 0.0
        %1160 = vmatprep.subr.mxu0 0.0
        %1161 = vmatpush1.msra.mxu0 0.0
        %1162 = vmatprep.subr.mxu0 0.0
        %1163 = vmatpush1.msra.mxu0 0.0
        %1164 = vmatprep.subr.mxu0 0.0
        %1165 = vmatpush1.msra.mxu0 0.0
        %1166 = vmatprep.subr.mxu0 0.0
        %1167 = vmatpush1.msra.mxu0 0.0
        %1168 = vmatprep.subr.mxu0 0.0
        %1169 = vmatpush1.msra.mxu0 0.0
        %1170 = vmatprep.subr.mxu0 0.0
        %1171 = vmatpush1.msra.mxu0 0.0
        %1172 = vmatprep.subr.mxu0 0.0
        %1173 = vmatpush1.msra.mxu0 0.0
        %1174 = vmatprep.subr.mxu0 0.0
        %1175 = vmatpush1.msra.mxu0 0.0
        %1176 = vmatprep.subr.mxu0 0.0
        %1177 = vmatpush1.msra.mxu0 0.0
        %1178 = vmatprep.subr.mxu0 0.0
        %1179 = vmatpush1.msra.mxu0 0.0
        %1180 = vmatprep.subr.mxu0 0.0
        %1181 = vmatpush1.msra.mxu0 0.0
        %1182 = vmatprep.subr.mxu0 0.0
        %1183 = vmatpush1.msra.mxu0 0.0
        %1184 = vmatprep.subr.mxu0 0.0
        %1185 = vmatpush1.msra.mxu0 0.0
        %1186 = vmatprep.subr.mxu0 0.0
        %1187 = vmatpush1.msra.mxu0 0.0
        %1188 = vmatprep.subr.mxu0 0.0
        %1189 = vmatpush1.msra.mxu0 0.0
        %1190 = vmatprep.subr.mxu0 0.0
        %1191 = vmatpush1.msra.mxu0 0.0
        %1192 = vmatprep.mubr.f32.mxu0 0.0
        %1193 = vmatmul.mubr.f32.gmra.mrb[0].mxu0 %v1126
        %v1194 = vpop.f32.mrb[0].mxu0
        %v1195 = vadd.f32 0.0, %v1194
        %v1196 = vpop.f32.mrb[0].mxu0
        %1197 = vdwg.mxu0
        %v1199 = vsel %vm554, %v1195, 0
        %1201 = vmatprep.subr.mxu0 0.0
        %1202 = vmatpush1.msra.mxu0 %v475
        %1203 = vmatprep.subr.mxu0 0.0
        %1204 = vmatpush1.msra.mxu0 0.0
        %1205 = vmatprep.subr.mxu0 0.0
        %1206 = vmatpush1.msra.mxu0 0.0
        %1207 = vmatprep.subr.mxu0 0.0
        %1208 = vmatpush1.msra.mxu0 0.0
        %1209 = vmatprep.subr.mxu0 0.0
        %1210 = vmatpush1.msra.mxu0 0.0
        %1211 = vmatprep.subr.mxu0 0.0
        %1212 = vmatpush1.msra.mxu0 0.0
        %1213 = vmatprep.subr.mxu0 0.0
        %1214 = vmatpush1.msra.mxu0 0.0
        %1215 = vmatprep.subr.mxu0 0.0
        %1216 = vmatpush1.msra.mxu0 0.0
        %1217 = vmatprep.subr.mxu0 0.0
        %1218 = vmatpush1.msra.mxu0 0.0
        %1219 = vmatprep.subr.mxu0 0.0
        %1220 = vmatpush1.msra.mxu0 0.0
        %1221 = vmatprep.subr.mxu0 0.0
        %1222 = vmatpush1.msra.mxu0 0.0
        %1223 = vmatprep.subr.mxu0 0.0
        %1224 = vmatpush1.msra.mxu0 0.0
        %1225 = vmatprep.subr.mxu0 0.0
        %1226 = vmatpush1.msra.mxu0 0.0
        %1227 = vmatprep.subr.mxu0 0.0
        %1228 = vmatpush1.msra.mxu0 0.0
        %1229 = vmatprep.subr.mxu0 0.0
        %1230 = vmatpush1.msra.mxu0 0.0
        %1231 = vmatprep.subr.mxu0 0.0
        %1232 = vmatpush1.msra.mxu0 0.0
        %1233 = vmatprep.subr.mxu0 0.0
        %1234 = vmatpush1.msra.mxu0 0.0
        %1235 = vmatprep.subr.mxu0 0.0
        %1236 = vmatpush1.msra.mxu0 0.0
        %1237 = vmatprep.subr.mxu0 0.0
        %1238 = vmatpush1.msra.mxu0 0.0
        %1239 = vmatprep.subr.mxu0 0.0
        %1240 = vmatpush1.msra.mxu0 0.0
        %1241 = vmatprep.subr.mxu0 0.0
        %1242 = vmatpush1.msra.mxu0 0.0
        %1243 = vmatprep.subr.mxu0 0.0
        %1244 = vmatpush1.msra.mxu0 0.0
        %1245 = vmatprep.subr.mxu0 0.0
        %1246 = vmatpush1.msra.mxu0 0.0
        %1247 = vmatprep.subr.mxu0 0.0
        %1248 = vmatpush1.msra.mxu0 0.0
        %1249 = vmatprep.subr.mxu0 0.0
        %1250 = vmatpush1.msra.mxu0 0.0
        %1251 = vmatprep.subr.mxu0 0.0
        %1252 = vmatpush1.msra.mxu0 0.0
        %1253 = vmatprep.subr.mxu0 0.0
        %1254 = vmatpush1.msra.mxu0 0.0
        %1255 = vmatprep.subr.mxu0 0.0
        %1256 = vmatpush1.msra.mxu0 0.0
        %1257 = vmatprep.subr.mxu0 0.0
        %1258 = vmatpush1.msra.mxu0 0.0
        %1259 = vmatprep.subr.mxu0 0.0
        %1260 = vmatpush1.msra.mxu0 0.0
        %1261 = vmatprep.subr.mxu0 0.0
        %1262 = vmatpush1.msra.mxu0 0.0
        %1263 = vmatprep.subr.mxu0 0.0
        %1264 = vmatpush1.msra.mxu0 0.0
        %1265 = vmatprep.mubr.f32.mxu0 0.0
        %1266 = vmatmul.mubr.f32.gmra.mrb[0].mxu0 %v1199
        %v1267 = vpop.f32.mrb[0].mxu0
        %v1268 = vadd.f32 0.0, %v1267
        %v1269 = vpop.f32.mrb[0].mxu0
        %1270 = vdwg.mxu0
        %v1271 = vadd.f32 %v1028, %v1268
        %1272 = vrot.lane.b32.xlu0 %v548, 104
        %v1273 = vpop.permute.xlu0 %1272
        %1274 = vrot.lane.b32.xlu0 %v548, 72
        %v1275 = vpop.permute.xlu0 %1274
        %v1276 = vsel %vm554, %v1273, 0
        %v1278 = vsel %vm554, %v1275, 0
        %1280 = vmatprep.subr.mxu0 0.0
        %1281 = vmatpush1.xpose.msra.mxu0 %v1278
        %1282 = vmatprep.subr.mxu0 0.0
        %1283 = vmatpush1.xpose.msra.mxu0 0.0
        %1284 = vmatprep.subr.mxu0 0.0
        %1285 = vmatpush1.xpose.msra.mxu0 0.0
        %1286 = vmatprep.subr.mxu0 0.0
        %1287 = vmatpush1.xpose.msra.mxu0 0.0
        %1288 = vmatprep.subr.mxu0 0.0
        %1289 = vmatpush1.xpose.msra.mxu0 0.0
        %1290 = vmatprep.subr.mxu0 0.0
        %1291 = vmatpush1.xpose.msra.mxu0 0.0
        %1292 = vmatprep.subr.mxu0 0.0
        %1293 = vmatpush1.xpose.msra.mxu0 0.0
        %1294 = vmatprep.subr.mxu0 0.0
        %1295 = vmatpush1.xpose.msra.mxu0 0.0
        %1296 = vmatprep.subr.mxu0 0.0
        %1297 = vmatpush1.xpose.msra.mxu0 0.0
        %1298 = vmatprep.subr.mxu0 0.0
        %1299 = vmatpush1.xpose.msra.mxu0 0.0
        %1300 = vmatprep.subr.mxu0 0.0
        %1301 = vmatpush1.xpose.msra.mxu0 0.0
        %1302 = vmatprep.subr.mxu0 0.0
        %1303 = vmatpush1.xpose.msra.mxu0 0.0
        %1304 = vmatprep.subr.mxu0 0.0
        %1305 = vmatpush1.xpose.msra.mxu0 0.0
        %1306 = vmatprep.subr.mxu0 0.0
        %1307 = vmatpush1.xpose.msra.mxu0 0.0
        %1308 = vmatprep.subr.mxu0 0.0
        %1309 = vmatpush1.xpose.msra.mxu0 0.0
        %1310 = vmatprep.subr.mxu0 0.0
        %1311 = vmatpush1.xpose.msra.mxu0 0.0
        %1312 = vmatprep.subr.mxu0 0.0
        %1313 = vmatpush1.xpose.msra.mxu0 0.0
        %1314 = vmatprep.subr.mxu0 0.0
        %1315 = vmatpush1.xpose.msra.mxu0 0.0
        %1316 = vmatprep.subr.mxu0 0.0
        %1317 = vmatpush1.xpose.msra.mxu0 0.0
        %1318 = vmatprep.subr.mxu0 0.0
        %1319 = vmatpush1.xpose.msra.mxu0 0.0
        %1320 = vmatprep.subr.mxu0 0.0
        %1321 = vmatpush1.xpose.msra.mxu0 0.0
        %1322 = vmatprep.subr.mxu0 0.0
        %1323 = vmatpush1.xpose.msra.mxu0 0.0
        %1324 = vmatprep.subr.mxu0 0.0
        %1325 = vmatpush1.xpose.msra.mxu0 0.0
        %1326 = vmatprep.subr.mxu0 0.0
        %1327 = vmatpush1.xpose.msra.mxu0 0.0
        %1328 = vmatprep.subr.mxu0 0.0
        %1329 = vmatpush1.xpose.msra.mxu0 0.0
        %1330 = vmatprep.subr.mxu0 0.0
        %1331 = vmatpush1.xpose.msra.mxu0 0.0
        %1332 = vmatprep.subr.mxu0 0.0
        %1333 = vmatpush1.xpose.msra.mxu0 0.0
        %1334 = vmatprep.subr.mxu0 0.0
        %1335 = vmatpush1.xpose.msra.mxu0 0.0
        %1336 = vmatprep.subr.mxu0 0.0
        %1337 = vmatpush1.xpose.msra.mxu0 0.0
        %1338 = vmatprep.subr.mxu0 0.0
        %1339 = vmatpush1.xpose.msra.mxu0 0.0
        %1340 = vmatprep.subr.mxu0 0.0
        %1341 = vmatpush1.xpose.msra.mxu0 0.0
        %1342 = vmatprep.subr.mxu0 0.0
        %1343 = vmatpush1.xpose.msra.mxu0 0.0
        %1344 = vmatprep.mubr.f32.mxu0 0.0
        %1345 = vmatmul.mubr.f32.gmra.mrb[0].mxu0 %v1276
        %v1346 = vpop.f32.mrb[0].mxu0
        %v1347 = vadd.f32 0.0, %v1346
        %v1348 = vpop.f32.mrb[0].mxu0
        %1349 = vdwg.mxu0
        %v1350 = vmul.f32 %v1347, 0.35355338
        %v1351 = vadd.f32 %v1350, %v468
        %v1352 = vsel %vm554, %v1351, -inf
        %1353 = vmax.xlane.f32.xlu0 %v1352
        %v1354 = vpop.xlane.xlu0 %1353
        %v1355 = vsub.f32 %v1351, %v1354
        %v1356 = vmul.f32 %v1355, 1.442695
        %v1357 = vpow.pop %v1356
        %v1358 = vsel %vm554, %v1357, 0.0
        %1359 = vadd.xlane.f32.xlu0 %v1358
        %v1360 = vpop.xlane.xlu0 %1359
        %v1361 = vrcp.pop %v1360
        %v1362 = vmul.f32 %v1357, %v1361
        %1363 = vrot.lane.b32.xlu0 %v548, 40
        %v1364 = vpop.permute.xlu0 %1363
        %v1367 = vsel %vm554, %v1362, 0
        %1369 = vmatprep.subr.mxu0 0.0
        %1370 = vmatpush1.msra.mxu0 %v1364
        %1371 = vmatprep.subr.mxu0 0.0
        %1372 = vmatpush1.msra.mxu0 0.0
        %1373 = vmatprep.subr.mxu0 0.0
        %1374 = vmatpush1.msra.mxu0 0.0
        %1375 = vmatprep.subr.mxu0 0.0
        %1376 = vmatpush1.msra.mxu0 0.0
        %1377 = vmatprep.subr.mxu0 0.0
        %1378 = vmatpush1.msra.mxu0 0.0
        %1379 = vmatprep.subr.mxu0 0.0
        %1380 = vmatpush1.msra.mxu0 0.0
        %1381 = vmatprep.subr.mxu0 0.0
        %1382 = vmatpush1.msra.mxu0 0.0
        %1383 = vmatprep.subr.mxu0 0.0
        %1384 = vmatpush1.msra.mxu0 0.0
        %1385 = vmatprep.subr.mxu0 0.0
        %1386 = vmatpush1.msra.mxu0 0.0
        %1387 = vmatprep.subr.mxu0 0.0
        %1388 = vmatpush1.msra.mxu0 0.0
        %1389 = vmatprep.subr.mxu0 0.0
        %1390 = vmatpush1.msra.mxu0 0.0
        %1391 = vmatprep.subr.mxu0 0.0
        %1392 = vmatpush1.msra.mxu0 0.0
        %1393 = vmatprep.subr.mxu0 0.0
        %1394 = vmatpush1.msra.mxu0 0.0
        %1395 = vmatprep.subr.mxu0 0.0
        %1396 = vmatpush1.msra.mxu0 0.0
        %1397 = vmatprep.subr.mxu0 0.0
        %1398 = vmatpush1.msra.mxu0 0.0
        %1399 = vmatprep.subr.mxu0 0.0
        %1400 = vmatpush1.msra.mxu0 0.0
        %1401 = vmatprep.subr.mxu0 0.0
        %1402 = vmatpush1.msra.mxu0 0.0
        %1403 = vmatprep.subr.mxu0 0.0
        %1404 = vmatpush1.msra.mxu0 0.0
        %1405 = vmatprep.subr.mxu0 0.0
        %1406 = vmatpush1.msra.mxu0 0.0
        %1407 = vmatprep.subr.mxu0 0.0
        %1408 = vmatpush1.msra.mxu0 0.0
        %1409 = vmatprep.subr.mxu0 0.0
        %1410 = vmatpush1.msra.mxu0 0.0
        %1411 = vmatprep.subr.mxu0 0.0
        %1412 = vmatpush1.msra.mxu0 0.0
        %1413 = vmatprep.subr.mxu0 0.0
        %1414 = vmatpush1.msra.mxu0 0.0
        %1415 = vmatprep.subr.mxu0 0.0
        %1416 = vmatpush1.msra.mxu0 0.0
        %1417 = vmatprep.subr.mxu0 0.0
        %1418 = vmatpush1.msra.mxu0 0.0
        %1419 = vmatprep.subr.mxu0 0.0
        %1420 = vmatpush1.msra.mxu0 0.0
        %1421 = vmatprep.subr.mxu0 0.0
        %1422 = vmatpush1.msra.mxu0 0.0
        %1423 = vmatprep.subr.mxu0 0.0
        %1424 = vmatpush1.msra.mxu0 0.0
        %1425 = vmatprep.subr.mxu0 0.0
        %1426 = vmatpush1.msra.mxu0 0.0
        %1427 = vmatprep.subr.mxu0 0.0
        %1428 = vmatpush1.msra.mxu0 0.0
        %1429 = vmatprep.subr.mxu0 0.0
        %1430 = vmatpush1.msra.mxu0 0.0
        %1431 = vmatprep.subr.mxu0 0.0
        %1432 = vmatpush1.msra.mxu0 0.0
        %1433 = vmatprep.mubr.f32.mxu0 0.0
        %1434 = vmatmul.mubr.f32.gmra.mrb[0].mxu0 %v1367
        %v1435 = vpop.f32.mrb[0].mxu0
        %v1436 = vadd.f32 0.0, %v1435
        %v1437 = vpop.f32.mrb[0].mxu0
        %1438 = vdwg.mxu0
        %v1440 = vsel %vm554, %v1436, 0
        %1442 = vmatprep.subr.mxu0 0.0
        %1443 = vmatpush1.msra.mxu0 %v476
        %1444 = vmatprep.subr.mxu0 0.0
        %1445 = vmatpush1.msra.mxu0 0.0
        %1446 = vmatprep.subr.mxu0 0.0
        %1447 = vmatpush1.msra.mxu0 0.0
        %1448 = vmatprep.subr.mxu0 0.0
        %1449 = vmatpush1.msra.mxu0 0.0
        %1450 = vmatprep.subr.mxu0 0.0
        %1451 = vmatpush1.msra.mxu0 0.0
        %1452 = vmatprep.subr.mxu0 0.0
        %1453 = vmatpush1.msra.mxu0 0.0
        %1454 = vmatprep.subr.mxu0 0.0
        %1455 = vmatpush1.msra.mxu0 0.0
        %1456 = vmatprep.subr.mxu0 0.0
        %1457 = vmatpush1.msra.mxu0 0.0
        %1458 = vmatprep.subr.mxu0 0.0
        %1459 = vmatpush1.msra.mxu0 0.0
        %1460 = vmatprep.subr.mxu0 0.0
        %1461 = vmatpush1.msra.mxu0 0.0
        %1462 = vmatprep.subr.mxu0 0.0
        %1463 = vmatpush1.msra.mxu0 0.0
        %1464 = vmatprep.subr.mxu0 0.0
        %1465 = vmatpush1.msra.mxu0 0.0
        %1466 = vmatprep.subr.mxu0 0.0
        %1467 = vmatpush1.msra.mxu0 0.0
        %1468 = vmatprep.subr.mxu0 0.0
        %1469 = vmatpush1.msra.mxu0 0.0
        %1470 = vmatprep.subr.mxu0 0.0
        %1471 = vmatpush1.msra.mxu0 0.0
        %1472 = vmatprep.subr.mxu0 0.0
        %1473 = vmatpush1.msra.mxu0 0.0
        %1474 = vmatprep.subr.mxu0 0.0
        %1475 = vmatpush1.msra.mxu0 0.0
        %1476 = vmatprep.subr.mxu0 0.0
        %1477 = vmatpush1.msra.mxu0 0.0
        %1478 = vmatprep.subr.mxu0 0.0
        %1479 = vmatpush1.msra.mxu0 0.0
        %1480 = vmatprep.subr.mxu0 0.0
        %1481 = vmatpush1.msra.mxu0 0.0
        %1482 = vmatprep.subr.mxu0 0.0
        %1483 = vmatpush1.msra.mxu0 0.0
        %1484 = vmatprep.subr.mxu0 0.0
        %1485 = vmatpush1.msra.mxu0 0.0
        %1486 = vmatprep.subr.mxu0 0.0
        %1487 = vmatpush1.msra.mxu0 0.0
        %1488 = vmatprep.subr.mxu0 0.0
        %1489 = vmatpush1.msra.mxu0 0.0
        %1490 = vmatprep.subr.mxu0 0.0
        %1491 = vmatpush1.msra.mxu0 0.0
        %1492 = vmatprep.subr.mxu0 0.0
        %1493 = vmatpush1.msra.mxu0 0.0
        %1494 = vmatprep.subr.mxu0 0.0
        %1495 = vmatpush1.msra.mxu0 0.0
        %1496 = vmatprep.subr.mxu0 0.0
        %1497 = vmatpush1.msra.mxu0 0.0
        %1498 = vmatprep.subr.mxu0 0.0
        %1499 = vmatpush1.msra.mxu0 0.0
        %1500 = vmatprep.subr.mxu0 0.0
        %1501 = vmatpush1.msra.mxu0 0.0
        %1502 = vmatprep.subr.mxu0 0.0
        %1503 = vmatpush1.msra.mxu0 0.0
        %1504 = vmatprep.subr.mxu0 0.0
        %1505 = vmatpush1.msra.mxu0 0.0
        %1506 = vmatprep.mubr.f32.mxu0 0.0
        %1507 = vmatmul.mubr.f32.gmra.mrb[0].mxu0 %v1440
        %v1508 = vpop.f32.mrb[0].mxu0
        %v1509 = vadd.f32 0.0, %v1508
        %v1510 = vpop.f32.mrb[0].mxu0
        %1511 = vdwg.mxu0
        %v1512 = vadd.f32 %v1271, %v1509
        %v1513 = vadd.f32 %v466, %v1512
        %v1514 = vld [vmem:[%s4] sm:$0x1]
        %v1515 = vld [vmem:[%s5] sm:$0x1]
        %v1516 = vsel %vm477, %v1513, 0.0
        %1517 = vadd.xlane.f32.xlu0 %v1516
        %v1518 = vpop.xlane.xlu0 %1517
        %v1519 = vrcp.pop 32.0
        %v1520 = vmul.f32 %v1518, %v1519
        %v1521 = vsub.f32 %v1513, %v1520
        %v1522 = vmul.f32 %v1521, %v1521
        %v1523 = vsel %vm477, %v1522, 0.0
        %1524 = vadd.xlane.f32.xlu0 %v1523
        %v1525 = vpop.xlane.xlu0 %1524
        %v1526 = vmul.f32 %v1525, 0.032258064
        %v1527 = vadd.f32 %v1526, 0.001
        %v1528 = vrsqrt.pop %v1527
        %v1529 = vmul.f32 %v1521, %v1528
        %v1531 = vlaneseq
        %v1532 = vshrl.u32 %v1531, 7
        %v1533 = vsub.s32 0, %v1532
        %v1534 = vrot.slane %v1514, %v1533
        %v1536 = vmul.f32 %v1529, %v1534
        %v1538 = vlaneseq
        %v1539 = vshrl.u32 %v1538, 7
        %v1540 = vsub.s32 0, %v1539
        %v1541 = vrot.slane %v1515, %v1540
        %v1543 = vadd.f32 %v1536, %v1541
        %v1544 = vld [vmem:[%s6] sm:$0xff]
        %v1545 = vld [vmem:[%s6 + $0x8] sm:$0xff]
        %v1546 = vld [vmem:[%s6 + $0x10] sm:$0xff]
        %v1547 = vld [vmem:[%s6 + $0x18] sm:$0xff]
        %v1548 = vld [vmem:[%s7] sm:$0x1]
        %v1550 = vlaneseq
        %v1551 = vshrl.u32 %v1550, 7
        %v1552 = vsub.s32 0, %v1551
        %v1553 = vrot.slane %v1548, %v1552
        %v1556 = vsel %vm477, %v1543, 0
        %1558 = vmatprep.subr.mxu0 0.0
        %1559 = vmatpush1.msra.mxu0 %v1544
        %1560 = vmatprep.subr.mxu0 0.0
        %1561 = vmatpush1.msra.mxu0 %v1545
        %1562 = vmatprep.subr.mxu0 0.0
        %1563 = vmatpush1.msra.mxu0 %v1546
        %1564 = vmatprep.subr.mxu0 0.0
        %1565 = vmatpush1.msra.mxu0 %v1547
        %1566 = vmatprep.subr.mxu0 0.0
        %1567 = vmatpush1.msra.mxu0 0.0
        %1568 = vmatprep.subr.mxu0 0.0
        %1569 = vmatpush1.msra.mxu0 0.0
        %1570 = vmatprep.subr.mxu0 0.0
        %1571 = vmatpush1.msra.mxu0 0.0
        %1572 = vmatprep.subr.mxu0 0.0
        %1573 = vmatpush1.msra.mxu0 0.0
        %1574 = vmatprep.subr.mxu0 0.0
        %1575 = vmatpush1.msra.mxu0 0.0
        %1576 = vmatprep.subr.mxu0 0.0
        %1577 = vmatpush1.msra.mxu0 0.0
        %1578 = vmatprep.subr.mxu0 0.0
        %1579 = vmatpush1.msra.mxu0 0.0
        %1580 = vmatprep.subr.mxu0 0.0
        %1581 = vmatpush1.msra.mxu0 0.0
        %1582 = vmatprep.subr.mxu0 0.0
        %1583 = vmatpush1.msra.mxu0 0.0
        %1584 = vmatprep.subr.mxu0 0.0
        %1585 = vmatpush1.msra.mxu0 0.0
        %1586 = vmatprep.subr.mxu0 0.0
        %1587 = vmatpush1.msra.mxu0 0.0
        %1588 = vmatprep.subr.mxu0 0.0
        %1589 = vmatpush1.msra.mxu0 0.0
        %1590 = vmatprep.subr.mxu0 0.0
        %1591 = vmatpush1.msra.mxu0 0.0
        %1592 = vmatprep.subr.mxu0 0.0
        %1593 = vmatpush1.msra.mxu0 0.0
        %1594 = vmatprep.subr.mxu0 0.0
        %1595 = vmatpush1.msra.mxu0 0.0
        %1596 = vmatprep.subr.mxu0 0.0
        %1597 = vmatpush1.msra.mxu0 0.0
        %1598 = vmatprep.subr.mxu0 0.0
        %1599 = vmatpush1.msra.mxu0 0.0
        %1600 = vmatprep.subr.mxu0 0.0
        %1601 = vmatpush1.msra.mxu0 0.0
        %1602 = vmatprep.subr.mxu0 0.0
        %1603 = vmatpush1.msra.mxu0 0.0
        %1604 = vmatprep.subr.mxu0 0.0
        %1605 = vmatpush1.msra.mxu0 0.0
        %1606 = vmatprep.subr.mxu0 0.0
        %1607 = vmatpush1.msra.mxu0 0.0
        %1608 = vmatprep.subr.mxu0 0.0
        %1609 = vmatpush1.msra.mxu0 0.0
        %1610 = vmatprep.subr.mxu0 0.0
        %1611 = vmatpush1.msra.mxu0 0.0
        %1612 = vmatprep.subr.mxu0 0.0
        %1613 = vmatpush1.msra.mxu0 0.0
        %1614 = vmatprep.subr.mxu0 0.0
        %1615 = vmatpush1.msra.mxu0 0.0
        %1616 = vmatprep.subr.mxu0 0.0
        %1617 = vmatpush1.msra.mxu0 0.0
        %1618 = vmatprep.subr.mxu0 0.0
        %1619 = vmatpush1.msra.mxu0 0.0
        %1620 = vmatprep.subr.mxu0 0.0
        %1621 = vmatpush1.msra.mxu0 0.0
        %1622 = vmatprep.mubr.f32.mxu0 0.0
        %1623 = vmatmul.mubr.f32.gmra.mrb[0].mxu0 %v1556
        %v1624 = vpop.f32.mrb[0].mxu0
        %v1625 = vadd.f32 %v1553, %v1624
        %v1626 = vpop.f32.mrb[0].mxu0
        %1627 = vdwg.mxu0
        %v1628 = vmax.f32 %v1625, 0.0
        %v1629 = vld [vmem:[%s8] sm:$0xff]
        %v1630 = vld [vmem:[%s8 + $0x8] sm:$0xff]
        %v1631 = vld [vmem:[%s8 + $0x10] sm:$0xff]
        %v1632 = vld [vmem:[%s8 + $0x18] sm:$0xff]
        %v1633 = vld [vmem:[%s8 + $0x20] sm:$0xff]
        %v1634 = vld [vmem:[%s8 + $0x28] sm:$0xff]
        %v1635 = vld [vmem:[%s8 + $0x30] sm:$0xff]
        %v1636 = vld [vmem:[%s8 + $0x38] sm:$0xff]
        %v1637 = vld [vmem:[%s9] sm:$0x1]
        %v1639 = vlaneseq
        %v1640 = vshrl.u32 %v1639, 7
        %v1641 = vsub.s32 0, %v1640
        %v1642 = vrot.slane %v1637, %v1641
        %vm1644 = vcmask 523264
        %v1646 = vsel %vm1644, %v1628, 0
        %1648 = vmatprep.subr.mxu0 0.0
        %1649 = vmatpush1.msra.mxu0 %v1629
        %1650 = vmatprep.subr.mxu0 0.0
        %1651 = vmatpush1.msra.mxu0 %v1630
        %1652 = vmatprep.subr.mxu0 0.0
        %1653 = vmatpush1.msra.mxu0 %v1631
        %1654 = vmatprep.subr.mxu0 0.0
        %1655 = vmatpush1.msra.mxu0 %v1632
        %1656 = vmatprep.subr.mxu0 0.0
        %1657 = vmatpush1.msra.mxu0 %v1633
        %1658 = vmatprep.subr.mxu0 0.0
        %1659 = vmatpush1.msra.mxu0 %v1634
        %1660 = vmatprep.subr.mxu0 0.0
        %1661 = vmatpush1.msra.mxu0 %v1635
        %1662 = vmatprep.subr.mxu0 0.0
        %1663 = vmatpush1.msra.mxu0 %v1636
        %1664 = vmatprep.subr.mxu0 0.0
        %1665 = vmatpush1.msra.mxu0 0.0
        %1666 = vmatprep.subr.mxu0 0.0
        %1667 = vmatpush1.msra.mxu0 0.0
        %1668 = vmatprep.subr.mxu0 0.0
        %1669 = vmatpush1.msra.mxu0 0.0
        %1670 = vmatprep.subr.mxu0 0.0
        %1671 = vmatpush1.msra.mxu0 0.0
        %1672 = vmatprep.subr.mxu0 0.0
        %1673 = vmatpush1.msra.mxu0 0.0
        %1674 = vmatprep.subr.mxu0 0.0
        %1675 = vmatpush1.msra.mxu0 0.0
        %1676 = vmatprep.subr.mxu0 0.0
        %1677 = vmatpush1.msra.mxu0 0.0
        %1678 = vmatprep.subr.mxu0 0.0
        %1679 = vmatpush1.msra.mxu0 0.0
        %1680 = vmatprep.subr.mxu0 0.0
        %1681 = vmatpush1.msra.mxu0 0.0
        %1682 = vmatprep.subr.mxu0 0.0
        %1683 = vmatpush1.msra.mxu0 0.0
        %1684 = vmatprep.subr.mxu0 0.0
        %1685 = vmatpush1.msra.mxu0 0.0
        %1686 = vmatprep.subr.mxu0 0.0
        %1687 = vmatpush1.msra.mxu0 0.0
        %1688 = vmatprep.subr.mxu0 0.0
        %1689 = vmatpush1.msra.mxu0 0.0
        %1690 = vmatprep.subr.mxu0 0.0
        %1691 = vmatpush1.msra.mxu0 0.0
        %1692 = vmatprep.subr.mxu0 0.0
        %1693 = vmatpush1.msra.mxu0 0.0
        %1694 = vmatprep.subr.mxu0 0.0
        %1695 = vmatpush1.msra.mxu0 0.0
        %1696 = vmatprep.subr.mxu0 0.0
        %1697 = vmatpush1.msra.mxu0 0.0
        %1698 = vmatprep.subr.mxu0 0.0
        %1699 = vmatpush1.msra.mxu0 0.0
        %1700 = vmatprep.subr.mxu0 0.0
        %1701 = vmatpush1.msra.mxu0 0.0
        %1702 = vmatprep.subr.mxu0 0.0
        %1703 = vmatpush1.msra.mxu0 0.0
        %1704 = vmatprep.subr.mxu0 0.0
        %1705 = vmatpush1.msra.mxu0 0.0
        %1706 = vmatprep.subr.mxu0 0.0
        %1707 = vmatpush1.msra.mxu0 0.0
        %1708 = vmatprep.subr.mxu0 0.0
        %1709 = vmatpush1.msra.mxu0 0.0
        %1710 = vmatprep.subr.mxu0 0.0
        %1711 = vmatpush1.msra.mxu0 0.0
        %1712 = vmatprep.mubr.f32.mxu0 0.0
        %1713 = vmatmul.mubr.f32.gmra.mrb[0].mxu0 %v1646
        %v1714 = vpop.f32.mrb[0].mxu0
        %v1715 = vadd.f32 %v1642, %v1714
        %v1716 = vpop.f32.mrb[0].mxu0
        %1717 = vdwg.mxu0
        %v1718 = vadd.f32 %v1513, %v1715
        %s1719 = scalar_lea.vmem %s2, 32
        %v1720 = vld [vmem:[%s1719] sm:$0xff]
        %v1721 = vld [vmem:[%s1719 + $0x8] sm:$0xff]
        %v1722 = vld [vmem:[%s1719 + $0x10] sm:$0xff]
        %v1723 = vld [vmem:[%s1719 + $0x18] sm:$0xff]
        %s1724 = scalar_lea.vmem %s3, 32
        %v1725 = vld [vmem:[%s1724] sm:$0xff]
        %v1726 = vld [vmem:[%s1724 + $0x8] sm:$0xff]
        %v1727 = vld [vmem:[%s1724 + $0x10] sm:$0xff]
        %v1728 = vld [vmem:[%s1724 + $0x18] sm:$0xff]
        %v1730 = vsel %vm477, %v1718, 0
        %1732 = vmatprep.subr.mxu0 0.0
        %1733 = vmatpush1.msra.mxu0 %v1720
        %1734 = vmatprep.subr.mxu0 0.0
        %1735 = vmatpush1.msra.mxu0 %v1721
        %1736 = vmatprep.subr.mxu0 0.0
        %1737 = vmatpush1.msra.mxu0 %v1722
        %1738 = vmatprep.subr.mxu0 0.0
        %1739 = vmatpush1.msra.mxu0 %v1723
        %1740 = vmatprep.subr.mxu0 0.0
        %1741 = vmatpush1.msra.mxu0 0.0
        %1742 = vmatprep.subr.mxu0 0.0
        %1743 = vmatpush1.msra.mxu0 0.0
        %1744 = vmatprep.subr.mxu0 0.0
        %1745 = vmatpush1.msra.mxu0 0.0
        %1746 = vmatprep.subr.mxu0 0.0
        %1747 = vmatpush1.msra.mxu0 0.0
        %1748 = vmatprep.subr.mxu0 0.0
        %1749 = vmatpush1.msra.mxu0 0.0
        %1750 = vmatprep.subr.mxu0 0.0
        %1751 = vmatpush1.msra.mxu0 0.0
        %1752 = vmatprep.subr.mxu0 0.0
        %1753 = vmatpush1.msra.mxu0 0.0
        %1754 = vmatprep.subr.mxu0 0.0
        %1755 = vmatpush1.msra.mxu0 0.0
        %1756 = vmatprep.subr.mxu0 0.0
        %1757 = vmatpush1.msra.mxu0 0.0
        %1758 = vmatprep.subr.mxu0 0.0
        %1759 = vmatpush1.msra.mxu0 0.0
        %1760 = vmatprep.subr.mxu0 0.0
        %1761 = vmatpush1.msra.mxu0 0.0
        %1762 = vmatprep.subr.mxu0 0.0
        %1763 = vmatpush1.msra.mxu0 0.0
        %1764 = vmatprep.subr.mxu0 0.0
        %1765 = vmatpush1.msra.mxu0 0.0
        %1766 = vmatprep.subr.mxu0 0.0
        %1767 = vmatpush1.msra.mxu0 0.0
        %1768 = vmatprep.subr.mxu0 0.0
        %1769 = vmatpush1.msra.mxu0 0.0
        %1770 = vmatprep.subr.mxu0 0.0
        %1771 = vmatpush1.msra.mxu0 0.0
        %1772 = vmatprep.subr.mxu0 0.0
        %1773 = vmatpush1.msra.mxu0 0.0
        %1774 = vmatprep.subr.mxu0 0.0
        %1775 = vmatpush1.msra.mxu0 0.0
        %1776 = vmatprep.subr.mxu0 0.0
        %1777 = vmatpush1.msra.mxu0 0.0
        %1778 = vmatprep.subr.mxu0 0.0
        %1779 = vmatpush1.msra.mxu0 0.0
        %1780 = vmatprep.subr.mxu0 0.0
        %1781 = vmatpush1.msra.mxu0 0.0
        %1782 = vmatprep.subr.mxu0 0.0
        %1783 = vmatpush1.msra.mxu0 0.0
        %1784 = vmatprep.subr.mxu0 0.0
        %1785 = vmatpush1.msra.mxu0 0.0
        %1786 = vmatprep.subr.mxu0 0.0
        %1787 = vmatpush1.msra.mxu0 0.0
        %1788 = vmatprep.subr.mxu0 0.0
        %1789 = vmatpush1.msra.mxu0 0.0
        %1790 = vmatprep.subr.mxu0 0.0
        %1791 = vmatpush1.msra.mxu0 0.0
        %1792 = vmatprep.subr.mxu0 0.0
        %1793 = vmatpush1.msra.mxu0 0.0
        %1794 = vmatprep.subr.mxu0 0.0
        %1795 = vmatpush1.msra.mxu0 0.0
        %1796 = vmatprep.mubr.f32.mxu0 0.0
        %1797 = vmatmul.mubr.f32.gmra.mrb[0].mxu0 %v1730
        %v1798 = vpop.f32.mrb[0].mxu0
        %v1799 = vadd.f32 0.0, %v1798
        %v1800 = vpop.f32.mrb[0].mxu0
        %1801 = vdwg.mxu0
        %1803 = vrot.lane.b32.xlu0 %v1799, 96
        %v1804 = vpop.permute.xlu0 %1803
        %v1805 = vsel %vm554, %v1799, 0
        %v1807 = vsel %vm554, %v1804, 0
        %1809 = vmatprep.subr.mxu0 0.0
        %1810 = vmatpush1.xpose.msra.mxu0 %v1807
        %1811 = vmatprep.subr.mxu0 0.0
        %1812 = vmatpush1.xpose.msra.mxu0 0.0
        %1813 = vmatprep.subr.mxu0 0.0
        %1814 = vmatpush1.xpose.msra.mxu0 0.0
        %1815 = vmatprep.subr.mxu0 0.0
        %1816 = vmatpush1.xpose.msra.mxu0 0.0
        %1817 = vmatprep.subr.mxu0 0.0
        %1818 = vmatpush1.xpose.msra.mxu0 0.0
        %1819 = vmatprep.subr.mxu0 0.0
        %1820 = vmatpush1.xpose.msra.mxu0 0.0
        %1821 = vmatprep.subr.mxu0 0.0
        %1822 = vmatpush1.xpose.msra.mxu0 0.0
        %1823 = vmatprep.subr.mxu0 0.0
        %1824 = vmatpush1.xpose.msra.mxu0 0.0
        %1825 = vmatprep.subr.mxu0 0.0
        %1826 = vmatpush1.xpose.msra.mxu0 0.0
        %1827 = vmatprep.subr.mxu0 0.0
        %1828 = vmatpush1.xpose.msra.mxu0 0.0
        %1829 = vmatprep.subr.mxu0 0.0
        %1830 = vmatpush1.xpose.msra.mxu0 0.0
        %1831 = vmatprep.subr.mxu0 0.0
        %1832 = vmatpush1.xpose.msra.mxu0 0.0
        %1833 = vmatprep.subr.mxu0 0.0
        %1834 = vmatpush1.xpose.msra.mxu0 0.0
        %1835 = vmatprep.subr.mxu0 0.0
        %1836 = vmatpush1.xpose.msra.mxu0 0.0
        %1837 = vmatprep.subr.mxu0 0.0
        %1838 = vmatpush1.xpose.msra.mxu0 0.0
        %1839 = vmatprep.subr.mxu0 0.0
        %1840 = vmatpush1.xpose.msra.mxu0 0.0
        %1841 = vmatprep.subr.mxu0 0.0
        %1842 = vmatpush1.xpose.msra.mxu0 0.0
        %1843 = vmatprep.subr.mxu0 0.0
        %1844 = vmatpush1.xpose.msra.mxu0 0.0
        %1845 = vmatprep.subr.mxu0 0.0
        %1846 = vmatpush1.xpose.msra.mxu0 0.0
        %1847 = vmatprep.subr.mxu0 0.0
        %1848 = vmatpush1.xpose.msra.mxu0 0.0
        %1849 = vmatprep.subr.mxu0 0.0
        %1850 = vmatpush1.xpose.msra.mxu0 0.0
        %1851 = vmatprep.subr.mxu0 0.0
        %1852 = vmatpush1.xpose.msra.mxu0 0.0
        %1853 = vmatprep.subr.mxu0 0.0
        %1854 = vmatpush1.xpose.msra.mxu0 0.0
        %1855 = vmatprep.subr.mxu0 0.0
        %1856 = vmatpush1.xpose.msra.mxu0 0.0
        %1857 = vmatprep.subr.mxu0 0.0
        %1858 = vmatpush1.xpose.msra.mxu0 0.0
        %1859 = vmatprep.subr.mxu0 0.0
        %1860 = vmatpush1.xpose.msra.mxu0 0.0
        %1861 = vmatprep.subr.mxu0 0.0
        %1862 = vmatpush1.xpose.msra.mxu0 0.0
        %1863 = vmatprep.subr.mxu0 0.0
        %1864 = vmatpush1.xpose.msra.mxu0 0.0
        %1865 = vmatprep.subr.mxu0 0.0
        %1866 = vmatpush1.xpose.msra.mxu0 0.0
        %1867 = vmatprep.subr.mxu0 0.0
        %1868 = vmatpush1.xpose.msra.mxu0 0.0
        %1869 = vmatprep.subr.mxu0 0.0
        %1870 = vmatpush1.xpose.msra.mxu0 0.0
        %1871 = vmatprep.subr.mxu0 0.0
        %1872 = vmatpush1.xpose.msra.mxu0 0.0
        %1873 = vmatprep.mubr.f32.mxu0 0.0
        %1874 = vmatmul.mubr.f32.gmra.mrb[0].mxu0 %v1805
        %v1875 = vpop.f32.mrb[0].mxu0
        %v1876 = vadd.f32 0.0, %v1875
        %v1877 = vpop.f32.mrb[0].mxu0
        %1878 = vdwg.mxu0
        %v1879 = vmul.f32 %v1876, 0.35355338
        %v1880 = vadd.f32 %v1879, %v468
        %v1881 = vsel %vm554, %v1880, -inf
        %1882 = vmax.xlane.f32.xlu0 %v1881
        %v1883 = vpop.xlane.xlu0 %1882
        %v1884 = vsub.f32 %v1880, %v1883
        %v1885 = vmul.f32 %v1884, 1.442695
        %v1886 = vpow.pop %v1885
        %v1887 = vsel %vm554, %v1886, 0.0
        %1888 = vadd.xlane.f32.xlu0 %v1887
        %v1889 = vpop.xlane.xlu0 %1888
        %v1890 = vrcp.pop %v1889
        %v1891 = vmul.f32 %v1886, %v1890
        %1892 = vrot.lane.b32.xlu0 %v1799, 64
        %v1893 = vpop.permute.xlu0 %1892
        %v1896 = vsel %vm554, %v1891, 0
        %1898 = vmatprep.subr.mxu0 0.0
        %1899 = vmatpush1.msra.mxu0 %v1893
        %1900 = vmatprep.subr.mxu0 0.0
        %1901 = vmatpush1.msra.mxu0 0.0
        %1902 = vmatprep.subr.mxu0 0.0
        %1903 = vmatpush1.msra.mxu0 0.0
        %1904 = vmatprep.subr.mxu0 0.0
        %1905 = vmatpush1.msra.mxu0 0.0
        %1906 = vmatprep.subr.mxu0 0.0
        %1907 = vmatpush1.msra.mxu0 0.0
        %1908 = vmatprep.subr.mxu0 0.0
        %1909 = vmatpush1.msra.mxu0 0.0
        %1910 = vmatprep.subr.mxu0 0.0
        %1911 = vmatpush1.msra.mxu0 0.0
        %1912 = vmatprep.subr.mxu0 0.0
        %1913 = vmatpush1.msra.mxu0 0.0
        %1914 = vmatprep.subr.mxu0 0.0
        %1915 = vmatpush1.msra.mxu0 0.0
        %1916 = vmatprep.subr.mxu0 0.0
        %1917 = vmatpush1.msra.mxu0 0.0
        %1918 = vmatprep.subr.mxu0 0.0
        %1919 = vmatpush1.msra.mxu0 0.0
        %1920 = vmatprep.subr.mxu0 0.0
        %1921 = vmatpush1.msra.mxu0 0.0
        %1922 = vmatprep.subr.mxu0 0.0
        %1923 = vmatpush1.msra.mxu0 0.0
        %1924 = vmatprep.subr.mxu0 0.0
        %1925 = vmatpush1.msra.mxu0 0.0
        %1926 = vmatprep.subr.mxu0 0.0
        %1927 = vmatpush1.msra.mxu0 0.0
        %1928 = vmatprep.subr.mxu0 0.0
        %1929 = vmatpush1.msra.mxu0 0.0
        %1930 = vmatprep.subr.mxu0 0.0
        %1931 = vmatpush1.msra.mxu0 0.0
        %1932 = vmatprep.subr.mxu0 0.0
        %1933 = vmatpush1.msra.mxu0 0.0
        %1934 = vmatprep.subr.mxu0 0.0
        %1935 = vmatpush1.msra.mxu0 0.0
        %1936 = vmatprep.subr.mxu0 0.0
        %1937 = vmatpush1.msra.mxu0 0.0
        %1938 = vmatprep.subr.mxu0 0.0
        %1939 = vmatpush1.msra.mxu0 0.0
        %1940 = vmatprep.subr.mxu0 0.0
        %1941 = vmatpush1.msra.mxu0 0.0
        %1942 = vmatprep.subr.mxu0 0.0
        %1943 = vmatpush1.msra.mxu0 0.0
        %1944 = vmatprep.subr.mxu0 0.0
        %1945 = vmatpush1.msra.mxu0 0.0
        %1946 = vmatprep.subr.mxu0 0.0
        %1947 = vmatpush1.msra.mxu0 0.0
        %1948 = vmatprep.subr.mxu0 0.0
        %1949 = vmatpush1.msra.mxu0 0.0
        %1950 = vmatprep.subr.mxu0 0.0
        %1951 = vmatpush1.msra.mxu0 0.0
        %1952 = vmatprep.subr.mxu0 0.0
        %1953 = vmatpush1.msra.mxu0 0.0
        %1954 = vmatprep.subr.mxu0 0.0
        %1955 = vmatpush1.msra.mxu0 0.0
        %1956 = vmatprep.subr.mxu0 0.0
        %1957 = vmatpush1.msra.mxu0 0.0
        %1958 = vmatprep.subr.mxu0 0.0
        %1959 = vmatpush1.msra.mxu0 0.0
        %1960 = vmatprep.subr.mxu0 0.0
        %1961 = vmatpush1.msra.mxu0 0.0
        %1962 = vmatprep.mubr.f32.mxu0 0.0
        %1963 = vmatmul.mubr.f32.gmra.mrb[0].mxu0 %v1896
        %v1964 = vpop.f32.mrb[0].mxu0
        %v1965 = vadd.f32 0.0, %v1964
        %v1966 = vpop.f32.mrb[0].mxu0
        %1967 = vdwg.mxu0
        %1968 = vrot.lane.b32.xlu0 %v1799, 120
        %v1969 = vpop.permute.xlu0 %1968
        %1970 = vrot.lane.b32.xlu0 %v1799, 88
        %v1971 = vpop.permute.xlu0 %1970
        %v1972 = vsel %vm554, %v1969, 0
        %v1974 = vsel %vm554, %v1971, 0
        %1976 = vmatprep.subr.mxu0 0.0
        %1977 = vmatpush1.xpose.msra.mxu0 %v1974
        %1978 = vmatprep.subr.mxu0 0.0
        %1979 = vmatpush1.xpose.msra.mxu0 0.0
        %1980 = vmatprep.subr.mxu0 0.0
        %1981 = vmatpush1.xpose.msra.mxu0 0.0
        %1982 = vmatprep.subr.mxu0 0.0
        %1983 = vmatpush1.xpose.msra.mxu0 0.0
        %1984 = vmatprep.subr.mxu0 0.0
        %1985 = vmatpush1.xpose.msra.mxu0 0.0
        %1986 = vmatprep.subr.mxu0 0.0
        %1987 = vmatpush1.xpose.msra.mxu0 0.0
        %1988 = vmatprep.subr.mxu0 0.0
        %1989 = vmatpush1.xpose.msra.mxu0 0.0
        %1990 = vmatprep.subr.mxu0 0.0
        %1991 = vmatpush1.xpose.msra.mxu0 0.0
        %1992 = vmatprep.subr.mxu0 0.0
        %1993 = vmatpush1.xpose.msra.mxu0 0.0
        %1994 = vmatprep.subr.mxu0 0.0
        %1995 = vmatpush1.xpose.msra.mxu0 0.0
        %1996 = vmatprep.subr.mxu0 0.0
        %1997 = vmatpush1.xpose.msra.mxu0 0.0
        %1998 = vmatprep.subr.mxu0 0.0
        %1999 = vmatpush1.xpose.msra.mxu0 0.0
        %2000 = vmatprep.subr.mxu0 0.0
        %2001 = vmatpush1.xpose.msra.mxu0 0.0
        %2002 = vmatprep.subr.mxu0 0.0
        %2003 = vmatpush1.xpose.msra.mxu0 0.0
        %2004 = vmatprep.subr.mxu0 0.0
        %2005 = vmatpush1.xpose.msra.mxu0 0.0
        %2006 = vmatprep.subr.mxu0 0.0
        %2007 = vmatpush1.xpose.msra.mxu0 0.0
        %2008 = vmatprep.subr.mxu0 0.0
        %2009 = vmatpush1.xpose.msra.mxu0 0.0
        %2010 = vmatprep.subr.mxu0 0.0
        %2011 = vmatpush1.xpose.msra.mxu0 0.0
        %2012 = vmatprep.subr.mxu0 0.0
        %2013 = vmatpush1.xpose.msra.mxu0 0.0
        %2014 = vmatprep.subr.mxu0 0.0
        %2015 = vmatpush1.xpose.msra.mxu0 0.0
        %2016 = vmatprep.subr.mxu0 0.0
        %2017 = vmatpush1.xpose.msra.mxu0 0.0
        %2018 = vmatprep.subr.mxu0 0.0
        %2019 = vmatpush1.xpose.msra.mxu0 0.0
        %2020 = vmatprep.subr.mxu0 0.0
        %2021 = vmatpush1.xpose.msra.mxu0 0.0
        %2022 = vmatprep.subr.mxu0 0.0
        %2023 = vmatpush1.xpose.msra.mxu0 0.0
        %2024 = vmatprep.subr.mxu0 0.0
        %2025 = vmatpush1.xpose.msra.mxu0 0.0
        %2026 = vmatprep.subr.mxu0 0.0
        %2027 = vmatpush1.xpose.msra.mxu0 0.0
        %2028 = vmatprep.subr.mxu0 0.0
        %2029 = vmatpush1.xpose.msra.mxu0 0.0
        %2030 = vmatprep.subr.mxu0 0.0
        %2031 = vmatpush1.xpose.msra.mxu0 0.0
        %2032 = vmatprep.subr.mxu0 0.0
        %2033 = vmatpush1.xpose.msra.mxu0 0.0
        %2034 = vmatprep.subr.mxu0 0.0
        %2035 = vmatpush1.xpose.msra.mxu0 0.0
        %2036 = vmatprep.subr.mxu0 0.0
        %2037 = vmatpush1.xpose.msra.mxu0 0.0
        %2038 = vmatprep.subr.mxu0 0.0
        %2039 = vmatpush1.xpose.msra.mxu0 0.0
        %2040 = vmatprep.mubr.f32.mxu0 0.0
        %2041 = vmatmul.mubr.f32.gmra.mrb[0].mxu0 %v1972
        %v2042 = vpop.f32.mrb[0].mxu0
        %v2043 = vadd.f32 0.0, %v2042
        %v2044 = vpop.f32.mrb[0].mxu0
        %2045 = vdwg.mxu0
        %v2046 = vmul.f32 %v2043, 0.35355338
        %v2047 = vadd.f32 %v2046, %v468
        %v2048 = vsel %vm554, %v2047, -inf
        %2049 = vmax.xlane.f32.xlu0 %v2048
        %v2050 = vpop.xlane.xlu0 %2049
        %v2051 = vsub.f32 %v2047, %v2050
        %v2052 = vmul.f32 %v2051, 1.442695
        %v2053 = vpow.pop %v2052
        %v2054 = vsel %vm554, %v2053, 0.0
        %2055 = vadd.xlane.f32.xlu0 %v2054
        %v2056 = vpop.xlane.xlu0 %2055
        %v2057 = vrcp.pop %v2056
        %v2058 = vmul.f32 %v2053, %v2057
        %2059 = vrot.lane.b32.xlu0 %v1799, 56
        %v2060 = vpop.permute.xlu0 %2059
        %v2063 = vsel %vm554, %v2058, 0
        %2065 = vmatprep.subr.mxu0 0.0
        %2066 = vmatpush1.msra.mxu0 %v2060
        %2067 = vmatprep.subr.mxu0 0.0
        %2068 = vmatpush1.msra.mxu0 0.0
        %2069 = vmatprep.subr.mxu0 0.0
        %2070 = vmatpush1.msra.mxu0 0.0
        %2071 = vmatprep.subr.mxu0 0.0
        %2072 = vmatpush1.msra.mxu0 0.0
        %2073 = vmatprep.subr.mxu0 0.0
        %2074 = vmatpush1.msra.mxu0 0.0
        %2075 = vmatprep.subr.mxu0 0.0
        %2076 = vmatpush1.msra.mxu0 0.0
        %2077 = vmatprep.subr.mxu0 0.0
        %2078 = vmatpush1.msra.mxu0 0.0
        %2079 = vmatprep.subr.mxu0 0.0
        %2080 = vmatpush1.msra.mxu0 0.0
        %2081 = vmatprep.subr.mxu0 0.0
        %2082 = vmatpush1.msra.mxu0 0.0
        %2083 = vmatprep.subr.mxu0 0.0
        %2084 = vmatpush1.msra.mxu0 0.0
        %2085 = vmatprep.subr.mxu0 0.0
        %2086 = vmatpush1.msra.mxu0 0.0
        %2087 = vmatprep.subr.mxu0 0.0
        %2088 = vmatpush1.msra.mxu0 0.0
        %2089 = vmatprep.subr.mxu0 0.0
        %2090 = vmatpush1.msra.mxu0 0.0
        %2091 = vmatprep.subr.mxu0 0.0
        %2092 = vmatpush1.msra.mxu0 0.0
        %2093 = vmatprep.subr.mxu0 0.0
        %2094 = vmatpush1.msra.mxu0 0.0
        %2095 = vmatprep.subr.mxu0 0.0
        %2096 = vmatpush1.msra.mxu0 0.0
        %2097 = vmatprep.subr.mxu0 0.0
        %2098 = vmatpush1.msra.mxu0 0.0
        %2099 = vmatprep.subr.mxu0 0.0
        %2100 = vmatpush1.msra.mxu0 0.0
        %2101 = vmatprep.subr.mxu0 0.0
        %2102 = vmatpush1.msra.mxu0 0.0
        %2103 = vmatprep.subr.mxu0 0.0
        %2104 = vmatpush1.msra.mxu0 0.0
        %2105 = vmatprep.subr.mxu0 0.0
        %2106 = vmatpush1.msra.mxu0 0.0
        %2107 = vmatprep.subr.mxu0 0.0
        %2108 = vmatpush1.msra.mxu0 0.0
        %2109 = vmatprep.subr.mxu0 0.0
        %2110 = vmatpush1.msra.mxu0 0.0
        %2111 = vmatprep.subr.mxu0 0.0
        %2112 = vmatpush1.msra.mxu0 0.0
        %2113 = vmatprep.subr.mxu0 0.0
        %2114 = vmatpush1.msra.mxu0 0.0
        %2115 = vmatprep.subr.mxu0 0.0
        %2116 = vmatpush1.msra.mxu0 0.0
        %2117 = vmatprep.subr.mxu0 0.0
        %2118 = vmatpush1.msra.mxu0 0.0
        %2119 = vmatprep.subr.mxu0 0.0
        %2120 = vmatpush1.msra.mxu0 0.0
        %2121 = vmatprep.subr.mxu0 0.0
        %2122 = vmatpush1.msra.mxu0 0.0
        %2123 = vmatprep.subr.mxu0 0.0
        %2124 = vmatpush1.msra.mxu0 0.0
        %2125 = vmatprep.subr.mxu0 0.0
        %2126 = vmatpush1.msra.mxu0 0.0
        %2127 = vmatprep.subr.mxu0 0.0
        %2128 = vmatpush1.msra.mxu0 0.0
        %2129 = vmatprep.mubr.f32.mxu0 0.0
        %2130 = vmatmul.mubr.f32.gmra.mrb[0].mxu0 %v2063
        %v2131 = vpop.f32.mrb[0].mxu0
        %v2132 = vadd.f32 0.0, %v2131
        %v2133 = vpop.f32.mrb[0].mxu0
        %2134 = vdwg.mxu0
        %v2136 = vsel %vm554, %v2132, 0
        %2138 = vmatprep.subr.mxu0 0.0
        %2139 = vmatpush1.msra.mxu0 %v1726
        %2140 = vmatprep.subr.mxu0 0.0
        %2141 = vmatpush1.msra.mxu0 0.0
        %2142 = vmatprep.subr.mxu0 0.0
        %2143 = vmatpush1.msra.mxu0 0.0
        %2144 = vmatprep.subr.mxu0 0.0
        %2145 = vmatpush1.msra.mxu0 0.0
        %2146 = vmatprep.subr.mxu0 0.0
        %2147 = vmatpush1.msra.mxu0 0.0
        %2148 = vmatprep.subr.mxu0 0.0
        %2149 = vmatpush1.msra.mxu0 0.0
        %2150 = vmatprep.subr.mxu0 0.0
        %2151 = vmatpush1.msra.mxu0 0.0
        %2152 = vmatprep.subr.mxu0 0.0
        %2153 = vmatpush1.msra.mxu0 0.0
        %2154 = vmatprep.subr.mxu0 0.0
        %2155 = vmatpush1.msra.mxu0 0.0
        %2156 = vmatprep.subr.mxu0 0.0
        %2157 = vmatpush1.msra.mxu0 0.0
        %2158 = vmatprep.subr.mxu0 0.0
        %2159 = vmatpush1.msra.mxu0 0.0
        %2160 = vmatprep.subr.mxu0 0.0
        %2161 = vmatpush1.msra.mxu0 0.0
        %2162 = vmatprep.subr.mxu0 0.0
        %2163 = vmatpush1.msra.mxu0 0.0
        %2164 = vmatprep.subr.mxu0 0.0
        %2165 = vmatpush1.msra.mxu0 0.0
        %2166 = vmatprep.subr.mxu0 0.0
        %2167 = vmatpush1.msra.mxu0 0.0
        %2168 = vmatprep.subr.mxu0 0.0
        %2169 = vmatpush1.msra.mxu0 0.0
        %2170 = vmatprep.subr.mxu0 0.0
        %2171 = vmatpush1.msra.mxu0 0.0
        %2172 = vmatprep.subr.mxu0 0.0
        %2173 = vmatpush1.msra.mxu0 0.0
        %2174 = vmatprep.subr.mxu0 0.0
        %2175 = vmatpush1.msra.mxu0 0.0
        %2176 = vmatprep.subr.mxu0 0.0
        %2177 = vmatpush1.msra.mxu0 0.0
        %2178 = vmatprep.subr.mxu0 0.0
        %2179 = vmatpush1.msra.mxu0 0.0
        %2180 = vmatprep.subr.mxu0 0.0
        %2181 = vmatpush1.msra.mxu0 0.0
        %2182 = vmatprep.subr.mxu0 0.0
        %2183 = vmatpush1.msra.mxu0 0.0
        %2184 = vmatprep.subr.mxu0 0.0
        %2185 = vmatpush1.msra.mxu0 0.0
        %2186 = vmatprep.subr.mxu0 0.0
        %2187 = vmatpush1.msra.mxu0 0.0
        %2188 = vmatprep.subr.mxu0 0.0
        %2189 = vmatpush1.msra.mxu0 0.0
        %2190 = vmatprep.subr.mxu0 0.0
        %2191 = vmatpush1.msra.mxu0 0.0
        %2192 = vmatprep.subr.mxu0 0.0
        %2193 = vmatpush1.msra.mxu0 0.0
        %2194 = vmatprep.subr.mxu0 0.0
        %2195 = vmatpush1.msra.mxu0 0.0
        %2196 = vmatprep.subr.mxu0 0.0
        %2197 = vmatpush1.msra.mxu0 0.0
        %2198 = vmatprep.subr.mxu0 0.0
        %2199 = vmatpush1.msra.mxu0 0.0
        %2200 = vmatprep.subr.mxu0 0.0
        %2201 = vmatpush1.msra.mxu0 0.0
        %2202 = vmatprep.mubr.f32.mxu0 0.0
        %2203 = vmatmul.mubr.f32.gmra.mrb[0].mxu0 %v2136
        %v2204 = vpop.f32.mrb[0].mxu0
        %v2205 = vadd.f32 0.0, %v2204
        %v2206 = vpop.f32.mrb[0].mxu0
        %2207 = vdwg.mxu0
        %v2209 = vsel %vm554, %v1965, 0
        %2211 = vmatprep.subr.mxu0 0.0
        %2212 = vmatpush1.msra.mxu0 %v1725
        %2213 = vmatprep.subr.mxu0 0.0
        %2214 = vmatpush1.msra.mxu0 0.0
        %2215 = vmatprep.subr.mxu0 0.0
        %2216 = vmatpush1.msra.mxu0 0.0
        %2217 = vmatprep.subr.mxu0 0.0
        %2218 = vmatpush1.msra.mxu0 0.0
        %2219 = vmatprep.subr.mxu0 0.0
        %2220 = vmatpush1.msra.mxu0 0.0
        %2221 = vmatprep.subr.mxu0 0.0
        %2222 = vmatpush1.msra.mxu0 0.0
        %2223 = vmatprep.subr.mxu0 0.0
        %2224 = vmatpush1.msra.mxu0 0.0
        %2225 = vmatprep.subr.mxu0 0.0
        %2226 = vmatpush1.msra.mxu0 0.0
        %2227 = vmatprep.subr.mxu0 0.0
        %2228 = vmatpush1.msra.mxu0 0.0
        %2229 = vmatprep.subr.mxu0 0.0
        %2230 = vmatpush1.msra.mxu0 0.0
        %2231 = vmatprep.subr.mxu0 0.0
        %2232 = vmatpush1.msra.mxu0 0.0
        %2233 = vmatprep.subr.mxu0 0.0
        %2234 = vmatpush1.msra.mxu0 0.0
        %2235 = vmatprep.subr.mxu0 0.0
        %2236 = vmatpush1.msra.mxu0 0.0
        %2237 = vmatprep.subr.mxu0 0.0
        %2238 = vmatpush1.msra.mxu0 0.0
        %2239 = vmatprep.subr.mxu0 0.0
        %2240 = vmatpush1.msra.mxu0 0.0
        %2241 = vmatprep.subr.mxu0 0.0
        %2242 = vmatpush1.msra.mxu0 0.0
        %2243 = vmatprep.subr.mxu0 0.0
        %2244 = vmatpush1.msra.mxu0 0.0
        %2245 = vmatprep.subr.mxu0 0.0
        %2246 = vmatpush1.msra.mxu0 0.0
        %2247 = vmatprep.subr.mxu0 0.0
        %2248 = vmatpush1.msra.mxu0 0.0
        %2249 = vmatprep.subr.mxu0 0.0
        %2250 = vmatpush1.msra.mxu0 0.0
        %2251 = vmatprep.subr.mxu0 0.0
        %2252 = vmatpush1.msra.mxu0 0.0
        %2253 = vmatprep.subr.mxu0 0.0
        %2254 = vmatpush1.msra.mxu0 0.0
        %2255 = vmatprep.subr.mxu0 0.0
        %2256 = vmatpush1.msra.mxu0 0.0
        %2257 = vmatprep.subr.mxu0 0.0
        %2258 = vmatpush1.msra.mxu0 0.0
        %2259 = vmatprep.subr.mxu0 0.0
        %2260 = vmatpush1.msra.mxu0 0.0
        %2261 = vmatprep.subr.mxu0 0.0
        %2262 = vmatpush1.msra.mxu0 0.0
        %2263 = vmatprep.subr.mxu0 0.0
        %2264 = vmatpush1.msra.mxu0 0.0
        %2265 = vmatprep.subr.mxu0 0.0
        %2266 = vmatpush1.msra.mxu0 0.0
        %2267 = vmatprep.subr.mxu0 0.0
        %2268 = vmatpush1.msra.mxu0 0.0
        %2269 = vmatprep.subr.mxu0 0.0
        %2270 = vmatpush1.msra.mxu0 0.0
        %2271 = vmatprep.subr.mxu0 0.0
        %2272 = vmatpush1.msra.mxu0 0.0
        %2273 = vmatprep.subr.mxu0 0.0
        %2274 = vmatpush1.msra.mxu0 0.0
        %2275 = vmatprep.mubr.f32.mxu0 0.0
        %2276 = vmatmul.mubr.f32.gmra.mrb[0].mxu0 %v2209
        %v2277 = vpop.f32.mrb[0].mxu0
        %v2278 = vadd.f32 %v2205, %v2277
        %v2279 = vpop.f32.mrb[0].mxu0
        %2280 = vdwg.mxu0
        %2281 = vrot.lane.b32.xlu0 %v1799, 112
        %v2282 = vpop.permute.xlu0 %2281
        %2283 = vrot.lane.b32.xlu0 %v1799, 80
        %v2284 = vpop.permute.xlu0 %2283
        %v2285 = vsel %vm554, %v2282, 0
        %v2287 = vsel %vm554, %v2284, 0
        %2289 = vmatprep.subr.mxu0 0.0
        %2290 = vmatpush1.xpose.msra.mxu0 %v2287
        %2291 = vmatprep.subr.mxu0 0.0
        %2292 = vmatpush1.xpose.msra.mxu0 0.0
        %2293 = vmatprep.subr.mxu0 0.0
        %2294 = vmatpush1.xpose.msra.mxu0 0.0
        %2295 = vmatprep.subr.mxu0 0.0
        %2296 = vmatpush1.xpose.msra.mxu0 0.0
        %2297 = vmatprep.subr.mxu0 0.0
        %2298 = vmatpush1.xpose.msra.mxu0 0.0
        %2299 = vmatprep.subr.mxu0 0.0
        %2300 = vmatpush1.xpose.msra.mxu0 0.0
        %2301 = vmatprep.subr.mxu0 0.0
        %2302 = vmatpush1.xpose.msra.mxu0 0.0
        %2303 = vmatprep.subr.mxu0 0.0
        %2304 = vmatpush1.xpose.msra.mxu0 0.0
        %2305 = vmatprep.subr.mxu0 0.0
        %2306 = vmatpush1.xpose.msra.mxu0 0.0
        %2307 = vmatprep.subr.mxu0 0.0
        %2308 = vmatpush1.xpose.msra.mxu0 0.0
        %2309 = vmatprep.subr.mxu0 0.0
        %2310 = vmatpush1.xpose.msra.mxu0 0.0
        %2311 = vmatprep.subr.mxu0 0.0
        %2312 = vmatpush1.xpose.msra.mxu0 0.0
        %2313 = vmatprep.subr.mxu0 0.0
        %2314 = vmatpush1.xpose.msra.mxu0 0.0
        %2315 = vmatprep.subr.mxu0 0.0
        %2316 = vmatpush1.xpose.msra.mxu0 0.0
        %2317 = vmatprep.subr.mxu0 0.0
        %2318 = vmatpush1.xpose.msra.mxu0 0.0
        %2319 = vmatprep.subr.mxu0 0.0
        %2320 = vmatpush1.xpose.msra.mxu0 0.0
        %2321 = vmatprep.subr.mxu0 0.0
        %2322 = vmatpush1.xpose.msra.mxu0 0.0
        %2323 = vmatprep.subr.mxu0 0.0
        %2324 = vmatpush1.xpose.msra.mxu0 0.0
        %2325 = vmatprep.subr.mxu0 0.0
        %2326 = vmatpush1.xpose.msra.mxu0 0.0
        %2327 = vmatprep.subr.mxu0 0.0
        %2328 = vmatpush1.xpose.msra.mxu0 0.0
        %2329 = vmatprep.subr.mxu0 0.0
        %2330 = vmatpush1.xpose.msra.mxu0 0.0
        %2331 = vmatprep.subr.mxu0 0.0
        %2332 = vmatpush1.xpose.msra.mxu0 0.0
        %2333 = vmatprep.subr.mxu0 0.0
        %2334 = vmatpush1.xpose.msra.mxu0 0.0
        %2335 = vmatprep.subr.mxu0 0.0
        %2336 = vmatpush1.xpose.msra.mxu0 0.0
        %2337 = vmatprep.subr.mxu0 0.0
        %2338 = vmatpush1.xpose.msra.mxu0 0.0
        %2339 = vmatprep.subr.mxu0 0.0
        %2340 = vmatpush1.xpose.msra.mxu0 0.0
        %2341 = vmatprep.subr.mxu0 0.0
        %2342 = vmatpush1.xpose.msra.mxu0 0.0
        %2343 = vmatprep.subr.mxu0 0.0
        %2344 = vmatpush1.xpose.msra.mxu0 0.0
        %2345 = vmatprep.subr.mxu0 0.0
        %2346 = vmatpush1.xpose.msra.mxu0 0.0
        %2347 = vmatprep.subr.mxu0 0.0
        %2348 = vmatpush1.xpose.msra.mxu0 0.0
        %2349 = vmatprep.subr.mxu0 0.0
        %2350 = vmatpush1.xpose.msra.mxu0 0.0
        %2351 = vmatprep.subr.mxu0 0.0
        %2352 = vmatpush1.xpose.msra.mxu0 0.0
        %2353 = vmatprep.mubr.f32.mxu0 0.0
        %2354 = vmatmul.mubr.f32.gmra.mrb[0].mxu0 %v2285
        %v2355 = vpop.f32.mrb[0].mxu0
        %v2356 = vadd.f32 0.0, %v2355
        %v2357 = vpop.f32.mrb[0].mxu0
        %2358 = vdwg.mxu0
        %v2359 = vmul.f32 %v2356, 0.35355338
        %v2360 = vadd.f32 %v2359, %v468
        %v2361 = vsel %vm554, %v2360, -inf
        %2362 = vmax.xlane.f32.xlu0 %v2361
        %v2363 = vpop.xlane.xlu0 %2362
        %v2364 = vsub.f32 %v2360, %v2363
        %v2365 = vmul.f32 %v2364, 1.442695
        %v2366 = vpow.pop %v2365
        %v2367 = vsel %vm554, %v2366, 0.0
        %2368 = vadd.xlane.f32.xlu0 %v2367
        %v2369 = vpop.xlane.xlu0 %2368
        %v2370 = vrcp.pop %v2369
        %v2371 = vmul.f32 %v2366, %v2370
        %2372 = vrot.lane.b32.xlu0 %v1799, 48
        %v2373 = vpop.permute.xlu0 %2372
        %v2376 = vsel %vm554, %v2371, 0
        %2378 = vmatprep.subr.mxu0 0.0
        %2379 = vmatpush1.msra.mxu0 %v2373
        %2380 = vmatprep.subr.mxu0 0.0
        %2381 = vmatpush1.msra.mxu0 0.0
        %2382 = vmatprep.subr.mxu0 0.0
        %2383 = vmatpush1.msra.mxu0 0.0
        %2384 = vmatprep.subr.mxu0 0.0
        %2385 = vmatpush1.msra.mxu0 0.0
        %2386 = vmatprep.subr.mxu0 0.0
        %2387 = vmatpush1.msra.mxu0 0.0
        %2388 = vmatprep.subr.mxu0 0.0
        %2389 = vmatpush1.msra.mxu0 0.0
        %2390 = vmatprep.subr.mxu0 0.0
        %2391 = vmatpush1.msra.mxu0 0.0
        %2392 = vmatprep.subr.mxu0 0.0
        %2393 = vmatpush1.msra.mxu0 0.0
        %2394 = vmatprep.subr.mxu0 0.0
        %2395 = vmatpush1.msra.mxu0 0.0
        %2396 = vmatprep.subr.mxu0 0.0
        %2397 = vmatpush1.msra.mxu0 0.0
        %2398 = vmatprep.subr.mxu0 0.0
        %2399 = vmatpush1.msra.mxu0 0.0
        %2400 = vmatprep.subr.mxu0 0.0
        %2401 = vmatpush1.msra.mxu0 0.0
        %2402 = vmatprep.subr.mxu0 0.0
        %2403 = vmatpush1.msra.mxu0 0.0
        %2404 = vmatprep.subr.mxu0 0.0
        %2405 = vmatpush1.msra.mxu0 0.0
        %2406 = vmatprep.subr.mxu0 0.0
        %2407 = vmatpush1.msra.mxu0 0.0
        %2408 = vmatprep.subr.mxu0 0.0
        %2409 = vmatpush1.msra.mxu0 0.0
        %2410 = vmatprep.subr.mxu0 0.0
        %2411 = vmatpush1.msra.mxu0 0.0
        %2412 = vmatprep.subr.mxu0 0.0
        %2413 = vmatpush1.msra.mxu0 0.0
        %2414 = vmatprep.subr.mxu0 0.0
        %2415 = vmatpush1.msra.mxu0 0.0
        %2416 = vmatprep.subr.mxu0 0.0
        %2417 = vmatpush1.msra.mxu0 0.0
        %2418 = vmatprep.subr.mxu0 0.0
        %2419 = vmatpush1.msra.mxu0 0.0
        %2420 = vmatprep.subr.mxu0 0.0
        %2421 = vmatpush1.msra.mxu0 0.0
        %2422 = vmatprep.subr.mxu0 0.0
        %2423 = vmatpush1.msra.mxu0 0.0
        %2424 = vmatprep.subr.mxu0 0.0
        %2425 = vmatpush1.msra.mxu0 0.0
        %2426 = vmatprep.subr.mxu0 0.0
        %2427 = vmatpush1.msra.mxu0 0.0
        %2428 = vmatprep.subr.mxu0 0.0
        %2429 = vmatpush1.msra.mxu0 0.0
        %2430 = vmatprep.subr.mxu0 0.0
        %2431 = vmatpush1.msra.mxu0 0.0
        %2432 = vmatprep.subr.mxu0 0.0
        %2433 = vmatpush1.msra.mxu0 0.0
        %2434 = vmatprep.subr.mxu0 0.0
        %2435 = vmatpush1.msra.mxu0 0.0
        %2436 = vmatprep.subr.mxu0 0.0
        %2437 = vmatpush1.msra.mxu0 0.0
        %2438 = vmatprep.subr.mxu0 0.0
        %2439 = vmatpush1.msra.mxu0 0.0
        %2440 = vmatprep.subr.mxu0 0.0
        %2441 = vmatpush1.msra.mxu0 0.0
        %2442 = vmatprep.mubr.f32.mxu0 0.0
        %2443 = vmatmul.mubr.f32.gmra.mrb[0].mxu0 %v2376
        %v2444 = vpop.f32.mrb[0].mxu0
        %v2445 = vadd.f32 0.0, %v2444
        %v2446 = vpop.f32.mrb[0].mxu0
        %2447 = vdwg.mxu0
        %v2449 = vsel %vm554, %v2445, 0
        %2451 = vmatprep.subr.mxu0 0.0
        %2452 = vmatpush1.msra.mxu0 %v1727
        %2453 = vmatprep.subr.mxu0 0.0
        %2454 = vmatpush1.msra.mxu0 0.0
        %2455 = vmatprep.subr.mxu0 0.0
        %2456 = vmatpush1.msra.mxu0 0.0
        %2457 = vmatprep.subr.mxu0 0.0
        %2458 = vmatpush1.msra.mxu0 0.0
        %2459 = vmatprep.subr.mxu0 0.0
        %2460 = vmatpush1.msra.mxu0 0.0
        %2461 = vmatprep.subr.mxu0 0.0
        %2462 = vmatpush1.msra.mxu0 0.0
        %2463 = vmatprep.subr.mxu0 0.0
        %2464 = vmatpush1.msra.mxu0 0.0
        %2465 = vmatprep.subr.mxu0 0.0
        %2466 = vmatpush1.msra.mxu0 0.0
        %2467 = vmatprep.subr.mxu0 0.0
        %2468 = vmatpush1.msra.mxu0 0.0
        %2469 = vmatprep.subr.mxu0 0.0
        %2470 = vmatpush1.msra.mxu0 0.0
        %2471 = vmatprep.subr.mxu0 0.0
        %2472 = vmatpush1.msra.mxu0 0.0
        %2473 = vmatprep.subr.mxu0 0.0
        %2474 = vmatpush1.msra.mxu0 0.0
        %2475 = vmatprep.subr.mxu0 0.0
        %2476 = vmatpush1.msra.mxu0 0.0
        %2477 = vmatprep.subr.mxu0 0.0
        %2478 = vmatpush1.msra.mxu0 0.0
        %2479 = vmatprep.subr.mxu0 0.0
        %2480 = vmatpush1.msra.mxu0 0.0
        %2481 = vmatprep.subr.mxu0 0.0
        %2482 = vmatpush1.msra.mxu0 0.0
        %2483 = vmatprep.subr.mxu0 0.0
        %2484 = vmatpush1.msra.mxu0 0.0
        %2485 = vmatprep.subr.mxu0 0.0
        %2486 = vmatpush1.msra.mxu0 0.0
        %2487 = vmatprep.subr.mxu0 0.0
        %2488 = vmatpush1.msra.mxu0 0.0
        %2489 = vmatprep.subr.mxu0 0.0
        %2490 = vmatpush1.msra.mxu0 0.0
        %2491 = vmatprep.subr.mxu0 0.0
        %2492 = vmatpush1.msra.mxu0 0.0
        %2493 = vmatprep.subr.mxu0 0.0
        %2494 = vmatpush1.msra.mxu0 0.0
        %2495 = vmatprep.subr.mxu0 0.0
        %2496 = vmatpush1.msra.mxu0 0.0
        %2497 = vmatprep.subr.mxu0 0.0
        %2498 = vmatpush1.msra.mxu0 0.0
        %2499 = vmatprep.subr.mxu0 0.0
        %2500 = vmatpush1.msra.mxu0 0.0
        %2501 = vmatprep.subr.mxu0 0.0
        %2502 = vmatpush1.msra.mxu0 0.0
        %2503 = vmatprep.subr.mxu0 0.0
        %2504 = vmatpush1.msra.mxu0 0.0
        %2505 = vmatprep.subr.mxu0 0.0
        %2506 = vmatpush1.msra.mxu0 0.0
        %2507 = vmatprep.subr.mxu0 0.0
        %2508 = vmatpush1.msra.mxu0 0.0
        %2509 = vmatprep.subr.mxu0 0.0
        %2510 = vmatpush1.msra.mxu0 0.0
        %2511 = vmatprep.subr.mxu0 0.0
        %2512 = vmatpush1.msra.mxu0 0.0
        %2513 = vmatprep.subr.mxu0 0.0
        %2514 = vmatpush1.msra.mxu0 0.0
        %2515 = vmatprep.mubr.f32.mxu0 0.0
        %2516 = vmatmul.mubr.f32.gmra.mrb[0].mxu0 %v2449
        %v2517 = vpop.f32.mrb[0].mxu0
        %v2518 = vadd.f32 0.0, %v2517
        %v2519 = vpop.f32.mrb[0].mxu0
        %2520 = vdwg.mxu0
        %v2521 = vadd.f32 %v2278, %v2518
        %2522 = vrot.lane.b32.xlu0 %v1799, 104
        %v2523 = vpop.permute.xlu0 %2522
        %2524 = vrot.lane.b32.xlu0 %v1799, 72
        %v2525 = vpop.permute.xlu0 %2524
        %v2526 = vsel %vm554, %v2523, 0
        %v2528 = vsel %vm554, %v2525, 0
        %2530 = vmatprep.subr.mxu0 0.0
        %2531 = vmatpush1.xpose.msra.mxu0 %v2528
        %2532 = vmatprep.subr.mxu0 0.0
        %2533 = vmatpush1.xpose.msra.mxu0 0.0
        %2534 = vmatprep.subr.mxu0 0.0
        %2535 = vmatpush1.xpose.msra.mxu0 0.0
        %2536 = vmatprep.subr.mxu0 0.0
        %2537 = vmatpush1.xpose.msra.mxu0 0.0
        %2538 = vmatprep.subr.mxu0 0.0
        %2539 = vmatpush1.xpose.msra.mxu0 0.0
        %2540 = vmatprep.subr.mxu0 0.0
        %2541 = vmatpush1.xpose.msra.mxu0 0.0
        %2542 = vmatprep.subr.mxu0 0.0
        %2543 = vmatpush1.xpose.msra.mxu0 0.0
        %2544 = vmatprep.subr.mxu0 0.0
        %2545 = vmatpush1.xpose.msra.mxu0 0.0
        %2546 = vmatprep.subr.mxu0 0.0
        %2547 = vmatpush1.xpose.msra.mxu0 0.0
        %2548 = vmatprep.subr.mxu0 0.0
        %2549 = vmatpush1.xpose.msra.mxu0 0.0
        %2550 = vmatprep.subr.mxu0 0.0
        %2551 = vmatpush1.xpose.msra.mxu0 0.0
        %2552 = vmatprep.subr.mxu0 0.0
        %2553 = vmatpush1.xpose.msra.mxu0 0.0
        %2554 = vmatprep.subr.mxu0 0.0
        %2555 = vmatpush1.xpose.msra.mxu0 0.0
        %2556 = vmatprep.subr.mxu0 0.0
        %2557 = vmatpush1.xpose.msra.mxu0 0.0
        %2558 = vmatprep.subr.mxu0 0.0
        %2559 = vmatpush1.xpose.msra.mxu0 0.0
        %2560 = vmatprep.subr.mxu0 0.0
        %2561 = vmatpush1.xpose.msra.mxu0 0.0
        %2562 = vmatprep.subr.mxu0 0.0
        %2563 = vmatpush1.xpose.msra.mxu0 0.0
        %2564 = vmatprep.subr.mxu0 0.0
        %2565 = vmatpush1.xpose.msra.mxu0 0.0
        %2566 = vmatprep.subr.mxu0 0.0
        %2567 = vmatpush1.xpose.msra.mxu0 0.0
        %2568 = vmatprep.subr.mxu0 0.0
        %2569 = vmatpush1.xpose.msra.mxu0 0.0
        %2570 = vmatprep.subr.mxu0 0.0
        %2571 = vmatpush1.xpose.msra.mxu0 0.0
        %2572 = vmatprep.subr.mxu0 0.0
        %2573 = vmatpush1.xpose.msra.mxu0 0.0
        %2574 = vmatprep.subr.mxu0 0.0
        %2575 = vmatpush1.xpose.msra.mxu0 0.0
        %2576 = vmatprep.subr.mxu0 0.0
        %2577 = vmatpush1.xpose.msra.mxu0 0.0
        %2578 = vmatprep.subr.mxu0 0.0
        %2579 = vmatpush1.xpose.msra.mxu0 0.0
        %2580 = vmatprep.subr.mxu0 0.0
        %2581 = vmatpush1.xpose.msra.mxu0 0.0
        %2582 = vmatprep.subr.mxu0 0.0
        %2583 = vmatpush1.xpose.msra.mxu0 0.0
        %2584 = vmatprep.subr.mxu0 0.0
        %2585 = vmatpush1.xpose.msra.mxu0 0.0
        %2586 = vmatprep.subr.mxu0 0.0
        %2587 = vmatpush1.xpose.msra.mxu0 0.0
        %2588 = vmatprep.subr.mxu0 0.0
        %2589 = vmatpush1.xpose.msra.mxu0 0.0
        %2590 = vmatprep.subr.mxu0 0.0
        %2591 = vmatpush1.xpose.msra.mxu0 0.0
        %2592 = vmatprep.subr.mxu0 0.0
        %2593 = vmatpush1.xpose.msra.mxu0 0.0
        %2594 = vmatprep.mubr.f32.mxu0 0.0
        %2595 = vmatmul.mubr.f32.gmra.mrb[0].mxu0 %v2526
        %v2596 = vpop.f32.mrb[0].mxu0
        %v2597 = vadd.f32 0.0, %v2596
        %v2598 = vpop.f32.mrb[0].mxu0
        %2599 = vdwg.mxu0
        %v2600 = vmul.f32 %v2597, 0.35355338
        %v2601 = vadd.f32 %v2600, %v468
        %v2602 = vsel %vm554, %v2601, -inf
        %2603 = vmax.xlane.f32.xlu0 %v2602
        %v2604 = vpop.xlane.xlu0 %2603
        %v2605 = vsub.f32 %v2601, %v2604
        %v2606 = vmul.f32 %v2605, 1.442695
        %v2607 = vpow.pop %v2606
        %v2608 = vsel %vm554, %v2607, 0.0
        %2609 = vadd.xlane.f32.xlu0 %v2608
        %v2610 = vpop.xlane.xlu0 %2609
        %v2611 = vrcp.pop %v2610
        %v2612 = vmul.f32 %v2607, %v2611
        %2613 = vrot.lane.b32.xlu0 %v1799, 40
        %v2614 = vpop.permute.xlu0 %2613
        %v2617 = vsel %vm554, %v2612, 0
        %2619 = vmatprep.subr.mxu0 0.0
        %2620 = vmatpush1.msra.mxu0 %v2614
        %2621 = vmatprep.subr.mxu0 0.0
        %2622 = vmatpush1.msra.mxu0 0.0
        %2623 = vmatprep.subr.mxu0 0.0
        %2624 = vmatpush1.msra.mxu0 0.0
        %2625 = vmatprep.subr.mxu0 0.0
        %2626 = vmatpush1.msra.mxu0 0.0
        %2627 = vmatprep.subr.mxu0 0.0
        %2628 = vmatpush1.msra.mxu0 0.0
        %2629 = vmatprep.subr.mxu0 0.0
        %2630 = vmatpush1.msra.mxu0 0.0
        %2631 = vmatprep.subr.mxu0 0.0
        %2632 = vmatpush1.msra.mxu0 0.0
        %2633 = vmatprep.subr.mxu0 0.0
        %2634 = vmatpush1.msra.mxu0 0.0
        %2635 = vmatprep.subr.mxu0 0.0
        %2636 = vmatpush1.msra.mxu0 0.0
        %2637 = vmatprep.subr.mxu0 0.0
        %2638 = vmatpush1.msra.mxu0 0.0
        %2639 = vmatprep.subr.mxu0 0.0
        %2640 = vmatpush1.msra.mxu0 0.0
        %2641 = vmatprep.subr.mxu0 0.0
        %2642 = vmatpush1.msra.mxu0 0.0
        %2643 = vmatprep.subr.mxu0 0.0
        %2644 = vmatpush1.msra.mxu0 0.0
        %2645 = vmatprep.subr.mxu0 0.0
        %2646 = vmatpush1.msra.mxu0 0.0
        %2647 = vmatprep.subr.mxu0 0.0
        %2648 = vmatpush1.msra.mxu0 0.0
        %2649 = vmatprep.subr.mxu0 0.0
        %2650 = vmatpush1.msra.mxu0 0.0
        %2651 = vmatprep.subr.mxu0 0.0
        %2652 = vmatpush1.msra.mxu0 0.0
        %2653 = vmatprep.subr.mxu0 0.0
        %2654 = vmatpush1.msra.mxu0 0.0
        %2655 = vmatprep.subr.mxu0 0.0
        %2656 = vmatpush1.msra.mxu0 0.0
        %2657 = vmatprep.subr.mxu0 0.0
        %2658 = vmatpush1.msra.mxu0 0.0
        %2659 = vmatprep.subr.mxu0 0.0
        %2660 = vmatpush1.msra.mxu0 0.0
        %2661 = vmatprep.subr.mxu0 0.0
        %2662 = vmatpush1.msra.mxu0 0.0
        %2663 = vmatprep.subr.mxu0 0.0
        %2664 = vmatpush1.msra.mxu0 0.0
        %2665 = vmatprep.subr.mxu0 0.0
        %2666 = vmatpush1.msra.mxu0 0.0
        %2667 = vmatprep.subr.mxu0 0.0
        %2668 = vmatpush1.msra.mxu0 0.0
        %2669 = vmatprep.subr.mxu0 0.0
        %2670 = vmatpush1.msra.mxu0 0.0
        %2671 = vmatprep.subr.mxu0 0.0
        %2672 = vmatpush1.msra.mxu0 0.0
        %2673 = vmatprep.subr.mxu0 0.0
        %2674 = vmatpush1.msra.mxu0 0.0
        %2675 = vmatprep.subr.mxu0 0.0
        %2676 = vmatpush1.msra.mxu0 0.0
        %2677 = vmatprep.subr.mxu0 0.0
        %2678 = vmatpush1.msra.mxu0 0.0
        %2679 = vmatprep.subr.mxu0 0.0
        %2680 = vmatpush1.msra.mxu0 0.0
        %2681 = vmatprep.subr.mxu0 0.0
        %2682 = vmatpush1.msra.mxu0 0.0
        %2683 = vmatprep.mubr.f32.mxu0 0.0
        %2684 = vmatmul.mubr.f32.gmra.mrb[0].mxu0 %v2617
        %v2685 = vpop.f32.mrb[0].mxu0
        %v2686 = vadd.f32 0.0, %v2685
        %v2687 = vpop.f32.mrb[0].mxu0
        %2688 = vdwg.mxu0
        %v2690 = vsel %vm554, %v2686, 0
        %2692 = vmatprep.subr.mxu0 0.0
        %2693 = vmatpush1.msra.mxu0 %v1728
        %2694 = vmatprep.subr.mxu0 0.0
        %2695 = vmatpush1.msra.mxu0 0.0
        %2696 = vmatprep.subr.mxu0 0.0
        %2697 = vmatpush1.msra.mxu0 0.0
        %2698 = vmatprep.subr.mxu0 0.0
        %2699 = vmatpush1.msra.mxu0 0.0
        %2700 = vmatprep.subr.mxu0 0.0
        %2701 = vmatpush1.msra.mxu0 0.0
        %2702 = vmatprep.subr.mxu0 0.0
        %2703 = vmatpush1.msra.mxu0 0.0
        %2704 = vmatprep.subr.mxu0 0.0
        %2705 = vmatpush1.msra.mxu0 0.0
        %2706 = vmatprep.subr.mxu0 0.0
        %2707 = vmatpush1.msra.mxu0 0.0
        %2708 = vmatprep.subr.mxu0 0.0
        %2709 = vmatpush1.msra.mxu0 0.0
        %2710 = vmatprep.subr.mxu0 0.0
        %2711 = vmatpush1.msra.mxu0 0.0
        %2712 = vmatprep.subr.mxu0 0.0
        %2713 = vmatpush1.msra.mxu0 0.0
        %2714 = vmatprep.subr.mxu0 0.0
        %2715 = vmatpush1.msra.mxu0 0.0
        %2716 = vmatprep.subr.mxu0 0.0
        %2717 = vmatpush1.msra.mxu0 0.0
        %2718 = vmatprep.subr.mxu0 0.0
        %2719 = vmatpush1.msra.mxu0 0.0
        %2720 = vmatprep.subr.mxu0 0.0
        %2721 = vmatpush1.msra.mxu0 0.0
        %2722 = vmatprep.subr.mxu0 0.0
        %2723 = vmatpush1.msra.mxu0 0.0
        %2724 = vmatprep.subr.mxu0 0.0
        %2725 = vmatpush1.msra.mxu0 0.0
        %2726 = vmatprep.subr.mxu0 0.0
        %2727 = vmatpush1.msra.mxu0 0.0
        %2728 = vmatprep.subr.mxu0 0.0
        %2729 = vmatpush1.msra.mxu0 0.0
        %2730 = vmatprep.subr.mxu0 0.0
        %2731 = vmatpush1.msra.mxu0 0.0
        %2732 = vmatprep.subr.mxu0 0.0
        %2733 = vmatpush1.msra.mxu0 0.0
        %2734 = vmatprep.subr.mxu0 0.0
        %2735 = vmatpush1.msra.mxu0 0.0
        %2736 = vmatprep.subr.mxu0 0.0
        %2737 = vmatpush1.msra.mxu0 0.0
        %2738 = vmatprep.subr.mxu0 0.0
        %2739 = vmatpush1.msra.mxu0 0.0
        %2740 = vmatprep.subr.mxu0 0.0
        %2741 = vmatpush1.msra.mxu0 0.0
        %2742 = vmatprep.subr.mxu0 0.0
        %2743 = vmatpush1.msra.mxu0 0.0
        %2744 = vmatprep.subr.mxu0 0.0
        %2745 = vmatpush1.msra.mxu0 0.0
        %2746 = vmatprep.subr.mxu0 0.0
        %2747 = vmatpush1.msra.mxu0 0.0
        %2748 = vmatprep.subr.mxu0 0.0
        %2749 = vmatpush1.msra.mxu0 0.0
        %2750 = vmatprep.subr.mxu0 0.0
        %2751 = vmatpush1.msra.mxu0 0.0
        %2752 = vmatprep.subr.mxu0 0.0
        %2753 = vmatpush1.msra.mxu0 0.0
        %2754 = vmatprep.subr.mxu0 0.0
        %2755 = vmatpush1.msra.mxu0 0.0
        %2756 = vmatprep.mubr.f32.mxu0 0.0
        %2757 = vmatmul.mubr.f32.gmra.mrb[0].mxu0 %v2690
        %v2758 = vpop.f32.mrb[0].mxu0
        %v2759 = vadd.f32 0.0, %v2758
        %v2760 = vpop.f32.mrb[0].mxu0
        %2761 = vdwg.mxu0
        %v2762 = vadd.f32 %v2521, %v2759
        %v2763 = vadd.f32 %v1718, %v2762
        %s2764 = scalar_lea.vmem %s4, 1
        %v2765 = vld [vmem:[%s2764] sm:$0x1]
        %s2766 = scalar_lea.vmem %s5, 1
        %v2767 = vld [vmem:[%s2766] sm:$0x1]
        %v2768 = vsel %vm477, %v2763, 0.0
        %2769 = vadd.xlane.f32.xlu0 %v2768
        %v2770 = vpop.xlane.xlu0 %2769
        %v2771 = vmul.f32 %v2770, %v1519
        %v2772 = vsub.f32 %v2763, %v2771
        %v2773 = vmul.f32 %v2772, %v2772
        %v2774 = vsel %vm477, %v2773, 0.0
        %2775 = vadd.xlane.f32.xlu0 %v2774
        %v2776 = vpop.xlane.xlu0 %2775
        %v2777 = vmul.f32 %v2776, 0.032258064
        %v2778 = vadd.f32 %v2777, 0.001
        %v2779 = vrsqrt.pop %v2778
        %v2780 = vmul.f32 %v2772, %v2779
        %v2782 = vlaneseq
        %v2783 = vshrl.u32 %v2782, 7
        %v2784 = vsub.s32 0, %v2783
        %v2785 = vrot.slane %v2765, %v2784
        %v2787 = vmul.f32 %v2780, %v2785
        %v2789 = vlaneseq
        %v2790 = vshrl.u32 %v2789, 7
        %v2791 = vsub.s32 0, %v2790
        %v2792 = vrot.slane %v2767, %v2791
        %v2794 = vadd.f32 %v2787, %v2792
        %s2795 = scalar_lea.vmem %s6, 32
        %v2796 = vld [vmem:[%s2795] sm:$0xff]
        %v2797 = vld [vmem:[%s2795 + $0x8] sm:$0xff]
        %v2798 = vld [vmem:[%s2795 + $0x10] sm:$0xff]
        %v2799 = vld [vmem:[%s2795 + $0x18] sm:$0xff]
        %s2800 = scalar_lea.vmem %s7, 1
        %v2801 = vld [vmem:[%s2800] sm:$0x1]
        %v2803 = vlaneseq
        %v2804 = vshrl.u32 %v2803, 7
        %v2805 = vsub.s32 0, %v2804
        %v2806 = vrot.slane %v2801, %v2805
        %v2809 = vsel %vm477, %v2794, 0
        %2811 = vmatprep.subr.mxu0 0.0
        %2812 = vmatpush1.msra.mxu0 %v2796
        %2813 = vmatprep.subr.mxu0 0.0
        %2814 = vmatpush1.msra.mxu0 %v2797
        %2815 = vmatprep.subr.mxu0 0.0
        %2816 = vmatpush1.msra.mxu0 %v2798
        %2817 = vmatprep.subr.mxu0 0.0
        %2818 = vmatpush1.msra.mxu0 %v2799
        %2819 = vmatprep.subr.mxu0 0.0
        %2820 = vmatpush1.msra.mxu0 0.0
        %2821 = vmatprep.subr.mxu0 0.0
        %2822 = vmatpush1.msra.mxu0 0.0
        %2823 = vmatprep.subr.mxu0 0.0
        %2824 = vmatpush1.msra.mxu0 0.0
        %2825 = vmatprep.subr.mxu0 0.0
        %2826 = vmatpush1.msra.mxu0 0.0
        %2827 = vmatprep.subr.mxu0 0.0
        %2828 = vmatpush1.msra.mxu0 0.0
        %2829 = vmatprep.subr.mxu0 0.0
        %2830 = vmatpush1.msra.mxu0 0.0
        %2831 = vmatprep.subr.mxu0 0.0
        %2832 = vmatpush1.msra.mxu0 0.0
        %2833 = vmatprep.subr.mxu0 0.0
        %2834 = vmatpush1.msra.mxu0 0.0
        %2835 = vmatprep.subr.mxu0 0.0
        %2836 = vmatpush1.msra.mxu0 0.0
        %2837 = vmatprep.subr.mxu0 0.0
        %2838 = vmatpush1.msra.mxu0 0.0
        %2839 = vmatprep.subr.mxu0 0.0
        %2840 = vmatpush1.msra.mxu0 0.0
        %2841 = vmatprep.subr.mxu0 0.0
        %2842 = vmatpush1.msra.mxu0 0.0
        %2843 = vmatprep.subr.mxu0 0.0
        %2844 = vmatpush1.msra.mxu0 0.0
        %2845 = vmatprep.subr.mxu0 0.0
        %2846 = vmatpush1.msra.mxu0 0.0
        %2847 = vmatprep.subr.mxu0 0.0
        %2848 = vmatpush1.msra.mxu0 0.0
        %2849 = vmatprep.subr.mxu0 0.0
        %2850 = vmatpush1.msra.mxu0 0.0
        %2851 = vmatprep.subr.mxu0 0.0
        %2852 = vmatpush1.msra.mxu0 0.0
        %2853 = vmatprep.subr.mxu0 0.0
        %2854 = vmatpush1.msra.mxu0 0.0
        %2855 = vmatprep.subr.mxu0 0.0
        %2856 = vmatpush1.msra.mxu0 0.0
        %2857 = vmatprep.subr.mxu0 0.0
        %2858 = vmatpush1.msra.mxu0 0.0
        %2859 = vmatprep.subr.mxu0 0.0
        %2860 = vmatpush1.msra.mxu0 0.0
        %2861 = vmatprep.subr.mxu0 0.0
        %2862 = vmatpush1.msra.mxu0 0.0
        %2863 = vmatprep.subr.mxu0 0.0
        %2864 = vmatpush1.msra.mxu0 0.0
        %2865 = vmatprep.subr.mxu0 0.0
        %2866 = vmatpush1.msra.mxu0 0.0
        %2867 = vmatprep.subr.mxu0 0.0
        %2868 = vmatpush1.msra.mxu0 0.0
        %2869 = vmatprep.subr.mxu0 0.0
        %2870 = vmatpush1.msra.mxu0 0.0
        %2871 = vmatprep.subr.mxu0 0.0
        %2872 = vmatpush1.msra.mxu0 0.0
        %2873 = vmatprep.subr.mxu0 0.0
        %2874 = vmatpush1.msra.mxu0 0.0
        %2875 = vmatprep.mubr.f32.mxu0 0.0
        %2876 = vmatmul.mubr.f32.gmra.mrb[0].mxu0 %v2809
        %v2877 = vpop.f32.mrb[0].mxu0
        %v2878 = vadd.f32 %v2806, %v2877
        %v2879 = vpop.f32.mrb[0].mxu0
        %2880 = vdwg.mxu0
        %v2881 = vmax.f32 %v2878, 0.0
        %s2882 = scalar_lea.vmem %s8, 64
        %v2883 = vld [vmem:[%s2882] sm:$0xff]
        %v2884 = vld [vmem:[%s2882 + $0x8] sm:$0xff]
        %v2885 = vld [vmem:[%s2882 + $0x10] sm:$0xff]
        %v2886 = vld [vmem:[%s2882 + $0x18] sm:$0xff]
        %v2887 = vld [vmem:[%s2882 + $0x20] sm:$0xff]
        %v2888 = vld [vmem:[%s2882 + $0x28] sm:$0xff]
        %v2889 = vld [vmem:[%s2882 + $0x30] sm:$0xff]
        %v2890 = vld [vmem:[%s2882 + $0x38] sm:$0xff]
        %s2891 = scalar_lea.vmem %s9, 1
        %v2892 = vld [vmem:[%s2891] sm:$0x1]
        %v2894 = vlaneseq
        %v2895 = vshrl.u32 %v2894, 7
        %v2896 = vsub.s32 0, %v2895
        %v2897 = vrot.slane %v2892, %v2896
        %v2900 = vsel %vm1644, %v2881, 0
        %2902 = vmatprep.subr.mxu0 0.0
        %2903 = vmatpush1.msra.mxu0 %v2883
        %2904 = vmatprep.subr.mxu0 0.0
        %2905 = vmatpush1.msra.mxu0 %v2884
        %2906 = vmatprep.subr.mxu0 0.0
        %2907 = vmatpush1.msra.mxu0 %v2885
        %2908 = vmatprep.subr.mxu0 0.0
        %2909 = vmatpush1.msra.mxu0 %v2886
        %2910 = vmatprep.subr.mxu0 0.0
        %2911 = vmatpush1.msra.mxu0 %v2887
        %2912 = vmatprep.subr.mxu0 0.0
        %2913 = vmatpush1.msra.mxu0 %v2888
        %2914 = vmatprep.subr.mxu0 0.0
        %2915 = vmatpush1.msra.mxu0 %v2889
        %2916 = vmatprep.subr.mxu0 0.0
        %2917 = vmatpush1.msra.mxu0 %v2890
        %2918 = vmatprep.subr.mxu0 0.0
        %2919 = vmatpush1.msra.mxu0 0.0
        %2920 = vmatprep.subr.mxu0 0.0
        %2921 = vmatpush1.msra.mxu0 0.0
        %2922 = vmatprep.subr.mxu0 0.0
        %2923 = vmatpush1.msra.mxu0 0.0
        %2924 = vmatprep.subr.mxu0 0.0
        %2925 = vmatpush1.msra.mxu0 0.0
        %2926 = vmatprep.subr.mxu0 0.0
        %2927 = vmatpush1.msra.mxu0 0.0
        %2928 = vmatprep.subr.mxu0 0.0
        %2929 = vmatpush1.msra.mxu0 0.0
        %2930 = vmatprep.subr.mxu0 0.0
        %2931 = vmatpush1.msra.mxu0 0.0
        %2932 = vmatprep.subr.mxu0 0.0
        %2933 = vmatpush1.msra.mxu0 0.0
        %2934 = vmatprep.subr.mxu0 0.0
        %2935 = vmatpush1.msra.mxu0 0.0
        %2936 = vmatprep.subr.mxu0 0.0
        %2937 = vmatpush1.msra.mxu0 0.0
        %2938 = vmatprep.subr.mxu0 0.0
        %2939 = vmatpush1.msra.mxu0 0.0
        %2940 = vmatprep.subr.mxu0 0.0
        %2941 = vmatpush1.msra.mxu0 0.0
        %2942 = vmatprep.subr.mxu0 0.0
        %2943 = vmatpush1.msra.mxu0 0.0
        %2944 = vmatprep.subr.mxu0 0.0
        %2945 = vmatpush1.msra.mxu0 0.0
        %2946 = vmatprep.subr.mxu0 0.0
        %2947 = vmatpush1.msra.mxu0 0.0
        %2948 = vmatprep.subr.mxu0 0.0
        %2949 = vmatpush1.msra.mxu0 0.0
        %2950 = vmatprep.subr.mxu0 0.0
        %2951 = vmatpush1.msra.mxu0 0.0
        %2952 = vmatprep.subr.mxu0 0.0
        %2953 = vmatpush1.msra.mxu0 0.0
        %2954 = vmatprep.subr.mxu0 0.0
        %2955 = vmatpush1.msra.mxu0 0.0
        %2956 = vmatprep.subr.mxu0 0.0
        %2957 = vmatpush1.msra.mxu0 0.0
        %2958 = vmatprep.subr.mxu0 0.0
        %2959 = vmatpush1.msra.mxu0 0.0
        %2960 = vmatprep.subr.mxu0 0.0
        %2961 = vmatpush1.msra.mxu0 0.0
        %2962 = vmatprep.subr.mxu0 0.0
        %2963 = vmatpush1.msra.mxu0 0.0
        %2964 = vmatprep.subr.mxu0 0.0
        %2965 = vmatpush1.msra.mxu0 0.0
        %2966 = vmatprep.mubr.f32.mxu0 0.0
        %2967 = vmatmul.mubr.f32.gmra.mrb[0].mxu0 %v2900
        %v2968 = vpop.f32.mrb[0].mxu0
        %v2969 = vadd.f32 %v2897, %v2968
        %v2970 = vpop.f32.mrb[0].mxu0
        %2971 = vdwg.mxu0
        %v2972 = vadd.f32 %v2763, %v2969
        %v2973 = vld [vmem:[%s10] sm:$0x1]
        %v2974 = vld [vmem:[%s11] sm:$0x1]
        %v2975 = vsel %vm477, %v2972, 0.0
        %2976 = vadd.xlane.f32.xlu0 %v2975
        %v2977 = vpop.xlane.xlu0 %2976
        %v2978 = vmul.f32 %v2977, %v1519
        %v2979 = vsub.f32 %v2972, %v2978
        %v2980 = vmul.f32 %v2979, %v2979
        %v2981 = vsel %vm477, %v2980, 0.0
        %2982 = vadd.xlane.f32.xlu0 %v2981
        %v2983 = vpop.xlane.xlu0 %2982
        %v2984 = vmul.f32 %v2983, 0.032258064
        %v2985 = vadd.f32 %v2984, 0.001
        %v2986 = vrsqrt.pop %v2985
        %v2987 = vmul.f32 %v2979, %v2986
        %v2989 = vlaneseq
        %v2990 = vshrl.u32 %v2989, 7
        %v2991 = vsub.s32 0, %v2990
        %v2992 = vrot.slane %v2973, %v2991
        %v2994 = vmul.f32 %v2987, %v2992
        %v2996 = vlaneseq
        %v2997 = vshrl.u32 %v2996, 7
        %v2998 = vsub.s32 0, %v2997
        %v2999 = vrot.slane %v2974, %v2998
        %v3001 = vadd.f32 %v2994, %v2999
        %3002 = vst.msk [vmem:[%s465] sm:$0xff] %vm477, %v3001
        %s3003 = sand.u32 %s302, 1
        %s3004 = scalar_lea.sflag [#allocation4], %s3003
        %s3005 = sand.u32 %s302, 1
        %s3006 = smul.addr %s3005, 8
        %s3007 = scalar_lea.vmem [#allocation7], %s3006
        // Predicated region
        $region77: #{tpu_custom_call.1} parent=67 // pred_check
          %p3008 = pneg %p312
        $region78: #{tpu_custom_call.1} parent=67 // pred_check_branch
          %3010 = sbr.rel (%p3008) target = $region80
        $region79: #{tpu_custom_call.1} parent=67 // pred_region
          %s3012 = ssub.s32 128, 128
          %3013 = vsyncadd %s3004, %s3012
          %s3014 = smul.addr %s32, 128
          %s3015 = scalar_lea.hbm %s12, %s3014
          %s3017 = sshll.u32 %s3007, 4
          %s3018 = int_to_ptr.vmem [resolvable:$true] %s3017
          %3020 = dma.vmem_to_hbm [thread:$0]  %s3018, 128, %s3015, %s3004
        $region80: #{tpu_custom_call.1} parent=67 // pred_fallthru
          _
      $region68: #{tpu_custom_call.1} parent=5 // pred_fallthru
        _
      %p3021 = scmp.le.s32.totalorder 2, %s27
      // Predicated region
      $region81: #{tpu_custom_call.1} parent=5 // pred_check
        %p3022 = pneg %p3021
      $region82: #{tpu_custom_call.1} parent=5 // pred_check_branch
        %3024 = sbr.rel (%p3022) target = $region84
      $region83: #{tpu_custom_call.1} parent=5 // pred_region
        %s3025 = ssub.s32 %s27, 2
        // Predicated region
        $region85: #{tpu_custom_call.1} parent=83 // pred_check
          %p3026 = pneg %p318
        $region86: #{tpu_custom_call.1} parent=83 // pred_check_branch
          %3028 = sbr.rel (%p3026) target = $region88
        $region87: #{tpu_custom_call.1} parent=83 // pred_region
          %s3029 = sand.u32 %s303, 1
          %s3030 = scalar_lea.sflag [#allocation4], %s3029
          %s3031 = sand.u32 %s303, 1
          %s3032 = smul.addr %s3031, 8
          %s3033 = scalar_lea.vmem [#allocation7], %s3032
          %3034 = dma.done %s3030, 128
        $region88: #{tpu_custom_call.1} parent=83 // pred_fallthru
          _
      $region84: #{tpu_custom_call.1} parent=5 // pred_fallthru
        _
    $region6: #{tpu_custom_call.1} parent=1 // loop_footer
      %s31 = sadd.s32 1, %s27
    $region7: #{tpu_custom_call.1} parent=1 // loop_footer_branch
      %26 = sbr.rel target = $region3
    $region8: #{tpu_custom_call.1} parent=1 // loop_exit
      _
    %3035 = vsyncpa [#allocation3], 1
    %s3036 = scalar_lea.sflag [#allocation3], 1
    %3037 = vsyncpa %s3036, 1
    %3038 = vsyncpa [#allocation6], 1
    %s3039 = scalar_lea.sflag [#allocation6], 1
    %3040 = vsyncpa %s3039, 1
    %3041 = vsyncpa [#allocation4], 1
    %s3042 = scalar_lea.sflag [#allocation4], 1
    %3043 = vsyncpa %s3042, 1

</llo_original>
